<compile_context>
chip_gen: v6e
topology: v6e:2x2x1
jax: 0.10.0
libtpu: 0.0.40
codegen_flags: <defaults>
</compile_context>

<pallas_src>
import jax
import jax.numpy as jnp
from jax import lax
from jax.experimental import pallas as pl
from jax.experimental.pallas import tpu as pltpu

IN_SIZE = 300        # text feature dim
HIDDEN = 64          # LSTM hidden size per direction
OUT_SIZE = 64        # linear_1 output dim
NUM_CLASSES = 2      # args.num_classes

F_PAD = 384          # IN_SIZE padded to a lane multiple (3*128)
GW = 128             # lane-aligned (padded) gate width per direction
NG = 4               # gates: i, f, g, o (PyTorch order)
D4 = NG * GW         # 512  gate columns per direction
GC = 2 * D4          # 1024 gate columns, both directions
HP = 2 * GW          # 256  fused (fwd | bwd) padded hidden width
OUT_PAD = 128        # lane-dense output slab width


def _lstm_cls_kernel(x_ref,      # (S*B, F_PAD)  bf16, seq-major rows (row = s*B + b)
                     w_in_ref,   # (F_PAD, GC)   bf16  [fwd i|f|g|o | bwd i|f|g|o], 64 real cols / 128 slab
                     b_in_ref,   # (1, GC)       f32   (b_ih + b_hh, same layout)
                     w_hh_ref,   # (HP, GC)      bf16  block-diagonal recurrent weights
                     w1_ref,     # (2H, OUT)     f32
                     b1_ref,     # (1, OUT)      f32
                     wc_ref,     # (OUT, C)      f32
                     bc_ref,     # (1, C)        f32
                     out_ref):   # (B, OUT_PAD)  f32   [feat(64) | pred(C) | zero pad]
    B = out_ref.shape[0]
    S = x_ref.shape[0] // B
    H = HIDDEN

    # --- hoisted input projection: ONE MXU matmul for all timesteps & both dirs ---
    proj = jnp.dot(x_ref[...], w_in_ref[...],
                   preferred_element_type=jnp.float32) + b_in_ref[...]      # (S*B, GC) f32

    w_hh = w_hh_ref[...]                                                    # (HP, GC) bf16

    h_f = jnp.zeros((B, GW), jnp.float32)
    c_f = jnp.zeros((B, GW), jnp.float32)
    h_b = jnp.zeros((B, GW), jnp.float32)
    c_b = jnp.zeros((B, GW), jnp.float32)

    def cell(gates, c_prev):
        # lane-aligned 128-wide gate slabs; padded lanes stay exactly 0 in h/c
        i = jax.nn.sigmoid(gates[:, 0 * GW:1 * GW])
        f = jax.nn.sigmoid(gates[:, 1 * GW:2 * GW])
        g = jnp.tanh(gates[:, 2 * GW:3 * GW])
        o = jax.nn.sigmoid(gates[:, 3 * GW:4 * GW])
        c_new = f * c_prev + i * g
        h_new = o * jnp.tanh(c_new)
        return h_new, c_new

    # fully unrolled recurrence (S is static and small); only the h @ W_hh matmul
    # and the gate elementwise remain on the serial chain.
    for t in range(S):
        h_cat = jnp.concatenate([h_f, h_b], axis=-1).astype(jnp.bfloat16)    # (B, HP)
        rec = jnp.dot(h_cat, w_hh, preferred_element_type=jnp.float32)       # (B, GC)
        gates_f = rec[:, :D4] + proj[t * B:(t + 1) * B, :D4]
        gates_b = rec[:, D4:] + proj[(S - 1 - t) * B:(S - t) * B, D4:]
        h_f, c_f = cell(gates_f, c_f)
        h_b, c_b = cell(gates_b, c_b)

    # h_n[0] ++ h_n[1]; Dropout(0.3) == identity at inference.
    h_fin = jnp.concatenate([h_f[:, :H], h_b[:, :H]], axis=-1)               # (B, 2H)
    feat = jnp.dot(h_fin, w1_ref[...],
                   preferred_element_type=jnp.float32) + b1_ref[...]         # (B, OUT)
    pred = jnp.dot(feat, wc_ref[...],
                   preferred_element_type=jnp.float32) + bc_ref[...]         # (B, C)

    # lane-dense single output slab
    pad = jnp.zeros((B, OUT_PAD - OUT_SIZE - NUM_CLASSES), jnp.float32)
    out_ref[...] = jnp.concatenate([feat, pred, pad], axis=-1)


# ----------------------------- parameters -----------------------------------

def init_params(key):
    """Deterministic synthetic parameters in 'logical' (PyTorch-transposed) layout."""
    ks = jax.random.split(key, 12)

    def u(k, shape, bound):
        return jax.random.uniform(k, shape, jnp.float32, -bound, bound)

    kl = 1.0 / jnp.sqrt(jnp.float32(HIDDEN))
    wih_f = u(ks[0], (IN_SIZE, 4 * HIDDEN), kl)        # (in, 4H) gate order i,f,g,o
    whh_f = u(ks[1], (HIDDEN, 4 * HIDDEN), kl)
    b_f = u(ks[2], (4 * HIDDEN,), kl) + u(ks[3], (4 * HIDDEN,), kl)   # b_ih + b_hh
    wih_b = u(ks[4], (IN_SIZE, 4 * HIDDEN), kl)
    whh_b = u(ks[5], (HIDDEN, 4 * HIDDEN), kl)
    b_b = u(ks[6], (4 * HIDDEN,), kl) + u(ks[7], (4 * HIDDEN,), kl)

    k1 = 1.0 / jnp.sqrt(jnp.float32(2 * HIDDEN))
    w1 = u(ks[8], (2 * HIDDEN, OUT_SIZE), k1)
    b1 = u(ks[9], (OUT_SIZE,), k1)

    kc = 1.0 / jnp.sqrt(jnp.float32(OUT_SIZE))
    wc = u(ks[10], (OUT_SIZE, NUM_CLASSES), kc)
    bc = u(ks[11], (NUM_CLASSES,), kc)

    return (wih_f, whh_f, b_f, wih_b, whh_b, b_b, w1, b1, wc, bc)


def _place_gates(dst, w, row_off, col_off):
    """Scatter (rows, 4H) gate-major weights into lane-aligned 128-wide gate slabs."""
    r = w.shape[0]
    for g in range(NG):
        dst = dst.at[row_off:row_off + r,
                     col_off + g * GW: col_off + g * GW + HIDDEN].set(
            w[:, g * HIDDEN:(g + 1) * HIDDEN])
    return dst


def prepare_kernel_params(params):
    """Build padded/fused bf16 weight layout consumed by the kernel."""
    (wih_f, whh_f, b_f, wih_b, whh_b, b_b, w1, b1, wc, bc) = params

    w_in = jnp.zeros((F_PAD, GC), jnp.float32)
    w_in = _place_gates(w_in, wih_f, 0, 0)             # fwd gates -> cols [0, 512)
    w_in = _place_gates(w_in, wih_b, 0, D4)            # bwd gates -> cols [512, 1024)

    b_in = jnp.zeros((1, GC), jnp.float32)
    b_in = _place_gates(b_in, b_f.reshape(1, 4 * HIDDEN), 0, 0)
    b_in = _place_gates(b_in, b_b.reshape(1, 4 * HIDDEN), 0, D4)

    w_hh = jnp.zeros((HP, GC), jnp.float32)            # block-diagonal
    w_hh = _place_gates(w_hh, whh_f, 0, 0)             # rows [0, 64)    -> fwd gates
    w_hh = _place_gates(w_hh, whh_b, GW, D4)           # rows [128, 192) -> bwd gates

    return (w_in.astype(jnp.bfloat16), b_in, w_hh.astype(jnp.bfloat16),
            w1, b1.reshape(1, OUT_SIZE), wc, bc.reshape(1, NUM_CLASSES))


# ----------------------------- forward wrapper -------------------------------

def mosei_t_cls_forward(x, kernel_params):
    """x: tuple of modality tensors; x[2] is text (B, S, 300)."""
    feat_in = x[2].astype(jnp.float32)                         # (B, S, F)
    B, S, F = feat_in.shape

    # 'b s f -> s b f', flatten seq-major, lane-pad F to 384, bf16 matmul operands
    x_sbf = jnp.transpose(feat_in, (1, 0, 2)).reshape(S * B, F)
    x_pad = jnp.pad(x_sbf, ((0, 0), (0, F_PAD - F))).astype(jnp.bfloat16)

    flops = (2 * S * B * F_PAD * GC                            # hoisted input projection
             + 2 * S * B * HP * GC                             # fused recurrence
             + 2 * B * 2 * HIDDEN * OUT_SIZE
             + 2 * B * OUT_SIZE * NUM_CLASSES)
    transcendentals = S * B * 2 * 5 * GW                       # 3 sigmoid + 2 tanh per dir/step
    bytes_accessed = (x_pad.size * 2 + F_PAD * GC * 2 + GC * 4 + HP * GC * 2
                      + 2 * HIDDEN * OUT_SIZE * 4 + OUT_SIZE * 4
                      + OUT_SIZE * NUM_CLASSES * 4 + NUM_CLASSES * 4
                      + B * OUT_PAD * 4)

    vmem = pl.BlockSpec(memory_space=pltpu.MemorySpace.VMEM)
    out = pl.pallas_call(
        _lstm_cls_kernel,
        out_shape=jax.ShapeDtypeStruct((B, OUT_PAD), jnp.float32),
        in_specs=[vmem] * 8,
        out_specs=vmem,
        cost_estimate=pl.CostEstimate(flops=flops,
                                      transcendentals=transcendentals,
                                      bytes_accessed=bytes_accessed),
    )(x_pad, *kernel_params)

    feat = out[:, :OUT_SIZE]
    pred = out[:, OUT_SIZE:OUT_SIZE + NUM_CLASSES]
    return {'preds': {'combined': pred}, 'features': {'combined': feat}}


# ----------------------------- pure-JAX reference ----------------------------

def reference_forward(x, params):
    (wih_f, whh_f, b_f, wih_b, whh_b, b_b, w1, b1, wc, bc) = params
    feat_in = x[2].astype(jnp.float32)
    B = feat_in.shape[0]
    xs = jnp.transpose(feat_in, (1, 0, 2))                     # (S, B, F)
    H = HIDDEN

    def run(xseq, wih, whh, b):
        def step(carry, xt):
            h, c = carry
            g = xt @ wih + h @ whh + b
            i = jax.nn.sigmoid(g[:, :H])
            f = jax.nn.sigmoid(g[:, H:2 * H])
            gt = jnp.tanh(g[:, 2 * H:3 * H])
            o = jax.nn.sigmoid(g[:, 3 * H:])
            c = f * c + i * gt
            h = o * jnp.tanh(c)
            return (h, c), None
        init = (jnp.zeros((B, H), jnp.float32), jnp.zeros((B, H), jnp.float32))
        (h, _), _ = lax.scan(step, init, xseq)
        return h

    h = jnp.concatenate([run(xs, wih_f, whh_f, b_f),
                         run(xs[::-1], wih_b, whh_b, b_b)], axis=-1)
    feat = h @ w1 + b1
    pred = feat @ wc + bc
    return feat, pred


if __name__ == "__main__":
    key = jax.random.PRNGKey(0)
    k_p, k_a, k_v, k_t = jax.random.split(key, 4)

    B, S = 2, 8
    params = init_params(k_p)
    kparams = prepare_kernel_params(params)

    # MOSEI-style input tuple: (audio, video, text); only x[2] is used.
    x = (
        jax.random.normal(k_a, (B, S, 74), jnp.float32),        # audio (unused)
        jax.random.normal(k_v, (B, S, 35), jnp.float32),        # video (unused)
        jax.random.normal(k_t, (B, S, IN_SIZE), jnp.float32),   # text
    )

    out = mosei_t_cls_forward(x, kparams)
    jax.block_until_ready(out)

    assert out['preds']['combined'].shape == (B, NUM_CLASSES)
    assert out['features']['combined'].shape == (B, OUT_SIZE)

    # correctness check vs f32 pure-JAX reference (bf16 matmul operands -> loose tol)
    feat_ref, pred_ref = reference_forward(x, params)
    assert jnp.allclose(out['features']['combined'], feat_ref, atol=3e-2, rtol=3e-2), \
        float(jnp.max(jnp.abs(out['features']['combined'] - feat_ref)))
    assert jnp.allclose(out['preds']['combined'], pred_ref, atol=3e-2, rtol=3e-2), \
        float(jnp.max(jnp.abs(out['preds']['combined'] - pred_ref)))

    # TODO(synk): use_seq=True branch (pack/pad_packed_sequence + unsort) is never
    # exercised by Mosei_T_CLS (lengths=None, use_seq=False) and is not implemented.
    # TODO(synk): on v7x the fwd/bwd chains could be split across the 2 TensorCores
    # via pl.core_map once single-sample latency matters; skipped at B=2, S=8.
    print("KERNEL_OK")
</pallas_src>

<mosaic_0001>
module attributes {stable_mosaic.version = 11 : i64} {
  func.func @_lstm_cls_kernel(%arg0: memref<16x384xbf16, #tpu.memory_space<vmem>>, %arg1: memref<384x1024xbf16, #tpu.memory_space<vmem>>, %arg2: memref<1x1024xf32, #tpu.memory_space<vmem>>, %arg3: memref<256x1024xbf16, #tpu.memory_space<vmem>>, %arg4: memref<128x64xf32, #tpu.memory_space<vmem>>, %arg5: memref<1x64xf32, #tpu.memory_space<vmem>>, %arg6: memref<64x2xf32, #tpu.memory_space<vmem>>, %arg7: memref<1x2xf32, #tpu.memory_space<vmem>>, %arg8: memref<2x128xf32, #tpu.memory_space<vmem>>) attributes {dimension_semantics = [], scalar_prefetch = 0 : i64, scratch_operands = 0 : i64, tpu.core_type = #tpu.core_type<tc>} {
    %c0 = arith.constant 0 : index
    %c0_0 = arith.constant 0 : index
    %0 = vector.load %arg0[%c0, %c0_0] : memref<16x384xbf16, #tpu.memory_space<vmem>>, vector<16x384xbf16>
    %c0_1 = arith.constant 0 : index
    %c0_2 = arith.constant 0 : index
    %1 = vector.load %arg1[%c0_1, %c0_2] : memref<384x1024xbf16, #tpu.memory_space<vmem>>, vector<384x1024xbf16>
    %cst = arith.constant dense<0.000000e+00> : vector<16x1024xf32>
    %2 = tpu.matmul %0, %1, %cst {dimension_numbers = #tpu.dot_dimension_numbers<[1], [0], [0], [1], [0, 0, 1, 1], [], []>} : vector<16x384xbf16>, vector<384x1024xbf16>, vector<16x1024xf32> -> vector<16x1024xf32>
    %c0_3 = arith.constant 0 : index
    %c0_4 = arith.constant 0 : index
    %3 = vector.load %arg2[%c0_3, %c0_4] : memref<1x1024xf32, #tpu.memory_space<vmem>>, vector<1x1024xf32>
    %4 = vector.broadcast %3 : vector<1x1024xf32> to vector<16x1024xf32>
    %5 = arith.addf %2, %4 : vector<16x1024xf32>
    %c0_5 = arith.constant 0 : index
    %c0_6 = arith.constant 0 : index
    %6 = vector.load %arg3[%c0_5, %c0_6] : memref<256x1024xbf16, #tpu.memory_space<vmem>>, vector<256x1024xbf16>
    %cst_7 = arith.constant 0.000000e+00 : f32
    %7 = vector.broadcast %cst_7 : f32 to vector<2x128xf32>
    %cst_8 = arith.constant 0.000000e+00 : f32
    %8 = vector.broadcast %cst_8 : f32 to vector<2x128xf32>
    %cst_9 = arith.constant 0.000000e+00 : f32
    %9 = vector.broadcast %cst_9 : f32 to vector<2x128xf32>
    %cst_10 = arith.constant 0.000000e+00 : f32
    %10 = vector.broadcast %cst_10 : f32 to vector<2x128xf32>
    %11 = tpu.concatenate %7, %9 in 1 : vector<2x128xf32>, vector<2x128xf32> -> vector<2x256xf32>
    %12 = arith.truncf %11 : vector<2x256xf32> to vector<2x256xbf16>
    %cst_11 = arith.constant dense<0.000000e+00> : vector<2x1024xf32>
    %13 = tpu.matmul %12, %6, %cst_11 {dimension_numbers = #tpu.dot_dimension_numbers<[1], [0], [0], [1], [0, 0, 1, 1], [], []>} : vector<2x256xbf16>, vector<256x1024xbf16>, vector<2x1024xf32> -> vector<2x1024xf32>
    %14 = vector.extract_strided_slice %13 {offsets = [0, 0], sizes = [2, 512], strides = [1, 1]} : vector<2x1024xf32> to vector<2x512xf32>
    %15 = vector.extract_strided_slice %5 {offsets = [0, 0], sizes = [2, 512], strides = [1, 1]} : vector<16x1024xf32> to vector<2x512xf32>
    %16 = arith.addf %14, %15 : vector<2x512xf32>
    %17 = vector.extract_strided_slice %13 {offsets = [0, 512], sizes = [2, 512], strides = [1, 1]} : vector<2x1024xf32> to vector<2x512xf32>
    %18 = vector.extract_strided_slice %5 {offsets = [14, 512], sizes = [2, 512], strides = [1, 1]} : vector<16x1024xf32> to vector<2x512xf32>
    %19 = arith.addf %17, %18 : vector<2x512xf32>
    %20 = vector.extract_strided_slice %16 {offsets = [0, 0], sizes = [2, 128], strides = [1, 1]} : vector<2x512xf32> to vector<2x128xf32>
    %21 = arith.negf %20 : vector<2x128xf32>
    %22 = math.exp %21 : vector<2x128xf32>
    %cst_12 = arith.constant 1.000000e+00 : f32
    %23 = vector.broadcast %cst_12 : f32 to vector<2x128xf32>
    %24 = arith.addf %23, %22 : vector<2x128xf32>
    %25 = arith.divf %23, %24 : vector<2x128xf32>
    %26 = vector.extract_strided_slice %16 {offsets = [0, 128], sizes = [2, 128], strides = [1, 1]} : vector<2x512xf32> to vector<2x128xf32>
    %27 = arith.negf %26 : vector<2x128xf32>
    %28 = math.exp %27 : vector<2x128xf32>
    %cst_13 = arith.constant 1.000000e+00 : f32
    %29 = vector.broadcast %cst_13 : f32 to vector<2x128xf32>
    %30 = arith.addf %29, %28 : vector<2x128xf32>
    %31 = arith.divf %29, %30 : vector<2x128xf32>
    %32 = vector.extract_strided_slice %16 {offsets = [0, 256], sizes = [2, 128], strides = [1, 1]} : vector<2x512xf32> to vector<2x128xf32>
    %33 = math.tanh %32 : vector<2x128xf32>
    %34 = vector.extract_strided_slice %16 {offsets = [0, 384], sizes = [2, 128], strides = [1, 1]} : vector<2x512xf32> to vector<2x128xf32>
    %35 = arith.negf %34 : vector<2x128xf32>
    %36 = math.exp %35 : vector<2x128xf32>
    %cst_14 = arith.constant 1.000000e+00 : f32
    %37 = vector.broadcast %cst_14 : f32 to vector<2x128xf32>
    %38 = arith.addf %37, %36 : vector<2x128xf32>
    %39 = arith.divf %37, %38 : vector<2x128xf32>
    %40 = arith.mulf %31, %8 : vector<2x128xf32>
    %41 = arith.mulf %25, %33 : vector<2x128xf32>
    %42 = arith.addf %40, %41 : vector<2x128xf32>
    %43 = math.tanh %42 : vector<2x128xf32>
    %44 = arith.mulf %39, %43 : vector<2x128xf32>
    %45 = vector.extract_strided_slice %19 {offsets = [0, 0], sizes = [2, 128], strides = [1, 1]} : vector<2x512xf32> to vector<2x128xf32>
    %46 = arith.negf %45 : vector<2x128xf32>
    %47 = math.exp %46 : vector<2x128xf32>
    %cst_15 = arith.constant 1.000000e+00 : f32
    %48 = vector.broadcast %cst_15 : f32 to vector<2x128xf32>
    %49 = arith.addf %48, %47 : vector<2x128xf32>
    %50 = arith.divf %48, %49 : vector<2x128xf32>
    %51 = vector.extract_strided_slice %19 {offsets = [0, 128], sizes = [2, 128], strides = [1, 1]} : vector<2x512xf32> to vector<2x128xf32>
    %52 = arith.negf %51 : vector<2x128xf32>
    %53 = math.exp %52 : vector<2x128xf32>
    %cst_16 = arith.constant 1.000000e+00 : f32
    %54 = vector.broadcast %cst_16 : f32 to vector<2x128xf32>
    %55 = arith.addf %54, %53 : vector<2x128xf32>
    %56 = arith.divf %54, %55 : vector<2x128xf32>
    %57 = vector.extract_strided_slice %19 {offsets = [0, 256], sizes = [2, 128], strides = [1, 1]} : vector<2x512xf32> to vector<2x128xf32>
    %58 = math.tanh %57 : vector<2x128xf32>
    %59 = vector.extract_strided_slice %19 {offsets = [0, 384], sizes = [2, 128], strides = [1, 1]} : vector<2x512xf32> to vector<2x128xf32>
    %60 = arith.negf %59 : vector<2x128xf32>
    %61 = math.exp %60 : vector<2x128xf32>
    %cst_17 = arith.constant 1.000000e+00 : f32
    %62 = vector.broadcast %cst_17 : f32 to vector<2x128xf32>
    %63 = arith.addf %62, %61 : vector<2x128xf32>
    %64 = arith.divf %62, %63 : vector<2x128xf32>
    %65 = arith.mulf %56, %10 : vector<2x128xf32>
    %66 = arith.mulf %50, %58 : vector<2x128xf32>
    %67 = arith.addf %65, %66 : vector<2x128xf32>
    %68 = math.tanh %67 : vector<2x128xf32>
    %69 = arith.mulf %64, %68 : vector<2x128xf32>
    %70 = tpu.concatenate %44, %69 in 1 : vector<2x128xf32>, vector<2x128xf32> -> vector<2x256xf32>
    %71 = arith.truncf %70 : vector<2x256xf32> to vector<2x256xbf16>
    %cst_18 = arith.constant dense<0.000000e+00> : vector<2x1024xf32>
    %72 = tpu.matmul %71, %6, %cst_18 {dimension_numbers = #tpu.dot_dimension_numbers<[1], [0], [0], [1], [0, 0, 1, 1], [], []>} : vector<2x256xbf16>, vector<256x1024xbf16>, vector<2x1024xf32> -> vector<2x1024xf32>
    %73 = vector.extract_strided_slice %72 {offsets = [0, 0], sizes = [2, 512], strides = [1, 1]} : vector<2x1024xf32> to vector<2x512xf32>
    %74 = vector.extract_strided_slice %5 {offsets = [2, 0], sizes = [2, 512], strides = [1, 1]} : vector<16x1024xf32> to vector<2x512xf32>
    %75 = arith.addf %73, %74 : vector<2x512xf32>
    %76 = vector.extract_strided_slice %72 {offsets = [0, 512], sizes = [2, 512], strides = [1, 1]} : vector<2x1024xf32> to vector<2x512xf32>
    %77 = vector.extract_strided_slice %5 {offsets = [12, 512], sizes = [2, 512], strides = [1, 1]} : vector<16x1024xf32> to vector<2x512xf32>
    %78 = arith.addf %76, %77 : vector<2x512xf32>
    %79 = vector.extract_strided_slice %75 {offsets = [0, 0], sizes = [2, 128], strides = [1, 1]} : vector<2x512xf32> to vector<2x128xf32>
    %80 = arith.negf %79 : vector<2x128xf32>
    %81 = math.exp %80 : vector<2x128xf32>
    %cst_19 = arith.constant 1.000000e+00 : f32
    %82 = vector.broadcast %cst_19 : f32 to vector<2x128xf32>
    %83 = arith.addf %82, %81 : vector<2x128xf32>
    %84 = arith.divf %82, %83 : vector<2x128xf32>
    %85 = vector.extract_strided_slice %75 {offsets = [0, 128], sizes = [2, 128], strides = [1, 1]} : vector<2x512xf32> to vector<2x128xf32>
    %86 = arith.negf %85 : vector<2x128xf32>
    %87 = math.exp %86 : vector<2x128xf32>
    %cst_20 = arith.constant 1.000000e+00 : f32
    %88 = vector.broadcast %cst_20 : f32 to vector<2x128xf32>
    %89 = arith.addf %88, %87 : vector<2x128xf32>
    %90 = arith.divf %88, %89 : vector<2x128xf32>
    %91 = vector.extract_strided_slice %75 {offsets = [0, 256], sizes = [2, 128], strides = [1, 1]} : vector<2x512xf32> to vector<2x128xf32>
    %92 = math.tanh %91 : vector<2x128xf32>
    %93 = vector.extract_strided_slice %75 {offsets = [0, 384], sizes = [2, 128], strides = [1, 1]} : vector<2x512xf32> to vector<2x128xf32>
    %94 = arith.negf %93 : vector<2x128xf32>
    %95 = math.exp %94 : vector<2x128xf32>
    %cst_21 = arith.constant 1.000000e+00 : f32
    %96 = vector.broadcast %cst_21 : f32 to vector<2x128xf32>
    %97 = arith.addf %96, %95 : vector<2x128xf32>
    %98 = arith.divf %96, %97 : vector<2x128xf32>
    %99 = arith.mulf %90, %42 : vector<2x128xf32>
    %100 = arith.mulf %84, %92 : vector<2x128xf32>
    %101 = arith.addf %99, %100 : vector<2x128xf32>
    %102 = math.tanh %101 : vector<2x128xf32>
    %103 = arith.mulf %98, %102 : vector<2x128xf32>
    %104 = vector.extract_strided_slice %78 {offsets = [0, 0], sizes = [2, 128], strides = [1, 1]} : vector<2x512xf32> to vector<2x128xf32>
    %105 = arith.negf %104 : vector<2x128xf32>
    %106 = math.exp %105 : vector<2x128xf32>
    %cst_22 = arith.constant 1.000000e+00 : f32
    %107 = vector.broadcast %cst_22 : f32 to vector<2x128xf32>
    %108 = arith.addf %107, %106 : vector<2x128xf32>
    %109 = arith.divf %107, %108 : vector<2x128xf32>
    %110 = vector.extract_strided_slice %78 {offsets = [0, 128], sizes = [2, 128], strides = [1, 1]} : vector<2x512xf32> to vector<2x128xf32>
    %111 = arith.negf %110 : vector<2x128xf32>
    %112 = math.exp %111 : vector<2x128xf32>
    %cst_23 = arith.constant 1.000000e+00 : f32
    %113 = vector.broadcast %cst_23 : f32 to vector<2x128xf32>
    %114 = arith.addf %113, %112 : vector<2x128xf32>
    %115 = arith.divf %113, %114 : vector<2x128xf32>
    %116 = vector.extract_strided_slice %78 {offsets = [0, 256], sizes = [2, 128], strides = [1, 1]} : vector<2x512xf32> to vector<2x128xf32>
    %117 = math.tanh %116 : vector<2x128xf32>
    %118 = vector.extract_strided_slice %78 {offsets = [0, 384], sizes = [2, 128], strides = [1, 1]} : vector<2x512xf32> to vector<2x128xf32>
    %119 = arith.negf %118 : vector<2x128xf32>
    %120 = math.exp %119 : vector<2x128xf32>
    %cst_24 = arith.constant 1.000000e+00 : f32
    %121 = vector.broadcast %cst_24 : f32 to vector<2x128xf32>
    %122 = arith.addf %121, %120 : vector<2x128xf32>
    %123 = arith.divf %121, %122 : vector<2x128xf32>
    %124 = arith.mulf %115, %67 : vector<2x128xf32>
    %125 = arith.mulf %109, %117 : vector<2x128xf32>
    %126 = arith.addf %124, %125 : vector<2x128xf32>
    %127 = math.tanh %126 : vector<2x128xf32>
    %128 = arith.mulf %123, %127 : vector<2x128xf32>
    %129 = tpu.concatenate %103, %128 in 1 : vector<2x128xf32>, vector<2x128xf32> -> vector<2x256xf32>
    %130 = arith.truncf %129 : vector<2x256xf32> to vector<2x256xbf16>
    %cst_25 = arith.constant dense<0.000000e+00> : vector<2x1024xf32>
    %131 = tpu.matmul %130, %6, %cst_25 {dimension_numbers = #tpu.dot_dimension_numbers<[1], [0], [0], [1], [0, 0, 1, 1], [], []>} : vector<2x256xbf16>, vector<256x1024xbf16>, vector<2x1024xf32> -> vector<2x1024xf32>
    %132 = vector.extract_strided_slice %131 {offsets = [0, 0], sizes = [2, 512], strides = [1, 1]} : vector<2x1024xf32> to vector<2x512xf32>
    %133 = vector.extract_strided_slice %5 {offsets = [4, 0], sizes = [2, 512], strides = [1, 1]} : vector<16x1024xf32> to vector<2x512xf32>
    %134 = arith.addf %132, %133 : vector<2x512xf32>
    %135 = vector.extract_strided_slice %131 {offsets = [0, 512], sizes = [2, 512], strides = [1, 1]} : vector<2x1024xf32> to vector<2x512xf32>
    %136 = vector.extract_strided_slice %5 {offsets = [10, 512], sizes = [2, 512], strides = [1, 1]} : vector<16x1024xf32> to vector<2x512xf32>
    %137 = arith.addf %135, %136 : vector<2x512xf32>
    %138 = vector.extract_strided_slice %134 {offsets = [0, 0], sizes = [2, 128], strides = [1, 1]} : vector<2x512xf32> to vector<2x128xf32>
    %139 = arith.negf %138 : vector<2x128xf32>
    %140 = math.exp %139 : vector<2x128xf32>
    %cst_26 = arith.constant 1.000000e+00 : f32
    %141 = vector.broadcast %cst_26 : f32 to vector<2x128xf32>
    %142 = arith.addf %141, %140 : vector<2x128xf32>
    %143 = arith.divf %141, %142 : vector<2x128xf32>
    %144 = vector.extract_strided_slice %134 {offsets = [0, 128], sizes = [2, 128], strides = [1, 1]} : vector<2x512xf32> to vector<2x128xf32>
    %145 = arith.negf %144 : vector<2x128xf32>
    %146 = math.exp %145 : vector<2x128xf32>
    %cst_27 = arith.constant 1.000000e+00 : f32
    %147 = vector.broadcast %cst_27 : f32 to vector<2x128xf32>
    %148 = arith.addf %147, %146 : vector<2x128xf32>
    %149 = arith.divf %147, %148 : vector<2x128xf32>
    %150 = vector.extract_strided_slice %134 {offsets = [0, 256], sizes = [2, 128], strides = [1, 1]} : vector<2x512xf32> to vector<2x128xf32>
    %151 = math.tanh %150 : vector<2x128xf32>
    %152 = vector.extract_strided_slice %134 {offsets = [0, 384], sizes = [2, 128], strides = [1, 1]} : vector<2x512xf32> to vector<2x128xf32>
    %153 = arith.negf %152 : vector<2x128xf32>
    %154 = math.exp %153 : vector<2x128xf32>
    %cst_28 = arith.constant 1.000000e+00 : f32
    %155 = vector.broadcast %cst_28 : f32 to vector<2x128xf32>
    %156 = arith.addf %155, %154 : vector<2x128xf32>
    %157 = arith.divf %155, %156 : vector<2x128xf32>
    %158 = arith.mulf %149, %101 : vector<2x128xf32>
    %159 = arith.mulf %143, %151 : vector<2x128xf32>
    %160 = arith.addf %158, %159 : vector<2x128xf32>
    %161 = math.tanh %160 : vector<2x128xf32>
    %162 = arith.mulf %157, %161 : vector<2x128xf32>
    %163 = vector.extract_strided_slice %137 {offsets = [0, 0], sizes = [2, 128], strides = [1, 1]} : vector<2x512xf32> to vector<2x128xf32>
    %164 = arith.negf %163 : vector<2x128xf32>
    %165 = math.exp %164 : vector<2x128xf32>
    %cst_29 = arith.constant 1.000000e+00 : f32
    %166 = vector.broadcast %cst_29 : f32 to vector<2x128xf32>
    %167 = arith.addf %166, %165 : vector<2x128xf32>
    %168 = arith.divf %166, %167 : vector<2x128xf32>
    %169 = vector.extract_strided_slice %137 {offsets = [0, 128], sizes = [2, 128], strides = [1, 1]} : vector<2x512xf32> to vector<2x128xf32>
    %170 = arith.negf %169 : vector<2x128xf32>
    %171 = math.exp %170 : vector<2x128xf32>
    %cst_30 = arith.constant 1.000000e+00 : f32
    %172 = vector.broadcast %cst_30 : f32 to vector<2x128xf32>
    %173 = arith.addf %172, %171 : vector<2x128xf32>
    %174 = arith.divf %172, %173 : vector<2x128xf32>
    %175 = vector.extract_strided_slice %137 {offsets = [0, 256], sizes = [2, 128], strides = [1, 1]} : vector<2x512xf32> to vector<2x128xf32>
    %176 = math.tanh %175 : vector<2x128xf32>
    %177 = vector.extract_strided_slice %137 {offsets = [0, 384], sizes = [2, 128], strides = [1, 1]} : vector<2x512xf32> to vector<2x128xf32>
    %178 = arith.negf %177 : vector<2x128xf32>
    %179 = math.exp %178 : vector<2x128xf32>
    %cst_31 = arith.constant 1.000000e+00 : f32
    %180 = vector.broadcast %cst_31 : f32 to vector<2x128xf32>
    %181 = arith.addf %180, %179 : vector<2x128xf32>
    %182 = arith.divf %180, %181 : vector<2x128xf32>
    %183 = arith.mulf %174, %126 : vector<2x128xf32>
    %184 = arith.mulf %168, %176 : vector<2x128xf32>
    %185 = arith.addf %183, %184 : vector<2x128xf32>
    %186 = math.tanh %185 : vector<2x128xf32>
    %187 = arith.mulf %182, %186 : vector<2x128xf32>
    %188 = tpu.concatenate %162, %187 in 1 : vector<2x128xf32>, vector<2x128xf32> -> vector<2x256xf32>
    %189 = arith.truncf %188 : vector<2x256xf32> to vector<2x256xbf16>
    %cst_32 = arith.constant dense<0.000000e+00> : vector<2x1024xf32>
    %190 = tpu.matmul %189, %6, %cst_32 {dimension_numbers = #tpu.dot_dimension_numbers<[1], [0], [0], [1], [0, 0, 1, 1], [], []>} : vector<2x256xbf16>, vector<256x1024xbf16>, vector<2x1024xf32> -> vector<2x1024xf32>
    %191 = vector.extract_strided_slice %190 {offsets = [0, 0], sizes = [2, 512], strides = [1, 1]} : vector<2x1024xf32> to vector<2x512xf32>
    %192 = vector.extract_strided_slice %5 {offsets = [6, 0], sizes = [2, 512], strides = [1, 1]} : vector<16x1024xf32> to vector<2x512xf32>
    %193 = arith.addf %191, %192 : vector<2x512xf32>
    %194 = vector.extract_strided_slice %190 {offsets = [0, 512], sizes = [2, 512], strides = [1, 1]} : vector<2x1024xf32> to vector<2x512xf32>
    %195 = vector.extract_strided_slice %5 {offsets = [8, 512], sizes = [2, 512], strides = [1, 1]} : vector<16x1024xf32> to vector<2x512xf32>
    %196 = arith.addf %194, %195 : vector<2x512xf32>
    %197 = vector.extract_strided_slice %193 {offsets = [0, 0], sizes = [2, 128], strides = [1, 1]} : vector<2x512xf32> to vector<2x128xf32>
    %198 = arith.negf %197 : vector<2x128xf32>
    %199 = math.exp %198 : vector<2x128xf32>
    %cst_33 = arith.constant 1.000000e+00 : f32
    %200 = vector.broadcast %cst_33 : f32 to vector<2x128xf32>
    %201 = arith.addf %200, %199 : vector<2x128xf32>
    %202 = arith.divf %200, %201 : vector<2x128xf32>
    %203 = vector.extract_strided_slice %193 {offsets = [0, 128], sizes = [2, 128], strides = [1, 1]} : vector<2x512xf32> to vector<2x128xf32>
    %204 = arith.negf %203 : vector<2x128xf32>
    %205 = math.exp %204 : vector<2x128xf32>
    %cst_34 = arith.constant 1.000000e+00 : f32
    %206 = vector.broadcast %cst_34 : f32 to vector<2x128xf32>
    %207 = arith.addf %206, %205 : vector<2x128xf32>
    %208 = arith.divf %206, %207 : vector<2x128xf32>
    %209 = vector.extract_strided_slice %193 {offsets = [0, 256], sizes = [2, 128], strides = [1, 1]} : vector<2x512xf32> to vector<2x128xf32>
    %210 = math.tanh %209 : vector<2x128xf32>
    %211 = vector.extract_strided_slice %193 {offsets = [0, 384], sizes = [2, 128], strides = [1, 1]} : vector<2x512xf32> to vector<2x128xf32>
    %212 = arith.negf %211 : vector<2x128xf32>
    %213 = math.exp %212 : vector<2x128xf32>
    %cst_35 = arith.constant 1.000000e+00 : f32
    %214 = vector.broadcast %cst_35 : f32 to vector<2x128xf32>
    %215 = arith.addf %214, %213 : vector<2x128xf32>
    %216 = arith.divf %214, %215 : vector<2x128xf32>
    %217 = arith.mulf %208, %160 : vector<2x128xf32>
    %218 = arith.mulf %202, %210 : vector<2x128xf32>
    %219 = arith.addf %217, %218 : vector<2x128xf32>
    %220 = math.tanh %219 : vector<2x128xf32>
    %221 = arith.mulf %216, %220 : vector<2x128xf32>
    %222 = vector.extract_strided_slice %196 {offsets = [0, 0], sizes = [2, 128], strides = [1, 1]} : vector<2x512xf32> to vector<2x128xf32>
    %223 = arith.negf %222 : vector<2x128xf32>
    %224 = math.exp %223 : vector<2x128xf32>
    %cst_36 = arith.constant 1.000000e+00 : f32
    %225 = vector.broadcast %cst_36 : f32 to vector<2x128xf32>
    %226 = arith.addf %225, %224 : vector<2x128xf32>
    %227 = arith.divf %225, %226 : vector<2x128xf32>
    %228 = vector.extract_strided_slice %196 {offsets = [0, 128], sizes = [2, 128], strides = [1, 1]} : vector<2x512xf32> to vector<2x128xf32>
    %229 = arith.negf %228 : vector<2x128xf32>
    %230 = math.exp %229 : vector<2x128xf32>
    %cst_37 = arith.constant 1.000000e+00 : f32
    %231 = vector.broadcast %cst_37 : f32 to vector<2x128xf32>
    %232 = arith.addf %231, %230 : vector<2x128xf32>
    %233 = arith.divf %231, %232 : vector<2x128xf32>
    %234 = vector.extract_strided_slice %196 {offsets = [0, 256], sizes = [2, 128], strides = [1, 1]} : vector<2x512xf32> to vector<2x128xf32>
    %235 = math.tanh %234 : vector<2x128xf32>
    %236 = vector.extract_strided_slice %196 {offsets = [0, 384], sizes = [2, 128], strides = [1, 1]} : vector<2x512xf32> to vector<2x128xf32>
    %237 = arith.negf %236 : vector<2x128xf32>
    %238 = math.exp %237 : vector<2x128xf32>
    %cst_38 = arith.constant 1.000000e+00 : f32
    %239 = vector.broadcast %cst_38 : f32 to vector<2x128xf32>
    %240 = arith.addf %239, %238 : vector<2x128xf32>
    %241 = arith.divf %239, %240 : vector<2x128xf32>
    %242 = arith.mulf %233, %185 : vector<2x128xf32>
    %243 = arith.mulf %227, %235 : vector<2x128xf32>
    %244 = arith.addf %242, %243 : vector<2x128xf32>
    %245 = math.tanh %244 : vector<2x128xf32>
    %246 = arith.mulf %241, %245 : vector<2x128xf32>
    %247 = tpu.concatenate %221, %246 in 1 : vector<2x128xf32>, vector<2x128xf32> -> vector<2x256xf32>
    %248 = arith.truncf %247 : vector<2x256xf32> to vector<2x256xbf16>
    %cst_39 = arith.constant dense<0.000000e+00> : vector<2x1024xf32>
    %249 = tpu.matmul %248, %6, %cst_39 {dimension_numbers = #tpu.dot_dimension_numbers<[1], [0], [0], [1], [0, 0, 1, 1], [], []>} : vector<2x256xbf16>, vector<256x1024xbf16>, vector<2x1024xf32> -> vector<2x1024xf32>
    %250 = vector.extract_strided_slice %249 {offsets = [0, 0], sizes = [2, 512], strides = [1, 1]} : vector<2x1024xf32> to vector<2x512xf32>
    %251 = vector.extract_strided_slice %5 {offsets = [8, 0], sizes = [2, 512], strides = [1, 1]} : vector<16x1024xf32> to vector<2x512xf32>
    %252 = arith.addf %250, %251 : vector<2x512xf32>
    %253 = vector.extract_strided_slice %249 {offsets = [0, 512], sizes = [2, 512], strides = [1, 1]} : vector<2x1024xf32> to vector<2x512xf32>
    %254 = vector.extract_strided_slice %5 {offsets = [6, 512], sizes = [2, 512], strides = [1, 1]} : vector<16x1024xf32> to vector<2x512xf32>
    %255 = arith.addf %253, %254 : vector<2x512xf32>
    %256 = vector.extract_strided_slice %252 {offsets = [0, 0], sizes = [2, 128], strides = [1, 1]} : vector<2x512xf32> to vector<2x128xf32>
    %257 = arith.negf %256 : vector<2x128xf32>
    %258 = math.exp %257 : vector<2x128xf32>
    %cst_40 = arith.constant 1.000000e+00 : f32
    %259 = vector.broadcast %cst_40 : f32 to vector<2x128xf32>
    %260 = arith.addf %259, %258 : vector<2x128xf32>
    %261 = arith.divf %259, %260 : vector<2x128xf32>
    %262 = vector.extract_strided_slice %252 {offsets = [0, 128], sizes = [2, 128], strides = [1, 1]} : vector<2x512xf32> to vector<2x128xf32>
    %263 = arith.negf %262 : vector<2x128xf32>
    %264 = math.exp %263 : vector<2x128xf32>
    %cst_41 = arith.constant 1.000000e+00 : f32
    %265 = vector.broadcast %cst_41 : f32 to vector<2x128xf32>
    %266 = arith.addf %265, %264 : vector<2x128xf32>
    %267 = arith.divf %265, %266 : vector<2x128xf32>
    %268 = vector.extract_strided_slice %252 {offsets = [0, 256], sizes = [2, 128], strides = [1, 1]} : vector<2x512xf32> to vector<2x128xf32>
    %269 = math.tanh %268 : vector<2x128xf32>
    %270 = vector.extract_strided_slice %252 {offsets = [0, 384], sizes = [2, 128], strides = [1, 1]} : vector<2x512xf32> to vector<2x128xf32>
    %271 = arith.negf %270 : vector<2x128xf32>
    %272 = math.exp %271 : vector<2x128xf32>
    %cst_42 = arith.constant 1.000000e+00 : f32
    %273 = vector.broadcast %cst_42 : f32 to vector<2x128xf32>
    %274 = arith.addf %273, %272 : vector<2x128xf32>
    %275 = arith.divf %273, %274 : vector<2x128xf32>
    %276 = arith.mulf %267, %219 : vector<2x128xf32>
    %277 = arith.mulf %261, %269 : vector<2x128xf32>
    %278 = arith.addf %276, %277 : vector<2x128xf32>
    %279 = math.tanh %278 : vector<2x128xf32>
    %280 = arith.mulf %275, %279 : vector<2x128xf32>
    %281 = vector.extract_strided_slice %255 {offsets = [0, 0], sizes = [2, 128], strides = [1, 1]} : vector<2x512xf32> to vector<2x128xf32>
    %282 = arith.negf %281 : vector<2x128xf32>
    %283 = math.exp %282 : vector<2x128xf32>
    %cst_43 = arith.constant 1.000000e+00 : f32
    %284 = vector.broadcast %cst_43 : f32 to vector<2x128xf32>
    %285 = arith.addf %284, %283 : vector<2x128xf32>
    %286 = arith.divf %284, %285 : vector<2x128xf32>
    %287 = vector.extract_strided_slice %255 {offsets = [0, 128], sizes = [2, 128], strides = [1, 1]} : vector<2x512xf32> to vector<2x128xf32>
    %288 = arith.negf %287 : vector<2x128xf32>
    %289 = math.exp %288 : vector<2x128xf32>
    %cst_44 = arith.constant 1.000000e+00 : f32
    %290 = vector.broadcast %cst_44 : f32 to vector<2x128xf32>
    %291 = arith.addf %290, %289 : vector<2x128xf32>
    %292 = arith.divf %290, %291 : vector<2x128xf32>
    %293 = vector.extract_strided_slice %255 {offsets = [0, 256], sizes = [2, 128], strides = [1, 1]} : vector<2x512xf32> to vector<2x128xf32>
    %294 = math.tanh %293 : vector<2x128xf32>
    %295 = vector.extract_strided_slice %255 {offsets = [0, 384], sizes = [2, 128], strides = [1, 1]} : vector<2x512xf32> to vector<2x128xf32>
    %296 = arith.negf %295 : vector<2x128xf32>
    %297 = math.exp %296 : vector<2x128xf32>
    %cst_45 = arith.constant 1.000000e+00 : f32
    %298 = vector.broadcast %cst_45 : f32 to vector<2x128xf32>
    %299 = arith.addf %298, %297 : vector<2x128xf32>
    %300 = arith.divf %298, %299 : vector<2x128xf32>
    %301 = arith.mulf %292, %244 : vector<2x128xf32>
    %302 = arith.mulf %286, %294 : vector<2x128xf32>
    %303 = arith.addf %301, %302 : vector<2x128xf32>
    %304 = math.tanh %303 : vector<2x128xf32>
    %305 = arith.mulf %300, %304 : vector<2x128xf32>
    %306 = tpu.concatenate %280, %305 in 1 : vector<2x128xf32>, vector<2x128xf32> -> vector<2x256xf32>
    %307 = arith.truncf %306 : vector<2x256xf32> to vector<2x256xbf16>
    %cst_46 = arith.constant dense<0.000000e+00> : vector<2x1024xf32>
    %308 = tpu.matmul %307, %6, %cst_46 {dimension_numbers = #tpu.dot_dimension_numbers<[1], [0], [0], [1], [0, 0, 1, 1], [], []>} : vector<2x256xbf16>, vector<256x1024xbf16>, vector<2x1024xf32> -> vector<2x1024xf32>
    %309 = vector.extract_strided_slice %308 {offsets = [0, 0], sizes = [2, 512], strides = [1, 1]} : vector<2x1024xf32> to vector<2x512xf32>
    %310 = vector.extract_strided_slice %5 {offsets = [10, 0], sizes = [2, 512], strides = [1, 1]} : vector<16x1024xf32> to vector<2x512xf32>
    %311 = arith.addf %309, %310 : vector<2x512xf32>
    %312 = vector.extract_strided_slice %308 {offsets = [0, 512], sizes = [2, 512], strides = [1, 1]} : vector<2x1024xf32> to vector<2x512xf32>
    %313 = vector.extract_strided_slice %5 {offsets = [4, 512], sizes = [2, 512], strides = [1, 1]} : vector<16x1024xf32> to vector<2x512xf32>
    %314 = arith.addf %312, %313 : vector<2x512xf32>
    %315 = vector.extract_strided_slice %311 {offsets = [0, 0], sizes = [2, 128], strides = [1, 1]} : vector<2x512xf32> to vector<2x128xf32>
    %316 = arith.negf %315 : vector<2x128xf32>
    %317 = math.exp %316 : vector<2x128xf32>
    %cst_47 = arith.constant 1.000000e+00 : f32
    %318 = vector.broadcast %cst_47 : f32 to vector<2x128xf32>
    %319 = arith.addf %318, %317 : vector<2x128xf32>
    %320 = arith.divf %318, %319 : vector<2x128xf32>
    %321 = vector.extract_strided_slice %311 {offsets = [0, 128], sizes = [2, 128], strides = [1, 1]} : vector<2x512xf32> to vector<2x128xf32>
    %322 = arith.negf %321 : vector<2x128xf32>
    %323 = math.exp %322 : vector<2x128xf32>
    %cst_48 = arith.constant 1.000000e+00 : f32
    %324 = vector.broadcast %cst_48 : f32 to vector<2x128xf32>
    %325 = arith.addf %324, %323 : vector<2x128xf32>
    %326 = arith.divf %324, %325 : vector<2x128xf32>
    %327 = vector.extract_strided_slice %311 {offsets = [0, 256], sizes = [2, 128], strides = [1, 1]} : vector<2x512xf32> to vector<2x128xf32>
    %328 = math.tanh %327 : vector<2x128xf32>
    %329 = vector.extract_strided_slice %311 {offsets = [0, 384], sizes = [2, 128], strides = [1, 1]} : vector<2x512xf32> to vector<2x128xf32>
    %330 = arith.negf %329 : vector<2x128xf32>
    %331 = math.exp %330 : vector<2x128xf32>
    %cst_49 = arith.constant 1.000000e+00 : f32
    %332 = vector.broadcast %cst_49 : f32 to vector<2x128xf32>
    %333 = arith.addf %332, %331 : vector<2x128xf32>
    %334 = arith.divf %332, %333 : vector<2x128xf32>
    %335 = arith.mulf %326, %278 : vector<2x128xf32>
    %336 = arith.mulf %320, %328 : vector<2x128xf32>
    %337 = arith.addf %335, %336 : vector<2x128xf32>
    %338 = math.tanh %337 : vector<2x128xf32>
    %339 = arith.mulf %334, %338 : vector<2x128xf32>
    %340 = vector.extract_strided_slice %314 {offsets = [0, 0], sizes = [2, 128], strides = [1, 1]} : vector<2x512xf32> to vector<2x128xf32>
    %341 = arith.negf %340 : vector<2x128xf32>
    %342 = math.exp %341 : vector<2x128xf32>
    %cst_50 = arith.constant 1.000000e+00 : f32
    %343 = vector.broadcast %cst_50 : f32 to vector<2x128xf32>
    %344 = arith.addf %343, %342 : vector<2x128xf32>
    %345 = arith.divf %343, %344 : vector<2x128xf32>
    %346 = vector.extract_strided_slice %314 {offsets = [0, 128], sizes = [2, 128], strides = [1, 1]} : vector<2x512xf32> to vector<2x128xf32>
    %347 = arith.negf %346 : vector<2x128xf32>
    %348 = math.exp %347 : vector<2x128xf32>
    %cst_51 = arith.constant 1.000000e+00 : f32
    %349 = vector.broadcast %cst_51 : f32 to vector<2x128xf32>
    %350 = arith.addf %349, %348 : vector<2x128xf32>
    %351 = arith.divf %349, %350 : vector<2x128xf32>
    %352 = vector.extract_strided_slice %314 {offsets = [0, 256], sizes = [2, 128], strides = [1, 1]} : vector<2x512xf32> to vector<2x128xf32>
    %353 = math.tanh %352 : vector<2x128xf32>
    %354 = vector.extract_strided_slice %314 {offsets = [0, 384], sizes = [2, 128], strides = [1, 1]} : vector<2x512xf32> to vector<2x128xf32>
    %355 = arith.negf %354 : vector<2x128xf32>
    %356 = math.exp %355 : vector<2x128xf32>
    %cst_52 = arith.constant 1.000000e+00 : f32
    %357 = vector.broadcast %cst_52 : f32 to vector<2x128xf32>
    %358 = arith.addf %357, %356 : vector<2x128xf32>
    %359 = arith.divf %357, %358 : vector<2x128xf32>
    %360 = arith.mulf %351, %303 : vector<2x128xf32>
    %361 = arith.mulf %345, %353 : vector<2x128xf32>
    %362 = arith.addf %360, %361 : vector<2x128xf32>
    %363 = math.tanh %362 : vector<2x128xf32>
    %364 = arith.mulf %359, %363 : vector<2x128xf32>
    %365 = tpu.concatenate %339, %364 in 1 : vector<2x128xf32>, vector<2x128xf32> -> vector<2x256xf32>
    %366 = arith.truncf %365 : vector<2x256xf32> to vector<2x256xbf16>
    %cst_53 = arith.constant dense<0.000000e+00> : vector<2x1024xf32>
    %367 = tpu.matmul %366, %6, %cst_53 {dimension_numbers = #tpu.dot_dimension_numbers<[1], [0], [0], [1], [0, 0, 1, 1], [], []>} : vector<2x256xbf16>, vector<256x1024xbf16>, vector<2x1024xf32> -> vector<2x1024xf32>
    %368 = vector.extract_strided_slice %367 {offsets = [0, 0], sizes = [2, 512], strides = [1, 1]} : vector<2x1024xf32> to vector<2x512xf32>
    %369 = vector.extract_strided_slice %5 {offsets = [12, 0], sizes = [2, 512], strides = [1, 1]} : vector<16x1024xf32> to vector<2x512xf32>
    %370 = arith.addf %368, %369 : vector<2x512xf32>
    %371 = vector.extract_strided_slice %367 {offsets = [0, 512], sizes = [2, 512], strides = [1, 1]} : vector<2x1024xf32> to vector<2x512xf32>
    %372 = vector.extract_strided_slice %5 {offsets = [2, 512], sizes = [2, 512], strides = [1, 1]} : vector<16x1024xf32> to vector<2x512xf32>
    %373 = arith.addf %371, %372 : vector<2x512xf32>
    %374 = vector.extract_strided_slice %370 {offsets = [0, 0], sizes = [2, 128], strides = [1, 1]} : vector<2x512xf32> to vector<2x128xf32>
    %375 = arith.negf %374 : vector<2x128xf32>
    %376 = math.exp %375 : vector<2x128xf32>
    %cst_54 = arith.constant 1.000000e+00 : f32
    %377 = vector.broadcast %cst_54 : f32 to vector<2x128xf32>
    %378 = arith.addf %377, %376 : vector<2x128xf32>
    %379 = arith.divf %377, %378 : vector<2x128xf32>
    %380 = vector.extract_strided_slice %370 {offsets = [0, 128], sizes = [2, 128], strides = [1, 1]} : vector<2x512xf32> to vector<2x128xf32>
    %381 = arith.negf %380 : vector<2x128xf32>
    %382 = math.exp %381 : vector<2x128xf32>
    %cst_55 = arith.constant 1.000000e+00 : f32
    %383 = vector.broadcast %cst_55 : f32 to vector<2x128xf32>
    %384 = arith.addf %383, %382 : vector<2x128xf32>
    %385 = arith.divf %383, %384 : vector<2x128xf32>
    %386 = vector.extract_strided_slice %370 {offsets = [0, 256], sizes = [2, 128], strides = [1, 1]} : vector<2x512xf32> to vector<2x128xf32>
    %387 = math.tanh %386 : vector<2x128xf32>
    %388 = vector.extract_strided_slice %370 {offsets = [0, 384], sizes = [2, 128], strides = [1, 1]} : vector<2x512xf32> to vector<2x128xf32>
    %389 = arith.negf %388 : vector<2x128xf32>
    %390 = math.exp %389 : vector<2x128xf32>
    %cst_56 = arith.constant 1.000000e+00 : f32
    %391 = vector.broadcast %cst_56 : f32 to vector<2x128xf32>
    %392 = arith.addf %391, %390 : vector<2x128xf32>
    %393 = arith.divf %391, %392 : vector<2x128xf32>
    %394 = arith.mulf %385, %337 : vector<2x128xf32>
    %395 = arith.mulf %379, %387 : vector<2x128xf32>
    %396 = arith.addf %394, %395 : vector<2x128xf32>
    %397 = math.tanh %396 : vector<2x128xf32>
    %398 = arith.mulf %393, %397 : vector<2x128xf32>
    %399 = vector.extract_strided_slice %373 {offsets = [0, 0], sizes = [2, 128], strides = [1, 1]} : vector<2x512xf32> to vector<2x128xf32>
    %400 = arith.negf %399 : vector<2x128xf32>
    %401 = math.exp %400 : vector<2x128xf32>
    %cst_57 = arith.constant 1.000000e+00 : f32
    %402 = vector.broadcast %cst_57 : f32 to vector<2x128xf32>
    %403 = arith.addf %402, %401 : vector<2x128xf32>
    %404 = arith.divf %402, %403 : vector<2x128xf32>
    %405 = vector.extract_strided_slice %373 {offsets = [0, 128], sizes = [2, 128], strides = [1, 1]} : vector<2x512xf32> to vector<2x128xf32>
    %406 = arith.negf %405 : vector<2x128xf32>
    %407 = math.exp %406 : vector<2x128xf32>
    %cst_58 = arith.constant 1.000000e+00 : f32
    %408 = vector.broadcast %cst_58 : f32 to vector<2x128xf32>
    %409 = arith.addf %408, %407 : vector<2x128xf32>
    %410 = arith.divf %408, %409 : vector<2x128xf32>
    %411 = vector.extract_strided_slice %373 {offsets = [0, 256], sizes = [2, 128], strides = [1, 1]} : vector<2x512xf32> to vector<2x128xf32>
    %412 = math.tanh %411 : vector<2x128xf32>
    %413 = vector.extract_strided_slice %373 {offsets = [0, 384], sizes = [2, 128], strides = [1, 1]} : vector<2x512xf32> to vector<2x128xf32>
    %414 = arith.negf %413 : vector<2x128xf32>
    %415 = math.exp %414 : vector<2x128xf32>
    %cst_59 = arith.constant 1.000000e+00 : f32
    %416 = vector.broadcast %cst_59 : f32 to vector<2x128xf32>
    %417 = arith.addf %416, %415 : vector<2x128xf32>
    %418 = arith.divf %416, %417 : vector<2x128xf32>
    %419 = arith.mulf %410, %362 : vector<2x128xf32>
    %420 = arith.mulf %404, %412 : vector<2x128xf32>
    %421 = arith.addf %419, %420 : vector<2x128xf32>
    %422 = math.tanh %421 : vector<2x128xf32>
    %423 = arith.mulf %418, %422 : vector<2x128xf32>
    %424 = tpu.concatenate %398, %423 in 1 : vector<2x128xf32>, vector<2x128xf32> -> vector<2x256xf32>
    %425 = arith.truncf %424 : vector<2x256xf32> to vector<2x256xbf16>
    %cst_60 = arith.constant dense<0.000000e+00> : vector<2x1024xf32>
    %426 = tpu.matmul %425, %6, %cst_60 {dimension_numbers = #tpu.dot_dimension_numbers<[1], [0], [0], [1], [0, 0, 1, 1], [], []>} : vector<2x256xbf16>, vector<256x1024xbf16>, vector<2x1024xf32> -> vector<2x1024xf32>
    %427 = vector.extract_strided_slice %426 {offsets = [0, 0], sizes = [2, 512], strides = [1, 1]} : vector<2x1024xf32> to vector<2x512xf32>
    %428 = vector.extract_strided_slice %5 {offsets = [14, 0], sizes = [2, 512], strides = [1, 1]} : vector<16x1024xf32> to vector<2x512xf32>
    %429 = arith.addf %427, %428 : vector<2x512xf32>
    %430 = vector.extract_strided_slice %426 {offsets = [0, 512], sizes = [2, 512], strides = [1, 1]} : vector<2x1024xf32> to vector<2x512xf32>
    %431 = vector.extract_strided_slice %5 {offsets = [0, 512], sizes = [2, 512], strides = [1, 1]} : vector<16x1024xf32> to vector<2x512xf32>
    %432 = arith.addf %430, %431 : vector<2x512xf32>
    %433 = vector.extract_strided_slice %429 {offsets = [0, 0], sizes = [2, 128], strides = [1, 1]} : vector<2x512xf32> to vector<2x128xf32>
    %434 = arith.negf %433 : vector<2x128xf32>
    %435 = math.exp %434 : vector<2x128xf32>
    %cst_61 = arith.constant 1.000000e+00 : f32
    %436 = vector.broadcast %cst_61 : f32 to vector<2x128xf32>
    %437 = arith.addf %436, %435 : vector<2x128xf32>
    %438 = arith.divf %436, %437 : vector<2x128xf32>
    %439 = vector.extract_strided_slice %429 {offsets = [0, 128], sizes = [2, 128], strides = [1, 1]} : vector<2x512xf32> to vector<2x128xf32>
    %440 = arith.negf %439 : vector<2x128xf32>
    %441 = math.exp %440 : vector<2x128xf32>
    %cst_62 = arith.constant 1.000000e+00 : f32
    %442 = vector.broadcast %cst_62 : f32 to vector<2x128xf32>
    %443 = arith.addf %442, %441 : vector<2x128xf32>
    %444 = arith.divf %442, %443 : vector<2x128xf32>
    %445 = vector.extract_strided_slice %429 {offsets = [0, 256], sizes = [2, 128], strides = [1, 1]} : vector<2x512xf32> to vector<2x128xf32>
    %446 = math.tanh %445 : vector<2x128xf32>
    %447 = vector.extract_strided_slice %429 {offsets = [0, 384], sizes = [2, 128], strides = [1, 1]} : vector<2x512xf32> to vector<2x128xf32>
    %448 = arith.negf %447 : vector<2x128xf32>
    %449 = math.exp %448 : vector<2x128xf32>
    %cst_63 = arith.constant 1.000000e+00 : f32
    %450 = vector.broadcast %cst_63 : f32 to vector<2x128xf32>
    %451 = arith.addf %450, %449 : vector<2x128xf32>
    %452 = arith.divf %450, %451 : vector<2x128xf32>
    %453 = arith.mulf %444, %396 : vector<2x128xf32>
    %454 = arith.mulf %438, %446 : vector<2x128xf32>
    %455 = arith.addf %453, %454 : vector<2x128xf32>
    %456 = math.tanh %455 : vector<2x128xf32>
    %457 = arith.mulf %452, %456 : vector<2x128xf32>
    %458 = vector.extract_strided_slice %432 {offsets = [0, 0], sizes = [2, 128], strides = [1, 1]} : vector<2x512xf32> to vector<2x128xf32>
    %459 = arith.negf %458 : vector<2x128xf32>
    %460 = math.exp %459 : vector<2x128xf32>
    %cst_64 = arith.constant 1.000000e+00 : f32
    %461 = vector.broadcast %cst_64 : f32 to vector<2x128xf32>
    %462 = arith.addf %461, %460 : vector<2x128xf32>
    %463 = arith.divf %461, %462 : vector<2x128xf32>
    %464 = vector.extract_strided_slice %432 {offsets = [0, 128], sizes = [2, 128], strides = [1, 1]} : vector<2x512xf32> to vector<2x128xf32>
    %465 = arith.negf %464 : vector<2x128xf32>
    %466 = math.exp %465 : vector<2x128xf32>
    %cst_65 = arith.constant 1.000000e+00 : f32
    %467 = vector.broadcast %cst_65 : f32 to vector<2x128xf32>
    %468 = arith.addf %467, %466 : vector<2x128xf32>
    %469 = arith.divf %467, %468 : vector<2x128xf32>
    %470 = vector.extract_strided_slice %432 {offsets = [0, 256], sizes = [2, 128], strides = [1, 1]} : vector<2x512xf32> to vector<2x128xf32>
    %471 = math.tanh %470 : vector<2x128xf32>
    %472 = vector.extract_strided_slice %432 {offsets = [0, 384], sizes = [2, 128], strides = [1, 1]} : vector<2x512xf32> to vector<2x128xf32>
    %473 = arith.negf %472 : vector<2x128xf32>
    %474 = math.exp %473 : vector<2x128xf32>
    %cst_66 = arith.constant 1.000000e+00 : f32
    %475 = vector.broadcast %cst_66 : f32 to vector<2x128xf32>
    %476 = arith.addf %475, %474 : vector<2x128xf32>
    %477 = arith.divf %475, %476 : vector<2x128xf32>
    %478 = arith.mulf %469, %421 : vector<2x128xf32>
    %479 = arith.mulf %463, %471 : vector<2x128xf32>
    %480 = arith.addf %478, %479 : vector<2x128xf32>
    %481 = math.tanh %480 : vector<2x128xf32>
    %482 = arith.mulf %477, %481 : vector<2x128xf32>
    %483 = vector.extract_strided_slice %457 {offsets = [0, 0], sizes = [2, 64], strides = [1, 1]} : vector<2x128xf32> to vector<2x64xf32>
    %484 = vector.extract_strided_slice %482 {offsets = [0, 0], sizes = [2, 64], strides = [1, 1]} : vector<2x128xf32> to vector<2x64xf32>
    %485 = tpu.concatenate %483, %484 in 1 : vector<2x64xf32>, vector<2x64xf32> -> vector<2x128xf32>
    %c0_67 = arith.constant 0 : index
    %c0_68 = arith.constant 0 : index
    %486 = vector.load %arg4[%c0_67, %c0_68] : memref<128x64xf32, #tpu.memory_space<vmem>>, vector<128x64xf32>
    %cst_69 = arith.constant dense<0.000000e+00> : vector<2x64xf32>
    %487 = tpu.matmul %485, %486, %cst_69 {dimension_numbers = #tpu.dot_dimension_numbers<[1], [0], [0], [1], [0, 0, 1, 1], [], []>} : vector<2x128xf32>, vector<128x64xf32>, vector<2x64xf32> -> vector<2x64xf32>
    %c0_70 = arith.constant 0 : index
    %c0_71 = arith.constant 0 : index
    %488 = vector.load %arg5[%c0_70, %c0_71] : memref<1x64xf32, #tpu.memory_space<vmem>>, vector<1x64xf32>
    %489 = vector.broadcast %488 : vector<1x64xf32> to vector<2x64xf32>
    %490 = arith.addf %487, %489 : vector<2x64xf32>
    %c0_72 = arith.constant 0 : index
    %c0_73 = arith.constant 0 : index
    %491 = vector.load %arg6[%c0_72, %c0_73] : memref<64x2xf32, #tpu.memory_space<vmem>>, vector<64x2xf32>
    %cst_74 = arith.constant dense<0.000000e+00> : vector<2x2xf32>
    %492 = tpu.matmul %490, %491, %cst_74 {dimension_numbers = #tpu.dot_dimension_numbers<[1], [0], [0], [1], [0, 0, 1, 1], [], []>} : vector<2x64xf32>, vector<64x2xf32>, vector<2x2xf32> -> vector<2x2xf32>
    %c0_75 = arith.constant 0 : index
    %c0_76 = arith.constant 0 : index
    %493 = vector.load %arg7[%c0_75, %c0_76] : memref<1x2xf32, #tpu.memory_space<vmem>>, vector<1x2xf32>
    %494 = vector.broadcast %493 : vector<1x2xf32> to vector<2x2xf32>
    %495 = arith.addf %492, %494 : vector<2x2xf32>
    %cst_77 = arith.constant 0.000000e+00 : f32
    %496 = vector.broadcast %cst_77 : f32 to vector<2x62xf32>
    %497 = tpu.concatenate %490, %495, %496 in 1 : vector<2x64xf32>, vector<2x2xf32>, vector<2x62xf32> -> vector<2x128xf32>
    %c0_78 = arith.constant 0 : index
    %c0_79 = arith.constant 0 : index
    %498 = vector.load %arg8[%c0_78, %c0_79] : memref<2x128xf32, #tpu.memory_space<vmem>>, vector<2x128xf32>
    tpu.vector_store %arg8[%c0_78, %c0_79], %497 {strides = array<i32>} : memref<2x128xf32, #tpu.memory_space<vmem>>, vector<2x128xf32>,
    return
  }
}

</mosaic_0001>

<llo_original>
// kernel: tpu_custom_call.1
$region0: #{tpu_custom_call.1}
  #allocation0 [shape = 'u32[]', space=smem, size = 0x4, offset = 0x4, fixed_abs, tag = 'smem constant byte address 0x4 - core index']
  #allocation1 [shape = 'u32[144,128]{1,0:T(1,128)}', space=vmem, size = 0x12000, scoped, tag = 'internal scratch']
  %s0 = inlined_call_operand.vmem [shape: bf16[16,384], index: 0, kind: input, shape index: {}]
  %s1 = inlined_call_operand.hbm [shape: bf16[384,1024], index: 1, kind: input, shape index: {}]
  %s2 = inlined_call_operand.vmem [shape: f32[1,1024], index: 2, kind: input, shape index: {}]
  %s3 = inlined_call_operand.hbm [shape: bf16[256,1024], index: 3, kind: input, shape index: {}]
  %s4 = inlined_call_operand.vmem [shape: f32[128,64], index: 4, kind: input, shape index: {}]
  %s5 = inlined_call_operand.vmem [shape: f32[1,64], index: 5, kind: input, shape index: {}]
  %s6 = inlined_call_operand.vmem [shape: f32[64,2], index: 6, kind: input, shape index: {}]
  %s7 = inlined_call_operand.vmem [shape: f32[1,2], index: 7, kind: input, shape index: {}]
  %s8 = inlined_call_operand.hbm [shape: f32[2,128], index: 8, kind: output, shape index: {}]
  %s9 = sld [smem:[#allocation0]]
  $region50: #{tpu_custom_call.1} parent=0
    _
  %s11 = ssub.s32 1, %s9
  %s12 = scalar_select 0, %s11, %s9
  $region1: #{tpu_custom_call.1} parent=0
    #allocation2 [shape = 'u8[786432]{0}', space=vmem, size = 0xc0000, scoped, tag = 'input window, operand 1, single buffered']
    #allocation3 [shape = 's32[1]{0}', space=sflag, size = 0x4, scoped, tag = 'scoped memory for tpu_custom_call.1']
    #allocation4 [shape = 's32[1]{0}', space=sflag, size = 0x4, scoped, tag = 'scoped memory for tpu_custom_call.1']
    #allocation5 [shape = 'u8[524288]{0}', space=vmem, size = 0x80000, scoped, tag = 'input window, operand 3, single buffered']
    #allocation6 [shape = 's32[1]{0}', space=sflag, size = 0x4, scoped, tag = 'scoped memory for tpu_custom_call.1']
    #allocation7 [shape = 'u8[1024]{0}', space=vmem, size = 0x400, scoped, tag = 'output window, operand 0, single buffered']
    %13 = vsyncpa [#allocation3], 0
    %14 = vsyncpa [#allocation6], 0
    %15 = vsyncpa [#allocation4], 0
    // Predicated region
    $region2: #{tpu_custom_call.1} parent=1 // pred_check
      _
    $region3: #{tpu_custom_call.1} parent=1 // pred_check_branch
      %17 = sbr.rel (0) target = $region5
    $region4: #{tpu_custom_call.1} parent=1 // pred_region
      _
    $region5: #{tpu_custom_call.1} parent=1 // pred_fallthru
      _
    // Predicated region
    $region6: #{tpu_custom_call.1} parent=1 // pred_check
      _
    $region7: #{tpu_custom_call.1} parent=1 // pred_check_branch
      %19 = sbr.rel (0) target = $region9
    $region8: #{tpu_custom_call.1} parent=1 // pred_region
      %s21 = ssub.s32 24576, 24576
      %22 = vsyncadd [#allocation3], %s21
      %s23 = sshll.u32 [#allocation2], 4
      %s24 = int_to_ptr.vmem [resolvable:$true] %s23
      %29 = dma.hbm_to_vmem [thread:$0]  %s1, 24576, %s24, [#allocation3], 512, 512, 32
    $region9: #{tpu_custom_call.1} parent=1 // pred_fallthru
      _
    // Predicated region
    $region10: #{tpu_custom_call.1} parent=1 // pred_check
      _
    $region11: #{tpu_custom_call.1} parent=1 // pred_check_branch
      %31 = sbr.rel (0) target = $region13
    $region12: #{tpu_custom_call.1} parent=1 // pred_region
      _
    $region13: #{tpu_custom_call.1} parent=1 // pred_fallthru
      _
    // Predicated region
    $region14: #{tpu_custom_call.1} parent=1 // pred_check
      _
    $region15: #{tpu_custom_call.1} parent=1 // pred_check_branch
      %33 = sbr.rel (0) target = $region17
    $region16: #{tpu_custom_call.1} parent=1 // pred_region
      %s35 = ssub.s32 16384, 16384
      %36 = vsyncadd [#allocation6], %s35
      %s37 = sshll.u32 [#allocation5], 4
      %s38 = int_to_ptr.vmem [resolvable:$true] %s37
      %43 = dma.hbm_to_vmem [thread:$0]  %s3, 16384, %s38, [#allocation6], 512, 512, 32
    $region17: #{tpu_custom_call.1} parent=1 // pred_fallthru
      _
    // Predicated region
    $region18: #{tpu_custom_call.1} parent=1 // pred_check
      _
    $region19: #{tpu_custom_call.1} parent=1 // pred_check_branch
      %45 = sbr.rel (0) target = $region21
    $region20: #{tpu_custom_call.1} parent=1 // pred_region
      _
    $region21: #{tpu_custom_call.1} parent=1 // pred_fallthru
      _
    // Predicated region
    $region22: #{tpu_custom_call.1} parent=1 // pred_check
      _
    $region23: #{tpu_custom_call.1} parent=1 // pred_check_branch
      %47 = sbr.rel (0) target = $region25
    $region24: #{tpu_custom_call.1} parent=1 // pred_region
      _
    $region25: #{tpu_custom_call.1} parent=1 // pred_fallthru
      _
    // Predicated region
    $region26: #{tpu_custom_call.1} parent=1 // pred_check
      _
    $region27: #{tpu_custom_call.1} parent=1 // pred_check_branch
      %49 = sbr.rel (0) target = $region29
    $region28: #{tpu_custom_call.1} parent=1 // pred_region
      _
    $region29: #{tpu_custom_call.1} parent=1 // pred_fallthru
      _
    // Predicated region
    $region30: #{tpu_custom_call.1} parent=1 // pred_check
      _
    $region31: #{tpu_custom_call.1} parent=1 // pred_check_branch
      %51 = sbr.rel (0) target = $region33
    $region32: #{tpu_custom_call.1} parent=1 // pred_region
      _
    $region33: #{tpu_custom_call.1} parent=1 // pred_fallthru
      _
    // Predicated region
    $region34: #{tpu_custom_call.1} parent=1 // pred_check
      _
    $region35: #{tpu_custom_call.1} parent=1 // pred_check_branch
      %53 = sbr.rel (0) target = $region37
    $region36: #{tpu_custom_call.1} parent=1 // pred_region
      %54 = dma.done [#allocation3], 24576
    $region37: #{tpu_custom_call.1} parent=1 // pred_fallthru
      _
    // Predicated region
    $region38: #{tpu_custom_call.1} parent=1 // pred_check
      _
    $region39: #{tpu_custom_call.1} parent=1 // pred_check_branch
      %56 = sbr.rel (0) target = $region41
    $region40: #{tpu_custom_call.1} parent=1 // pred_region
      %57 = dma.done [#allocation6], 16384
    $region41: #{tpu_custom_call.1} parent=1 // pred_fallthru
      _
    %v59 = vld [vmem:[%s0] sm:$0xff]
    %v60 = vld [vmem:[%s0 + $0x8] sm:$0xf]
    %v61 = vld [vmem:[%s0 + $0xc] sm:$0xff]
    %v62 = vld [vmem:[%s0 + $0x14] sm:$0xf]
    %v63 = vld [vmem:[#allocation2] sm:$0xff]
    %v64 = vld [vmem:[#allocation2 + $0x8] sm:$0xff]
    %v65 = vld [vmem:[#allocation2 + $0x10] sm:$0xff]
    %v66 = vld [vmem:[#allocation2 + $0x18] sm:$0xff]
    %v67 = vld [vmem:[#allocation2 + $0x20] sm:$0xff]
    %v68 = vld [vmem:[#allocation2 + $0x28] sm:$0xff]
    %v69 = vld [vmem:[#allocation2 + $0x30] sm:$0xff]
    %v70 = vld [vmem:[#allocation2 + $0x38] sm:$0xff]
    %v71 = vld [vmem:[#allocation2 + $0x40] sm:$0xff]
    %v72 = vld [vmem:[#allocation2 + $0x48] sm:$0xff]
    %v73 = vld [vmem:[#allocation2 + $0x50] sm:$0xff]
    %v74 = vld [vmem:[#allocation2 + $0x58] sm:$0xff]
    %v75 = vld [vmem:[#allocation2 + $0x60] sm:$0xff]
    %v76 = vld [vmem:[#allocation2 + $0x68] sm:$0xff]
    %v77 = vld [vmem:[#allocation2 + $0x70] sm:$0xff]
    %v78 = vld [vmem:[#allocation2 + $0x78] sm:$0xff]
    %v79 = vld [vmem:[#allocation2 + $0x80] sm:$0xff]
    %v80 = vld [vmem:[#allocation2 + $0x88] sm:$0xff]
    %v81 = vld [vmem:[#allocation2 + $0x90] sm:$0xff]
    %v82 = vld [vmem:[#allocation2 + $0x98] sm:$0xff]
    %v83 = vld [vmem:[#allocation2 + $0xa0] sm:$0xff]
    %v84 = vld [vmem:[#allocation2 + $0xa8] sm:$0xff]
    %v85 = vld [vmem:[#allocation2 + $0xb0] sm:$0xff]
    %v86 = vld [vmem:[#allocation2 + $0xb8] sm:$0xff]
    %v87 = vld [vmem:[#allocation2 + $0xc0] sm:$0xff]
    %v88 = vld [vmem:[#allocation2 + $0xc8] sm:$0xff]
    %v89 = vld [vmem:[#allocation2 + $0xd0] sm:$0xff]
    %v90 = vld [vmem:[#allocation2 + $0xd8] sm:$0xff]
    %v91 = vld [vmem:[#allocation2 + $0xe0] sm:$0xff]
    %v92 = vld [vmem:[#allocation2 + $0xe8] sm:$0xff]
    %v93 = vld [vmem:[#allocation2 + $0xf0] sm:$0xff]
    %v94 = vld [vmem:[#allocation2 + $0xf8] sm:$0xff]
    %v95 = vld [vmem:[#allocation2 + $0x100] sm:$0xff]
    %v96 = vld [vmem:[#allocation2 + $0x108] sm:$0xff]
    %v97 = vld [vmem:[#allocation2 + $0x110] sm:$0xff]
    %v98 = vld [vmem:[#allocation2 + $0x118] sm:$0xff]
    %v99 = vld [vmem:[#allocation2 + $0x120] sm:$0xff]
    %v100 = vld [vmem:[#allocation2 + $0x128] sm:$0xff]
    %v101 = vld [vmem:[#allocation2 + $0x130] sm:$0xff]
    %v102 = vld [vmem:[#allocation2 + $0x138] sm:$0xff]
    %v103 = vld [vmem:[#allocation2 + $0x140] sm:$0xff]
    %v104 = vld [vmem:[#allocation2 + $0x148] sm:$0xff]
    %v105 = vld [vmem:[#allocation2 + $0x150] sm:$0xff]
    %v106 = vld [vmem:[#allocation2 + $0x158] sm:$0xff]
    %v107 = vld [vmem:[#allocation2 + $0x160] sm:$0xff]
    %v108 = vld [vmem:[#allocation2 + $0x168] sm:$0xff]
    %v109 = vld [vmem:[#allocation2 + $0x170] sm:$0xff]
    %v110 = vld [vmem:[#allocation2 + $0x178] sm:$0xff]
    %v111 = vld [vmem:[#allocation2 + $0x180] sm:$0xff]
    %v112 = vld [vmem:[#allocation2 + $0x188] sm:$0xff]
    %v113 = vld [vmem:[#allocation2 + $0x190] sm:$0xff]
    %v114 = vld [vmem:[#allocation2 + $0x198] sm:$0xff]
    %v115 = vld [vmem:[#allocation2 + $0x1a0] sm:$0xff]
    %v116 = vld [vmem:[#allocation2 + $0x1a8] sm:$0xff]
    %v117 = vld [vmem:[#allocation2 + $0x1b0] sm:$0xff]
    %v118 = vld [vmem:[#allocation2 + $0x1b8] sm:$0xff]
    %v119 = vld [vmem:[#allocation2 + $0x1c0] sm:$0xff]
    %v120 = vld [vmem:[#allocation2 + $0x1c8] sm:$0xff]
    %v121 = vld [vmem:[#allocation2 + $0x1d0] sm:$0xff]
    %v122 = vld [vmem:[#allocation2 + $0x1d8] sm:$0xff]
    %v123 = vld [vmem:[#allocation2 + $0x1e0] sm:$0xff]
    %v124 = vld [vmem:[#allocation2 + $0x1e8] sm:$0xff]
    %v125 = vld [vmem:[#allocation2 + $0x1f0] sm:$0xff]
    %v126 = vld [vmem:[#allocation2 + $0x1f8] sm:$0xff]
    %v127 = vld [vmem:[#allocation2 + $0x200] sm:$0xff]
    %v128 = vld [vmem:[#allocation2 + $0x208] sm:$0xff]
    %v129 = vld [vmem:[#allocation2 + $0x210] sm:$0xff]
    %v130 = vld [vmem:[#allocation2 + $0x218] sm:$0xff]
    %v131 = vld [vmem:[#allocation2 + $0x220] sm:$0xff]
    %v132 = vld [vmem:[#allocation2 + $0x228] sm:$0xff]
    %v133 = vld [vmem:[#allocation2 + $0x230] sm:$0xff]
    %v134 = vld [vmem:[#allocation2 + $0x238] sm:$0xff]
    %v135 = vld [vmem:[#allocation2 + $0x240] sm:$0xff]
    %v136 = vld [vmem:[#allocation2 + $0x248] sm:$0xff]
    %v137 = vld [vmem:[#allocation2 + $0x250] sm:$0xff]
    %v138 = vld [vmem:[#allocation2 + $0x258] sm:$0xff]
    %v139 = vld [vmem:[#allocation2 + $0x260] sm:$0xff]
    %v140 = vld [vmem:[#allocation2 + $0x268] sm:$0xff]
    %v141 = vld [vmem:[#allocation2 + $0x270] sm:$0xff]
    %v142 = vld [vmem:[#allocation2 + $0x278] sm:$0xff]
    %v143 = vld [vmem:[#allocation2 + $0x280] sm:$0xff]
    %v144 = vld [vmem:[#allocation2 + $0x288] sm:$0xff]
    %v145 = vld [vmem:[#allocation2 + $0x290] sm:$0xff]
    %v146 = vld [vmem:[#allocation2 + $0x298] sm:$0xff]
    %v147 = vld [vmem:[#allocation2 + $0x2a0] sm:$0xff]
    %v148 = vld [vmem:[#allocation2 + $0x2a8] sm:$0xff]
    %v149 = vld [vmem:[#allocation2 + $0x2b0] sm:$0xff]
    %v150 = vld [vmem:[#allocation2 + $0x2b8] sm:$0xff]
    %v151 = vld [vmem:[#allocation2 + $0x2c0] sm:$0xff]
    %v152 = vld [vmem:[#allocation2 + $0x2c8] sm:$0xff]
    %v153 = vld [vmem:[#allocation2 + $0x2d0] sm:$0xff]
    %v154 = vld [vmem:[#allocation2 + $0x2d8] sm:$0xff]
    %v155 = vld [vmem:[#allocation2 + $0x2e0] sm:$0xff]
    %v156 = vld [vmem:[#allocation2 + $0x2e8] sm:$0xff]
    %v157 = vld [vmem:[#allocation2 + $0x2f0] sm:$0xff]
    %v158 = vld [vmem:[#allocation2 + $0x2f8] sm:$0xff]
    %v159 = vld [vmem:[#allocation2 + $0x300] sm:$0xff]
    %v160 = vld [vmem:[#allocation2 + $0x308] sm:$0xff]
    %v161 = vld [vmem:[#allocation2 + $0x310] sm:$0xff]
    %v162 = vld [vmem:[#allocation2 + $0x318] sm:$0xff]
    %v163 = vld [vmem:[#allocation2 + $0x320] sm:$0xff]
    %v164 = vld [vmem:[#allocation2 + $0x328] sm:$0xff]
    %v165 = vld [vmem:[#allocation2 + $0x330] sm:$0xff]
    %v166 = vld [vmem:[#allocation2 + $0x338] sm:$0xff]
    %v167 = vld [vmem:[#allocation2 + $0x340] sm:$0xff]
    %v168 = vld [vmem:[#allocation2 + $0x348] sm:$0xff]
    %v169 = vld [vmem:[#allocation2 + $0x350] sm:$0xff]
    %v170 = vld [vmem:[#allocation2 + $0x358] sm:$0xff]
    %v171 = vld [vmem:[#allocation2 + $0x360] sm:$0xff]
    %v172 = vld [vmem:[#allocation2 + $0x368] sm:$0xff]
    %v173 = vld [vmem:[#allocation2 + $0x370] sm:$0xff]
    %v174 = vld [vmem:[#allocation2 + $0x378] sm:$0xff]
    %v175 = vld [vmem:[#allocation2 + $0x380] sm:$0xff]
    %v176 = vld [vmem:[#allocation2 + $0x388] sm:$0xff]
    %v177 = vld [vmem:[#allocation2 + $0x390] sm:$0xff]
    %v178 = vld [vmem:[#allocation2 + $0x398] sm:$0xff]
    %v179 = vld [vmem:[#allocation2 + $0x3a0] sm:$0xff]
    %v180 = vld [vmem:[#allocation2 + $0x3a8] sm:$0xff]
    %v181 = vld [vmem:[#allocation2 + $0x3b0] sm:$0xff]
    %v182 = vld [vmem:[#allocation2 + $0x3b8] sm:$0xff]
    %v183 = vld [vmem:[#allocation2 + $0x3c0] sm:$0xff]
    %v184 = vld [vmem:[#allocation2 + $0x3c8] sm:$0xff]
    %v185 = vld [vmem:[#allocation2 + $0x3d0] sm:$0xff]
    %v186 = vld [vmem:[#allocation2 + $0x3d8] sm:$0xff]
    %v187 = vld [vmem:[#allocation2 + $0x3e0] sm:$0xff]
    %v188 = vld [vmem:[#allocation2 + $0x3e8] sm:$0xff]
    %v189 = vld [vmem:[#allocation2 + $0x3f0] sm:$0xff]
    %v190 = vld [vmem:[#allocation2 + $0x3f8] sm:$0xff]
    %v191 = vld [vmem:[#allocation2 + $0x400] sm:$0xff]
    %v192 = vld [vmem:[#allocation2 + $0x408] sm:$0xff]
    %v193 = vld [vmem:[#allocation2 + $0x410] sm:$0xff]
    %v194 = vld [vmem:[#allocation2 + $0x418] sm:$0xff]
    %v195 = vld [vmem:[#allocation2 + $0x420] sm:$0xff]
    %v196 = vld [vmem:[#allocation2 + $0x428] sm:$0xff]
    %v197 = vld [vmem:[#allocation2 + $0x430] sm:$0xff]
    %v198 = vld [vmem:[#allocation2 + $0x438] sm:$0xff]
    %v199 = vld [vmem:[#allocation2 + $0x440] sm:$0xff]
    %v200 = vld [vmem:[#allocation2 + $0x448] sm:$0xff]
    %v201 = vld [vmem:[#allocation2 + $0x450] sm:$0xff]
    %v202 = vld [vmem:[#allocation2 + $0x458] sm:$0xff]
    %v203 = vld [vmem:[#allocation2 + $0x460] sm:$0xff]
    %v204 = vld [vmem:[#allocation2 + $0x468] sm:$0xff]
    %v205 = vld [vmem:[#allocation2 + $0x470] sm:$0xff]
    %v206 = vld [vmem:[#allocation2 + $0x478] sm:$0xff]
    %v207 = vld [vmem:[#allocation2 + $0x480] sm:$0xff]
    %v208 = vld [vmem:[#allocation2 + $0x488] sm:$0xff]
    %v209 = vld [vmem:[#allocation2 + $0x490] sm:$0xff]
    %v210 = vld [vmem:[#allocation2 + $0x498] sm:$0xff]
    %v211 = vld [vmem:[#allocation2 + $0x4a0] sm:$0xff]
    %v212 = vld [vmem:[#allocation2 + $0x4a8] sm:$0xff]
    %v213 = vld [vmem:[#allocation2 + $0x4b0] sm:$0xff]
    %v214 = vld [vmem:[#allocation2 + $0x4b8] sm:$0xff]
    %v215 = vld [vmem:[#allocation2 + $0x4c0] sm:$0xff]
    %v216 = vld [vmem:[#allocation2 + $0x4c8] sm:$0xff]
    %v217 = vld [vmem:[#allocation2 + $0x4d0] sm:$0xff]
    %v218 = vld [vmem:[#allocation2 + $0x4d8] sm:$0xff]
    %v219 = vld [vmem:[#allocation2 + $0x4e0] sm:$0xff]
    %v220 = vld [vmem:[#allocation2 + $0x4e8] sm:$0xff]
    %v221 = vld [vmem:[#allocation2 + $0x4f0] sm:$0xff]
    %v222 = vld [vmem:[#allocation2 + $0x4f8] sm:$0xff]
    %v223 = vld [vmem:[#allocation2 + $0x500] sm:$0xff]
    %v224 = vld [vmem:[#allocation2 + $0x508] sm:$0xff]
    %v225 = vld [vmem:[#allocation2 + $0x510] sm:$0xff]
    %v226 = vld [vmem:[#allocation2 + $0x518] sm:$0xff]
    %v227 = vld [vmem:[#allocation2 + $0x520] sm:$0xff]
    %v228 = vld [vmem:[#allocation2 + $0x528] sm:$0xff]
    %v229 = vld [vmem:[#allocation2 + $0x530] sm:$0xff]
    %v230 = vld [vmem:[#allocation2 + $0x538] sm:$0xff]
    %v231 = vld [vmem:[#allocation2 + $0x540] sm:$0xff]
    %v232 = vld [vmem:[#allocation2 + $0x548] sm:$0xff]
    %v233 = vld [vmem:[#allocation2 + $0x550] sm:$0xff]
    %v234 = vld [vmem:[#allocation2 + $0x558] sm:$0xff]
    %v235 = vld [vmem:[#allocation2 + $0x560] sm:$0xff]
    %v236 = vld [vmem:[#allocation2 + $0x568] sm:$0xff]
    %v237 = vld [vmem:[#allocation2 + $0x570] sm:$0xff]
    %v238 = vld [vmem:[#allocation2 + $0x578] sm:$0xff]
    %v239 = vld [vmem:[#allocation2 + $0x580] sm:$0xff]
    %v240 = vld [vmem:[#allocation2 + $0x588] sm:$0xff]
    %v241 = vld [vmem:[#allocation2 + $0x590] sm:$0xff]
    %v242 = vld [vmem:[#allocation2 + $0x598] sm:$0xff]
    %v243 = vld [vmem:[#allocation2 + $0x5a0] sm:$0xff]
    %v244 = vld [vmem:[#allocation2 + $0x5a8] sm:$0xff]
    %v245 = vld [vmem:[#allocation2 + $0x5b0] sm:$0xff]
    %v246 = vld [vmem:[#allocation2 + $0x5b8] sm:$0xff]
    %v247 = vld [vmem:[#allocation2 + $0x5c0] sm:$0xff]
    %v248 = vld [vmem:[#allocation2 + $0x5c8] sm:$0xff]
    %v249 = vld [vmem:[#allocation2 + $0x5d0] sm:$0xff]
    %v250 = vld [vmem:[#allocation2 + $0x5d8] sm:$0xff]
    %v251 = vld [vmem:[#allocation2 + $0x5e0] sm:$0xff]
    %v252 = vld [vmem:[#allocation2 + $0x5e8] sm:$0xff]
    %v253 = vld [vmem:[#allocation2 + $0x5f0] sm:$0xff]
    %v254 = vld [vmem:[#allocation2 + $0x5f8] sm:$0xff]
    %v255 = vld [vmem:[%s2] sm:$0xff]
    %v257 = vlaneseq
    %v258 = vshrl.u32 %v257, 7
    %v259 = vsub.s32 0, %v258
    %v260 = vrot.slane %v255, %v259
    %v261 = vlaneseq
    %v262 = vshrl.u32 %v261, 7
    %v263 = vsub.s32 1, %v262
    %v264 = vrot.slane %v255, %v263
    %v265 = vlaneseq
    %v266 = vshrl.u32 %v265, 7
    %v267 = vsub.s32 2, %v266
    %v268 = vrot.slane %v255, %v267
    %v269 = vlaneseq
    %v270 = vshrl.u32 %v269, 7
    %v271 = vsub.s32 3, %v270
    %v272 = vrot.slane %v255, %v271
    %v273 = vlaneseq
    %v274 = vshrl.u32 %v273, 7
    %v275 = vsub.s32 4, %v274
    %v276 = vrot.slane %v255, %v275
    %v277 = vlaneseq
    %v278 = vshrl.u32 %v277, 7
    %v279 = vsub.s32 5, %v278
    %v280 = vrot.slane %v255, %v279
    %v281 = vlaneseq
    %v282 = vshrl.u32 %v281, 7
    %v283 = vsub.s32 6, %v282
    %v284 = vrot.slane %v255, %v283
    %v285 = vlaneseq
    %v286 = vshrl.u32 %v285, 7
    %v287 = vsub.s32 7, %v286
    %v288 = vrot.slane %v255, %v287
    %v301 = vunpack.c.l.b16 %v59
    %v302 = vunpack.c.h.b16 %v59
    %v303 = vunpack.c.l.b16 %v60
    %v304 = vunpack.c.l.b16 %v61
    %v305 = vunpack.c.h.b16 %v61
    %v306 = vunpack.c.l.b16 %v62
    %v307 = vpack.c.b16 %v304, %v301
    %v308 = vpack.c.b16 %v305, %v302
    %v309 = vpack.c.b16 %v306, %v303
    %v505 = vunpack.c.l.b16 %v63
    %v506 = vunpack.c.h.b16 %v63
    %v507 = vunpack.c.l.b16 %v64
    %v508 = vunpack.c.h.b16 %v64
    %v509 = vunpack.c.l.b16 %v65
    %v510 = vunpack.c.h.b16 %v65
    %v511 = vunpack.c.l.b16 %v66
    %v512 = vunpack.c.h.b16 %v66
    %v513 = vunpack.c.l.b16 %v67
    %v514 = vunpack.c.h.b16 %v67
    %v515 = vunpack.c.l.b16 %v68
    %v516 = vunpack.c.h.b16 %v68
    %v517 = vunpack.c.l.b16 %v69
    %v518 = vunpack.c.h.b16 %v69
    %v519 = vunpack.c.l.b16 %v70
    %v520 = vunpack.c.h.b16 %v70
    %v521 = vunpack.c.l.b16 %v71
    %v522 = vunpack.c.h.b16 %v71
    %v523 = vunpack.c.l.b16 %v72
    %v524 = vunpack.c.h.b16 %v72
    %v525 = vunpack.c.l.b16 %v73
    %v526 = vunpack.c.h.b16 %v73
    %v527 = vunpack.c.l.b16 %v74
    %v528 = vunpack.c.h.b16 %v74
    %v529 = vunpack.c.l.b16 %v75
    %v530 = vunpack.c.h.b16 %v75
    %v531 = vunpack.c.l.b16 %v76
    %v532 = vunpack.c.h.b16 %v76
    %v533 = vunpack.c.l.b16 %v77
    %v534 = vunpack.c.h.b16 %v77
    %v535 = vunpack.c.l.b16 %v78
    %v536 = vunpack.c.h.b16 %v78
    %v537 = vunpack.c.l.b16 %v79
    %v538 = vunpack.c.h.b16 %v79
    %v539 = vunpack.c.l.b16 %v80
    %v540 = vunpack.c.h.b16 %v80
    %v541 = vunpack.c.l.b16 %v81
    %v542 = vunpack.c.h.b16 %v81
    %v543 = vunpack.c.l.b16 %v82
    %v544 = vunpack.c.h.b16 %v82
    %v545 = vunpack.c.l.b16 %v83
    %v546 = vunpack.c.h.b16 %v83
    %v547 = vunpack.c.l.b16 %v84
    %v548 = vunpack.c.h.b16 %v84
    %v549 = vunpack.c.l.b16 %v85
    %v550 = vunpack.c.h.b16 %v85
    %v551 = vunpack.c.l.b16 %v86
    %v552 = vunpack.c.h.b16 %v86
    %v553 = vunpack.c.l.b16 %v87
    %v554 = vunpack.c.h.b16 %v87
    %v555 = vunpack.c.l.b16 %v88
    %v556 = vunpack.c.h.b16 %v88
    %v557 = vunpack.c.l.b16 %v89
    %v558 = vunpack.c.h.b16 %v89
    %v559 = vunpack.c.l.b16 %v90
    %v560 = vunpack.c.h.b16 %v90
    %v561 = vunpack.c.l.b16 %v91
    %v562 = vunpack.c.h.b16 %v91
    %v563 = vunpack.c.l.b16 %v92
    %v564 = vunpack.c.h.b16 %v92
    %v565 = vunpack.c.l.b16 %v93
    %v566 = vunpack.c.h.b16 %v93
    %v567 = vunpack.c.l.b16 %v94
    %v568 = vunpack.c.h.b16 %v94
    %v569 = vunpack.c.l.b16 %v95
    %v570 = vunpack.c.h.b16 %v95
    %v571 = vunpack.c.l.b16 %v96
    %v572 = vunpack.c.h.b16 %v96
    %v573 = vunpack.c.l.b16 %v97
    %v574 = vunpack.c.h.b16 %v97
    %v575 = vunpack.c.l.b16 %v98
    %v576 = vunpack.c.h.b16 %v98
    %v577 = vunpack.c.l.b16 %v99
    %v578 = vunpack.c.h.b16 %v99
    %v579 = vunpack.c.l.b16 %v100
    %v580 = vunpack.c.h.b16 %v100
    %v581 = vunpack.c.l.b16 %v101
    %v582 = vunpack.c.h.b16 %v101
    %v583 = vunpack.c.l.b16 %v102
    %v584 = vunpack.c.h.b16 %v102
    %v585 = vunpack.c.l.b16 %v103
    %v586 = vunpack.c.h.b16 %v103
    %v587 = vunpack.c.l.b16 %v104
    %v588 = vunpack.c.h.b16 %v104
    %v589 = vunpack.c.l.b16 %v105
    %v590 = vunpack.c.h.b16 %v105
    %v591 = vunpack.c.l.b16 %v106
    %v592 = vunpack.c.h.b16 %v106
    %v593 = vunpack.c.l.b16 %v107
    %v594 = vunpack.c.h.b16 %v107
    %v595 = vunpack.c.l.b16 %v108
    %v596 = vunpack.c.h.b16 %v108
    %v597 = vunpack.c.l.b16 %v109
    %v598 = vunpack.c.h.b16 %v109
    %v599 = vunpack.c.l.b16 %v110
    %v600 = vunpack.c.h.b16 %v110
    %v601 = vunpack.c.l.b16 %v111
    %v602 = vunpack.c.h.b16 %v111
    %v603 = vunpack.c.l.b16 %v112
    %v604 = vunpack.c.h.b16 %v112
    %v605 = vunpack.c.l.b16 %v113
    %v606 = vunpack.c.h.b16 %v113
    %v607 = vunpack.c.l.b16 %v114
    %v608 = vunpack.c.h.b16 %v114
    %v609 = vunpack.c.l.b16 %v115
    %v610 = vunpack.c.h.b16 %v115
    %v611 = vunpack.c.l.b16 %v116
    %v612 = vunpack.c.h.b16 %v116
    %v613 = vunpack.c.l.b16 %v117
    %v614 = vunpack.c.h.b16 %v117
    %v615 = vunpack.c.l.b16 %v118
    %v616 = vunpack.c.h.b16 %v118
    %v617 = vunpack.c.l.b16 %v119
    %v618 = vunpack.c.h.b16 %v119
    %v619 = vunpack.c.l.b16 %v120
    %v620 = vunpack.c.h.b16 %v120
    %v621 = vunpack.c.l.b16 %v121
    %v622 = vunpack.c.h.b16 %v121
    %v623 = vunpack.c.l.b16 %v122
    %v624 = vunpack.c.h.b16 %v122
    %v625 = vunpack.c.l.b16 %v123
    %v626 = vunpack.c.h.b16 %v123
    %v627 = vunpack.c.l.b16 %v124
    %v628 = vunpack.c.h.b16 %v124
    %v629 = vunpack.c.l.b16 %v125
    %v630 = vunpack.c.h.b16 %v125
    %v631 = vunpack.c.l.b16 %v126
    %v632 = vunpack.c.h.b16 %v126
    %v633 = vunpack.c.l.b16 %v127
    %v634 = vunpack.c.h.b16 %v127
    %v635 = vunpack.c.l.b16 %v128
    %v636 = vunpack.c.h.b16 %v128
    %v637 = vunpack.c.l.b16 %v129
    %v638 = vunpack.c.h.b16 %v129
    %v639 = vunpack.c.l.b16 %v130
    %v640 = vunpack.c.h.b16 %v130
    %v641 = vunpack.c.l.b16 %v131
    %v642 = vunpack.c.h.b16 %v131
    %v643 = vunpack.c.l.b16 %v132
    %v644 = vunpack.c.h.b16 %v132
    %v645 = vunpack.c.l.b16 %v133
    %v646 = vunpack.c.h.b16 %v133
    %v647 = vunpack.c.l.b16 %v134
    %v648 = vunpack.c.h.b16 %v134
    %v649 = vunpack.c.l.b16 %v135
    %v650 = vunpack.c.h.b16 %v135
    %v651 = vunpack.c.l.b16 %v136
    %v652 = vunpack.c.h.b16 %v136
    %v653 = vunpack.c.l.b16 %v137
    %v654 = vunpack.c.h.b16 %v137
    %v655 = vunpack.c.l.b16 %v138
    %v656 = vunpack.c.h.b16 %v138
    %v657 = vunpack.c.l.b16 %v139
    %v658 = vunpack.c.h.b16 %v139
    %v659 = vunpack.c.l.b16 %v140
    %v660 = vunpack.c.h.b16 %v140
    %v661 = vunpack.c.l.b16 %v141
    %v662 = vunpack.c.h.b16 %v141
    %v663 = vunpack.c.l.b16 %v142
    %v664 = vunpack.c.h.b16 %v142
    %v665 = vunpack.c.l.b16 %v143
    %v666 = vunpack.c.h.b16 %v143
    %v667 = vunpack.c.l.b16 %v144
    %v668 = vunpack.c.h.b16 %v144
    %v669 = vunpack.c.l.b16 %v145
    %v670 = vunpack.c.h.b16 %v145
    %v671 = vunpack.c.l.b16 %v146
    %v672 = vunpack.c.h.b16 %v146
    %v673 = vunpack.c.l.b16 %v147
    %v674 = vunpack.c.h.b16 %v147
    %v675 = vunpack.c.l.b16 %v148
    %v676 = vunpack.c.h.b16 %v148
    %v677 = vunpack.c.l.b16 %v149
    %v678 = vunpack.c.h.b16 %v149
    %v679 = vunpack.c.l.b16 %v150
    %v680 = vunpack.c.h.b16 %v150
    %v681 = vunpack.c.l.b16 %v151
    %v682 = vunpack.c.h.b16 %v151
    %v683 = vunpack.c.l.b16 %v152
    %v684 = vunpack.c.h.b16 %v152
    %v685 = vunpack.c.l.b16 %v153
    %v686 = vunpack.c.h.b16 %v153
    %v687 = vunpack.c.l.b16 %v154
    %v688 = vunpack.c.h.b16 %v154
    %v689 = vunpack.c.l.b16 %v155
    %v690 = vunpack.c.h.b16 %v155
    %v691 = vunpack.c.l.b16 %v156
    %v692 = vunpack.c.h.b16 %v156
    %v693 = vunpack.c.l.b16 %v157
    %v694 = vunpack.c.h.b16 %v157
    %v695 = vunpack.c.l.b16 %v158
    %v696 = vunpack.c.h.b16 %v158
    %v697 = vunpack.c.l.b16 %v159
    %v698 = vunpack.c.h.b16 %v159
    %v699 = vunpack.c.l.b16 %v160
    %v700 = vunpack.c.h.b16 %v160
    %v701 = vunpack.c.l.b16 %v161
    %v702 = vunpack.c.h.b16 %v161
    %v703 = vunpack.c.l.b16 %v162
    %v704 = vunpack.c.h.b16 %v162
    %v705 = vunpack.c.l.b16 %v163
    %v706 = vunpack.c.h.b16 %v163
    %v707 = vunpack.c.l.b16 %v164
    %v708 = vunpack.c.h.b16 %v164
    %v709 = vunpack.c.l.b16 %v165
    %v710 = vunpack.c.h.b16 %v165
    %v711 = vunpack.c.l.b16 %v166
    %v712 = vunpack.c.h.b16 %v166
    %v713 = vunpack.c.l.b16 %v167
    %v714 = vunpack.c.h.b16 %v167
    %v715 = vunpack.c.l.b16 %v168
    %v716 = vunpack.c.h.b16 %v168
    %v717 = vunpack.c.l.b16 %v169
    %v718 = vunpack.c.h.b16 %v169
    %v719 = vunpack.c.l.b16 %v170
    %v720 = vunpack.c.h.b16 %v170
    %v721 = vunpack.c.l.b16 %v171
    %v722 = vunpack.c.h.b16 %v171
    %v723 = vunpack.c.l.b16 %v172
    %v724 = vunpack.c.h.b16 %v172
    %v725 = vunpack.c.l.b16 %v173
    %v726 = vunpack.c.h.b16 %v173
    %v727 = vunpack.c.l.b16 %v174
    %v728 = vunpack.c.h.b16 %v174
    %v729 = vunpack.c.l.b16 %v175
    %v730 = vunpack.c.h.b16 %v175
    %v731 = vunpack.c.l.b16 %v176
    %v732 = vunpack.c.h.b16 %v176
    %v733 = vunpack.c.l.b16 %v177
    %v734 = vunpack.c.h.b16 %v177
    %v735 = vunpack.c.l.b16 %v178
    %v736 = vunpack.c.h.b16 %v178
    %v737 = vunpack.c.l.b16 %v179
    %v738 = vunpack.c.h.b16 %v179
    %v739 = vunpack.c.l.b16 %v180
    %v740 = vunpack.c.h.b16 %v180
    %v741 = vunpack.c.l.b16 %v181
    %v742 = vunpack.c.h.b16 %v181
    %v743 = vunpack.c.l.b16 %v182
    %v744 = vunpack.c.h.b16 %v182
    %v745 = vunpack.c.l.b16 %v183
    %v746 = vunpack.c.h.b16 %v183
    %v747 = vunpack.c.l.b16 %v184
    %v748 = vunpack.c.h.b16 %v184
    %v749 = vunpack.c.l.b16 %v185
    %v750 = vunpack.c.h.b16 %v185
    %v751 = vunpack.c.l.b16 %v186
    %v752 = vunpack.c.h.b16 %v186
    %v753 = vunpack.c.l.b16 %v187
    %v754 = vunpack.c.h.b16 %v187
    %v755 = vunpack.c.l.b16 %v188
    %v756 = vunpack.c.h.b16 %v188
    %v757 = vunpack.c.l.b16 %v189
    %v758 = vunpack.c.h.b16 %v189
    %v759 = vunpack.c.l.b16 %v190
    %v760 = vunpack.c.h.b16 %v190
    %v761 = vunpack.c.l.b16 %v191
    %v762 = vunpack.c.h.b16 %v191
    %v763 = vunpack.c.l.b16 %v192
    %v764 = vunpack.c.h.b16 %v192
    %v765 = vunpack.c.l.b16 %v193
    %v766 = vunpack.c.h.b16 %v193
    %v767 = vunpack.c.l.b16 %v194
    %v768 = vunpack.c.h.b16 %v194
    %v769 = vunpack.c.l.b16 %v195
    %v770 = vunpack.c.h.b16 %v195
    %v771 = vunpack.c.l.b16 %v196
    %v772 = vunpack.c.h.b16 %v196
    %v773 = vunpack.c.l.b16 %v197
    %v774 = vunpack.c.h.b16 %v197
    %v775 = vunpack.c.l.b16 %v198
    %v776 = vunpack.c.h.b16 %v198
    %v777 = vunpack.c.l.b16 %v199
    %v778 = vunpack.c.h.b16 %v199
    %v779 = vunpack.c.l.b16 %v200
    %v780 = vunpack.c.h.b16 %v200
    %v781 = vunpack.c.l.b16 %v201
    %v782 = vunpack.c.h.b16 %v201
    %v783 = vunpack.c.l.b16 %v202
    %v784 = vunpack.c.h.b16 %v202
    %v785 = vunpack.c.l.b16 %v203
    %v786 = vunpack.c.h.b16 %v203
    %v787 = vunpack.c.l.b16 %v204
    %v788 = vunpack.c.h.b16 %v204
    %v789 = vunpack.c.l.b16 %v205
    %v790 = vunpack.c.h.b16 %v205
    %v791 = vunpack.c.l.b16 %v206
    %v792 = vunpack.c.h.b16 %v206
    %v793 = vunpack.c.l.b16 %v207
    %v794 = vunpack.c.h.b16 %v207
    %v795 = vunpack.c.l.b16 %v208
    %v796 = vunpack.c.h.b16 %v208
    %v797 = vunpack.c.l.b16 %v209
    %v798 = vunpack.c.h.b16 %v209
    %v799 = vunpack.c.l.b16 %v210
    %v800 = vunpack.c.h.b16 %v210
    %v801 = vunpack.c.l.b16 %v211
    %v802 = vunpack.c.h.b16 %v211
    %v803 = vunpack.c.l.b16 %v212
    %v804 = vunpack.c.h.b16 %v212
    %v805 = vunpack.c.l.b16 %v213
    %v806 = vunpack.c.h.b16 %v213
    %v807 = vunpack.c.l.b16 %v214
    %v808 = vunpack.c.h.b16 %v214
    %v809 = vunpack.c.l.b16 %v215
    %v810 = vunpack.c.h.b16 %v215
    %v811 = vunpack.c.l.b16 %v216
    %v812 = vunpack.c.h.b16 %v216
    %v813 = vunpack.c.l.b16 %v217
    %v814 = vunpack.c.h.b16 %v217
    %v815 = vunpack.c.l.b16 %v218
    %v816 = vunpack.c.h.b16 %v218
    %v817 = vunpack.c.l.b16 %v219
    %v818 = vunpack.c.h.b16 %v219
    %v819 = vunpack.c.l.b16 %v220
    %v820 = vunpack.c.h.b16 %v220
    %v821 = vunpack.c.l.b16 %v221
    %v822 = vunpack.c.h.b16 %v221
    %v823 = vunpack.c.l.b16 %v222
    %v824 = vunpack.c.h.b16 %v222
    %v825 = vunpack.c.l.b16 %v223
    %v826 = vunpack.c.h.b16 %v223
    %v827 = vunpack.c.l.b16 %v224
    %v828 = vunpack.c.h.b16 %v224
    %v829 = vunpack.c.l.b16 %v225
    %v830 = vunpack.c.h.b16 %v225
    %v831 = vunpack.c.l.b16 %v226
    %v832 = vunpack.c.h.b16 %v226
    %v833 = vunpack.c.l.b16 %v227
    %v834 = vunpack.c.h.b16 %v227
    %v835 = vunpack.c.l.b16 %v228
    %v836 = vunpack.c.h.b16 %v228
    %v837 = vunpack.c.l.b16 %v229
    %v838 = vunpack.c.h.b16 %v229
    %v839 = vunpack.c.l.b16 %v230
    %v840 = vunpack.c.h.b16 %v230
    %v841 = vunpack.c.l.b16 %v231
    %v842 = vunpack.c.h.b16 %v231
    %v843 = vunpack.c.l.b16 %v232
    %v844 = vunpack.c.h.b16 %v232
    %v845 = vunpack.c.l.b16 %v233
    %v846 = vunpack.c.h.b16 %v233
    %v847 = vunpack.c.l.b16 %v234
    %v848 = vunpack.c.h.b16 %v234
    %v849 = vunpack.c.l.b16 %v235
    %v850 = vunpack.c.h.b16 %v235
    %v851 = vunpack.c.l.b16 %v236
    %v852 = vunpack.c.h.b16 %v236
    %v853 = vunpack.c.l.b16 %v237
    %v854 = vunpack.c.h.b16 %v237
    %v855 = vunpack.c.l.b16 %v238
    %v856 = vunpack.c.h.b16 %v238
    %v857 = vunpack.c.l.b16 %v239
    %v858 = vunpack.c.h.b16 %v239
    %v859 = vunpack.c.l.b16 %v240
    %v860 = vunpack.c.h.b16 %v240
    %v861 = vunpack.c.l.b16 %v241
    %v862 = vunpack.c.h.b16 %v241
    %v863 = vunpack.c.l.b16 %v242
    %v864 = vunpack.c.h.b16 %v242
    %v865 = vunpack.c.l.b16 %v243
    %v866 = vunpack.c.h.b16 %v243
    %v867 = vunpack.c.l.b16 %v244
    %v868 = vunpack.c.h.b16 %v244
    %v869 = vunpack.c.l.b16 %v245
    %v870 = vunpack.c.h.b16 %v245
    %v871 = vunpack.c.l.b16 %v246
    %v872 = vunpack.c.h.b16 %v246
    %v873 = vunpack.c.l.b16 %v247
    %v874 = vunpack.c.h.b16 %v247
    %v875 = vunpack.c.l.b16 %v248
    %v876 = vunpack.c.h.b16 %v248
    %v877 = vunpack.c.l.b16 %v249
    %v878 = vunpack.c.h.b16 %v249
    %v879 = vunpack.c.l.b16 %v250
    %v880 = vunpack.c.h.b16 %v250
    %v881 = vunpack.c.l.b16 %v251
    %v882 = vunpack.c.h.b16 %v251
    %v883 = vunpack.c.l.b16 %v252
    %v884 = vunpack.c.h.b16 %v252
    %v885 = vunpack.c.l.b16 %v253
    %v886 = vunpack.c.h.b16 %v253
    %v887 = vunpack.c.l.b16 %v254
    %v888 = vunpack.c.h.b16 %v254
    %v889 = vpack.c.b16 %v513, %v505
    %v890 = vpack.c.b16 %v514, %v506
    %v891 = vpack.c.b16 %v515, %v507
    %v892 = vpack.c.b16 %v516, %v508
    %v893 = vpack.c.b16 %v517, %v509
    %v894 = vpack.c.b16 %v518, %v510
    %v895 = vpack.c.b16 %v519, %v511
    %v896 = vpack.c.b16 %v520, %v512
    %v897 = vpack.c.b16 %v529, %v521
    %v898 = vpack.c.b16 %v530, %v522
    %v899 = vpack.c.b16 %v531, %v523
    %v900 = vpack.c.b16 %v532, %v524
    %v901 = vpack.c.b16 %v533, %v525
    %v902 = vpack.c.b16 %v534, %v526
    %v903 = vpack.c.b16 %v535, %v527
    %v904 = vpack.c.b16 %v536, %v528
    %v905 = vpack.c.b16 %v545, %v537
    %v906 = vpack.c.b16 %v546, %v538
    %v907 = vpack.c.b16 %v547, %v539
    %v908 = vpack.c.b16 %v548, %v540
    %v909 = vpack.c.b16 %v549, %v541
    %v910 = vpack.c.b16 %v550, %v542
    %v911 = vpack.c.b16 %v551, %v543
    %v912 = vpack.c.b16 %v552, %v544
    %v913 = vpack.c.b16 %v561, %v553
    %v914 = vpack.c.b16 %v562, %v554
    %v915 = vpack.c.b16 %v563, %v555
    %v916 = vpack.c.b16 %v564, %v556
    %v917 = vpack.c.b16 %v565, %v557
    %v918 = vpack.c.b16 %v566, %v558
    %v919 = vpack.c.b16 %v567, %v559
    %v920 = vpack.c.b16 %v568, %v560
    %v921 = vpack.c.b16 %v577, %v569
    %v922 = vpack.c.b16 %v578, %v570
    %v923 = vpack.c.b16 %v579, %v571
    %v924 = vpack.c.b16 %v580, %v572
    %v925 = vpack.c.b16 %v581, %v573
    %v926 = vpack.c.b16 %v582, %v574
    %v927 = vpack.c.b16 %v583, %v575
    %v928 = vpack.c.b16 %v584, %v576
    %v929 = vpack.c.b16 %v593, %v585
    %v930 = vpack.c.b16 %v594, %v586
    %v931 = vpack.c.b16 %v595, %v587
    %v932 = vpack.c.b16 %v596, %v588
    %v933 = vpack.c.b16 %v597, %v589
    %v934 = vpack.c.b16 %v598, %v590
    %v935 = vpack.c.b16 %v599, %v591
    %v936 = vpack.c.b16 %v600, %v592
    %v937 = vpack.c.b16 %v609, %v601
    %v938 = vpack.c.b16 %v610, %v602
    %v939 = vpack.c.b16 %v611, %v603
    %v940 = vpack.c.b16 %v612, %v604
    %v941 = vpack.c.b16 %v613, %v605
    %v942 = vpack.c.b16 %v614, %v606
    %v943 = vpack.c.b16 %v615, %v607
    %v944 = vpack.c.b16 %v616, %v608
    %v945 = vpack.c.b16 %v625, %v617
    %v946 = vpack.c.b16 %v626, %v618
    %v947 = vpack.c.b16 %v627, %v619
    %v948 = vpack.c.b16 %v628, %v620
    %v949 = vpack.c.b16 %v629, %v621
    %v950 = vpack.c.b16 %v630, %v622
    %v951 = vpack.c.b16 %v631, %v623
    %v952 = vpack.c.b16 %v632, %v624
    %v953 = vpack.c.b16 %v641, %v633
    %v954 = vpack.c.b16 %v642, %v634
    %v955 = vpack.c.b16 %v643, %v635
    %v956 = vpack.c.b16 %v644, %v636
    %v957 = vpack.c.b16 %v645, %v637
    %v958 = vpack.c.b16 %v646, %v638
    %v959 = vpack.c.b16 %v647, %v639
    %v960 = vpack.c.b16 %v648, %v640
    %v961 = vpack.c.b16 %v657, %v649
    %v962 = vpack.c.b16 %v658, %v650
    %v963 = vpack.c.b16 %v659, %v651
    %v964 = vpack.c.b16 %v660, %v652
    %v965 = vpack.c.b16 %v661, %v653
    %v966 = vpack.c.b16 %v662, %v654
    %v967 = vpack.c.b16 %v663, %v655
    %v968 = vpack.c.b16 %v664, %v656
    %v969 = vpack.c.b16 %v673, %v665
    %v970 = vpack.c.b16 %v674, %v666
    %v971 = vpack.c.b16 %v675, %v667
    %v972 = vpack.c.b16 %v676, %v668
    %v973 = vpack.c.b16 %v677, %v669
    %v974 = vpack.c.b16 %v678, %v670
    %v975 = vpack.c.b16 %v679, %v671
    %v976 = vpack.c.b16 %v680, %v672
    %v977 = vpack.c.b16 %v689, %v681
    %v978 = vpack.c.b16 %v690, %v682
    %v979 = vpack.c.b16 %v691, %v683
    %v980 = vpack.c.b16 %v692, %v684
    %v981 = vpack.c.b16 %v693, %v685
    %v982 = vpack.c.b16 %v694, %v686
    %v983 = vpack.c.b16 %v695, %v687
    %v984 = vpack.c.b16 %v696, %v688
    %v985 = vpack.c.b16 %v705, %v697
    %v986 = vpack.c.b16 %v706, %v698
    %v987 = vpack.c.b16 %v707, %v699
    %v988 = vpack.c.b16 %v708, %v700
    %v989 = vpack.c.b16 %v709, %v701
    %v990 = vpack.c.b16 %v710, %v702
    %v991 = vpack.c.b16 %v711, %v703
    %v992 = vpack.c.b16 %v712, %v704
    %v993 = vpack.c.b16 %v721, %v713
    %v994 = vpack.c.b16 %v722, %v714
    %v995 = vpack.c.b16 %v723, %v715
    %v996 = vpack.c.b16 %v724, %v716
    %v997 = vpack.c.b16 %v725, %v717
    %v998 = vpack.c.b16 %v726, %v718
    %v999 = vpack.c.b16 %v727, %v719
    %v1000 = vpack.c.b16 %v728, %v720
    %v1001 = vpack.c.b16 %v737, %v729
    %v1002 = vpack.c.b16 %v738, %v730
    %v1003 = vpack.c.b16 %v739, %v731
    %v1004 = vpack.c.b16 %v740, %v732
    %v1005 = vpack.c.b16 %v741, %v733
    %v1006 = vpack.c.b16 %v742, %v734
    %v1007 = vpack.c.b16 %v743, %v735
    %v1008 = vpack.c.b16 %v744, %v736
    %v1009 = vpack.c.b16 %v753, %v745
    %v1010 = vpack.c.b16 %v754, %v746
    %v1011 = vpack.c.b16 %v755, %v747
    %v1012 = vpack.c.b16 %v756, %v748
    %v1013 = vpack.c.b16 %v757, %v749
    %v1014 = vpack.c.b16 %v758, %v750
    %v1015 = vpack.c.b16 %v759, %v751
    %v1016 = vpack.c.b16 %v760, %v752
    %v1017 = vpack.c.b16 %v769, %v761
    %v1018 = vpack.c.b16 %v770, %v762
    %v1019 = vpack.c.b16 %v771, %v763
    %v1020 = vpack.c.b16 %v772, %v764
    %v1021 = vpack.c.b16 %v773, %v765
    %v1022 = vpack.c.b16 %v774, %v766
    %v1023 = vpack.c.b16 %v775, %v767
    %v1024 = vpack.c.b16 %v776, %v768
    %v1025 = vpack.c.b16 %v785, %v777
    %v1026 = vpack.c.b16 %v786, %v778
    %v1027 = vpack.c.b16 %v787, %v779
    %v1028 = vpack.c.b16 %v788, %v780
    %v1029 = vpack.c.b16 %v789, %v781
    %v1030 = vpack.c.b16 %v790, %v782
    %v1031 = vpack.c.b16 %v791, %v783
    %v1032 = vpack.c.b16 %v792, %v784
    %v1033 = vpack.c.b16 %v801, %v793
    %v1034 = vpack.c.b16 %v802, %v794
    %v1035 = vpack.c.b16 %v803, %v795
    %v1036 = vpack.c.b16 %v804, %v796
    %v1037 = vpack.c.b16 %v805, %v797
    %v1038 = vpack.c.b16 %v806, %v798
    %v1039 = vpack.c.b16 %v807, %v799
    %v1040 = vpack.c.b16 %v808, %v800
    %v1041 = vpack.c.b16 %v817, %v809
    %v1042 = vpack.c.b16 %v818, %v810
    %v1043 = vpack.c.b16 %v819, %v811
    %v1044 = vpack.c.b16 %v820, %v812
    %v1045 = vpack.c.b16 %v821, %v813
    %v1046 = vpack.c.b16 %v822, %v814
    %v1047 = vpack.c.b16 %v823, %v815
    %v1048 = vpack.c.b16 %v824, %v816
    %v1049 = vpack.c.b16 %v833, %v825
    %v1050 = vpack.c.b16 %v834, %v826
    %v1051 = vpack.c.b16 %v835, %v827
    %v1052 = vpack.c.b16 %v836, %v828
    %v1053 = vpack.c.b16 %v837, %v829
    %v1054 = vpack.c.b16 %v838, %v830
    %v1055 = vpack.c.b16 %v839, %v831
    %v1056 = vpack.c.b16 %v840, %v832
    %v1057 = vpack.c.b16 %v849, %v841
    %v1058 = vpack.c.b16 %v850, %v842
    %v1059 = vpack.c.b16 %v851, %v843
    %v1060 = vpack.c.b16 %v852, %v844
    %v1061 = vpack.c.b16 %v853, %v845
    %v1062 = vpack.c.b16 %v854, %v846
    %v1063 = vpack.c.b16 %v855, %v847
    %v1064 = vpack.c.b16 %v856, %v848
    %v1065 = vpack.c.b16 %v865, %v857
    %v1066 = vpack.c.b16 %v866, %v858
    %v1067 = vpack.c.b16 %v867, %v859
    %v1068 = vpack.c.b16 %v868, %v860
    %v1069 = vpack.c.b16 %v869, %v861
    %v1070 = vpack.c.b16 %v870, %v862
    %v1071 = vpack.c.b16 %v871, %v863
    %v1072 = vpack.c.b16 %v872, %v864
    %v1073 = vpack.c.b16 %v881, %v873
    %v1074 = vpack.c.b16 %v882, %v874
    %v1075 = vpack.c.b16 %v883, %v875
    %v1076 = vpack.c.b16 %v884, %v876
    %v1077 = vpack.c.b16 %v885, %v877
    %v1078 = vpack.c.b16 %v886, %v878
    %v1079 = vpack.c.b16 %v887, %v879
    %v1080 = vpack.c.b16 %v888, %v880
    %1273 = vmatprep.subr.bf16.mxu0 %v946
    %1274 = vmatpush1.bf16.msra.mxu0 %v945
    %1275 = vmatprep.subr.bf16.mxu0 %v938
    %1276 = vmatpush1.bf16.msra.mxu0 %v937
    %1277 = vmatprep.subr.bf16.mxu0 %v930
    %1278 = vmatpush1.bf16.msra.mxu0 %v929
    %1279 = vmatprep.subr.bf16.mxu0 %v922
    %1280 = vmatpush1.bf16.msra.mxu0 %v921
    %1281 = vmatprep.subr.bf16.mxu0 %v914
    %1282 = vmatpush1.bf16.msra.mxu0 %v913
    %1283 = vmatprep.subr.bf16.mxu0 %v906
    %1284 = vmatpush1.bf16.msra.mxu0 %v905
    %1285 = vmatprep.subr.bf16.mxu0 %v898
    %1286 = vmatpush1.bf16.msra.mxu0 %v897
    %1287 = vmatprep.subr.bf16.mxu0 %v890
    %1288 = vmatpush1.bf16.msra.mxu0 %v889
    %1289 = vmatprep.subr.bf16.mxu0 %v1010
    %1290 = vmatpush2.bf16.msra.mxu0 %v1009
    %1291 = vmatprep.subr.bf16.mxu0 %v1002
    %1292 = vmatpush2.bf16.msra.mxu0 %v1001
    %1293 = vmatprep.subr.bf16.mxu0 %v994
    %1294 = vmatpush2.bf16.msra.mxu0 %v993
    %1295 = vmatprep.subr.bf16.mxu0 %v986
    %1296 = vmatpush2.bf16.msra.mxu0 %v985
    %1297 = vmatprep.subr.bf16.mxu0 %v978
    %1298 = vmatpush2.bf16.msra.mxu0 %v977
    %1299 = vmatprep.subr.bf16.mxu0 %v970
    %1300 = vmatpush2.bf16.msra.mxu0 %v969
    %1301 = vmatprep.subr.bf16.mxu0 %v962
    %1302 = vmatpush2.bf16.msra.mxu0 %v961
    %1303 = vmatprep.subr.bf16.mxu0 %v954
    %1304 = vmatpush2.bf16.msra.mxu0 %v953
    %1305 = vmatprep.mubr.bf16.mxu0 %v308
    %1306 = vmatmul.mubr.bf16.gmra.mxu0 %v307
    %v1307 = vpop.f32.mrf.mxu0
    %v1308 = vadd.f32 %v260, %v1307
    %v1309 = vpop.f32.mrf.mxu0
    %v1310 = vadd.f32 %v264, %v1309
    %v1311 = vpop.f32.mrf.mxu0
    %v1312 = vadd.f32 %v260, %v1311
    %v1313 = vpop.f32.mrf.mxu0
    %v1314 = vadd.f32 %v264, %v1313
    %1315 = vdwg.mxu0
    %1316 = vmatprep.subr.bf16.mxu0 %v1074
    %1317 = vmatpush1.bf16.msra.mxu0 %v1073
    %1318 = vmatprep.subr.bf16.mxu0 %v1066
    %1319 = vmatpush1.bf16.msra.mxu0 %v1065
    %1320 = vmatprep.subr.bf16.mxu0 %v1058
    %1321 = vmatpush1.bf16.msra.mxu0 %v1057
    %1322 = vmatprep.subr.bf16.mxu0 %v1050
    %1323 = vmatpush1.bf16.msra.mxu0 %v1049
    %1324 = vmatprep.subr.bf16.mxu0 %v1042
    %1325 = vmatpush1.bf16.msra.mxu0 %v1041
    %1326 = vmatprep.subr.bf16.mxu0 %v1034
    %1327 = vmatpush1.bf16.msra.mxu0 %v1033
    %1328 = vmatprep.subr.bf16.mxu0 %v1026
    %1329 = vmatpush1.bf16.msra.mxu0 %v1025
    %1330 = vmatprep.subr.bf16.mxu0 %v1018
    %1331 = vmatpush1.bf16.msra.mxu0 %v1017
    %1332 = vmatprep.subr.bf16.mxu0 0
    %1333 = vmatpush2.bf16.msra.mxu0 0
    %1334 = vmatprep.subr.bf16.mxu0 0
    %1335 = vmatpush2.bf16.msra.mxu0 0
    %1336 = vmatprep.subr.bf16.mxu0 0
    %1337 = vmatpush2.bf16.msra.mxu0 0
    %1338 = vmatprep.subr.bf16.mxu0 0
    %1339 = vmatpush2.bf16.msra.mxu0 0
    %1340 = vmatprep.subr.bf16.mxu0 0
    %1341 = vmatpush2.bf16.msra.mxu0 0
    %1342 = vmatprep.subr.bf16.mxu0 0
    %1343 = vmatpush2.bf16.msra.mxu0 0
    %1344 = vmatprep.subr.bf16.mxu0 0
    %1345 = vmatpush2.bf16.msra.mxu0 0
    %1346 = vmatprep.subr.bf16.mxu0 0
    %1347 = vmatpush2.bf16.msra.mxu0 0
    %1348 = vmatprep.mubr.bf16.mxu0 0
    %1349 = vmatmul.mubr.bf16.gmra.mxu0 %v309
    %v1350 = vpop.f32.mrf.mxu0
    %v1351 = vadd.f32 %v1308, %v1350
    %v1352 = vpop.f32.mrf.mxu0
    %v1353 = vadd.f32 %v1310, %v1352
    %v1354 = vpop.f32.mrf.mxu0
    %v1355 = vadd.f32 %v1312, %v1354
    %v1356 = vpop.f32.mrf.mxu0
    %v1357 = vadd.f32 %v1314, %v1356
    %1358 = vdwg.mxu0
    %1359 = vmatprep.subr.bf16.mxu0 %v948
    %1360 = vmatpush1.bf16.msra.mxu0 %v947
    %1361 = vmatprep.subr.bf16.mxu0 %v940
    %1362 = vmatpush1.bf16.msra.mxu0 %v939
    %1363 = vmatprep.subr.bf16.mxu0 %v932
    %1364 = vmatpush1.bf16.msra.mxu0 %v931
    %1365 = vmatprep.subr.bf16.mxu0 %v924
    %1366 = vmatpush1.bf16.msra.mxu0 %v923
    %1367 = vmatprep.subr.bf16.mxu0 %v916
    %1368 = vmatpush1.bf16.msra.mxu0 %v915
    %1369 = vmatprep.subr.bf16.mxu0 %v908
    %1370 = vmatpush1.bf16.msra.mxu0 %v907
    %1371 = vmatprep.subr.bf16.mxu0 %v900
    %1372 = vmatpush1.bf16.msra.mxu0 %v899
    %1373 = vmatprep.subr.bf16.mxu0 %v892
    %1374 = vmatpush1.bf16.msra.mxu0 %v891
    %1375 = vmatprep.subr.bf16.mxu0 %v1012
    %1376 = vmatpush2.bf16.msra.mxu0 %v1011
    %1377 = vmatprep.subr.bf16.mxu0 %v1004
    %1378 = vmatpush2.bf16.msra.mxu0 %v1003
    %1379 = vmatprep.subr.bf16.mxu0 %v996
    %1380 = vmatpush2.bf16.msra.mxu0 %v995
    %1381 = vmatprep.subr.bf16.mxu0 %v988
    %1382 = vmatpush2.bf16.msra.mxu0 %v987
    %1383 = vmatprep.subr.bf16.mxu0 %v980
    %1384 = vmatpush2.bf16.msra.mxu0 %v979
    %1385 = vmatprep.subr.bf16.mxu0 %v972
    %1386 = vmatpush2.bf16.msra.mxu0 %v971
    %1387 = vmatprep.subr.bf16.mxu0 %v964
    %1388 = vmatpush2.bf16.msra.mxu0 %v963
    %1389 = vmatprep.subr.bf16.mxu0 %v956
    %1390 = vmatpush2.bf16.msra.mxu0 %v955
    %1391 = vmatprep.mubr.bf16.mxu0 %v308
    %1392 = vmatmul.mubr.bf16.gmra.mxu0 %v307
    %v1393 = vpop.f32.mrf.mxu0
    %v1394 = vadd.f32 %v268, %v1393
    %v1395 = vpop.f32.mrf.mxu0
    %v1396 = vadd.f32 %v272, %v1395
    %v1397 = vpop.f32.mrf.mxu0
    %v1398 = vadd.f32 %v268, %v1397
    %v1399 = vpop.f32.mrf.mxu0
    %v1400 = vadd.f32 %v272, %v1399
    %1401 = vdwg.mxu0
    %1402 = vmatprep.subr.bf16.mxu0 %v1076
    %1403 = vmatpush1.bf16.msra.mxu0 %v1075
    %1404 = vmatprep.subr.bf16.mxu0 %v1068
    %1405 = vmatpush1.bf16.msra.mxu0 %v1067
    %1406 = vmatprep.subr.bf16.mxu0 %v1060
    %1407 = vmatpush1.bf16.msra.mxu0 %v1059
    %1408 = vmatprep.subr.bf16.mxu0 %v1052
    %1409 = vmatpush1.bf16.msra.mxu0 %v1051
    %1410 = vmatprep.subr.bf16.mxu0 %v1044
    %1411 = vmatpush1.bf16.msra.mxu0 %v1043
    %1412 = vmatprep.subr.bf16.mxu0 %v1036
    %1413 = vmatpush1.bf16.msra.mxu0 %v1035
    %1414 = vmatprep.subr.bf16.mxu0 %v1028
    %1415 = vmatpush1.bf16.msra.mxu0 %v1027
    %1416 = vmatprep.subr.bf16.mxu0 %v1020
    %1417 = vmatpush1.bf16.msra.mxu0 %v1019
    %1418 = vmatprep.subr.bf16.mxu0 0
    %1419 = vmatpush2.bf16.msra.mxu0 0
    %1420 = vmatprep.subr.bf16.mxu0 0
    %1421 = vmatpush2.bf16.msra.mxu0 0
    %1422 = vmatprep.subr.bf16.mxu0 0
    %1423 = vmatpush2.bf16.msra.mxu0 0
    %1424 = vmatprep.subr.bf16.mxu0 0
    %1425 = vmatpush2.bf16.msra.mxu0 0
    %1426 = vmatprep.subr.bf16.mxu0 0
    %1427 = vmatpush2.bf16.msra.mxu0 0
    %1428 = vmatprep.subr.bf16.mxu0 0
    %1429 = vmatpush2.bf16.msra.mxu0 0
    %1430 = vmatprep.subr.bf16.mxu0 0
    %1431 = vmatpush2.bf16.msra.mxu0 0
    %1432 = vmatprep.subr.bf16.mxu0 0
    %1433 = vmatpush2.bf16.msra.mxu0 0
    %1434 = vmatprep.mubr.bf16.mxu0 0
    %1435 = vmatmul.mubr.bf16.gmra.mxu0 %v309
    %v1436 = vpop.f32.mrf.mxu0
    %v1437 = vadd.f32 %v1394, %v1436
    %v1438 = vpop.f32.mrf.mxu0
    %v1439 = vadd.f32 %v1396, %v1438
    %v1440 = vpop.f32.mrf.mxu0
    %v1441 = vadd.f32 %v1398, %v1440
    %v1442 = vpop.f32.mrf.mxu0
    %v1443 = vadd.f32 %v1400, %v1442
    %1444 = vdwg.mxu0
    %1445 = vmatprep.subr.bf16.mxu0 %v950
    %1446 = vmatpush1.bf16.msra.mxu0 %v949
    %1447 = vmatprep.subr.bf16.mxu0 %v942
    %1448 = vmatpush1.bf16.msra.mxu0 %v941
    %1449 = vmatprep.subr.bf16.mxu0 %v934
    %1450 = vmatpush1.bf16.msra.mxu0 %v933
    %1451 = vmatprep.subr.bf16.mxu0 %v926
    %1452 = vmatpush1.bf16.msra.mxu0 %v925
    %1453 = vmatprep.subr.bf16.mxu0 %v918
    %1454 = vmatpush1.bf16.msra.mxu0 %v917
    %1455 = vmatprep.subr.bf16.mxu0 %v910
    %1456 = vmatpush1.bf16.msra.mxu0 %v909
    %1457 = vmatprep.subr.bf16.mxu0 %v902
    %1458 = vmatpush1.bf16.msra.mxu0 %v901
    %1459 = vmatprep.subr.bf16.mxu0 %v894
    %1460 = vmatpush1.bf16.msra.mxu0 %v893
    %1461 = vmatprep.subr.bf16.mxu0 %v1014
    %1462 = vmatpush2.bf16.msra.mxu0 %v1013
    %1463 = vmatprep.subr.bf16.mxu0 %v1006
    %1464 = vmatpush2.bf16.msra.mxu0 %v1005
    %1465 = vmatprep.subr.bf16.mxu0 %v998
    %1466 = vmatpush2.bf16.msra.mxu0 %v997
    %1467 = vmatprep.subr.bf16.mxu0 %v990
    %1468 = vmatpush2.bf16.msra.mxu0 %v989
    %1469 = vmatprep.subr.bf16.mxu0 %v982
    %1470 = vmatpush2.bf16.msra.mxu0 %v981
    %1471 = vmatprep.subr.bf16.mxu0 %v974
    %1472 = vmatpush2.bf16.msra.mxu0 %v973
    %1473 = vmatprep.subr.bf16.mxu0 %v966
    %1474 = vmatpush2.bf16.msra.mxu0 %v965
    %1475 = vmatprep.subr.bf16.mxu0 %v958
    %1476 = vmatpush2.bf16.msra.mxu0 %v957
    %1477 = vmatprep.mubr.bf16.mxu0 %v308
    %1478 = vmatmul.mubr.bf16.gmra.mxu0 %v307
    %v1479 = vpop.f32.mrf.mxu0
    %v1480 = vadd.f32 %v276, %v1479
    %v1481 = vpop.f32.mrf.mxu0
    %v1482 = vadd.f32 %v280, %v1481
    %v1483 = vpop.f32.mrf.mxu0
    %v1484 = vadd.f32 %v276, %v1483
    %v1485 = vpop.f32.mrf.mxu0
    %v1486 = vadd.f32 %v280, %v1485
    %1487 = vdwg.mxu0
    %1488 = vmatprep.subr.bf16.mxu0 %v1078
    %1489 = vmatpush1.bf16.msra.mxu0 %v1077
    %1490 = vmatprep.subr.bf16.mxu0 %v1070
    %1491 = vmatpush1.bf16.msra.mxu0 %v1069
    %1492 = vmatprep.subr.bf16.mxu0 %v1062
    %1493 = vmatpush1.bf16.msra.mxu0 %v1061
    %1494 = vmatprep.subr.bf16.mxu0 %v1054
    %1495 = vmatpush1.bf16.msra.mxu0 %v1053
    %1496 = vmatprep.subr.bf16.mxu0 %v1046
    %1497 = vmatpush1.bf16.msra.mxu0 %v1045
    %1498 = vmatprep.subr.bf16.mxu0 %v1038
    %1499 = vmatpush1.bf16.msra.mxu0 %v1037
    %1500 = vmatprep.subr.bf16.mxu0 %v1030
    %1501 = vmatpush1.bf16.msra.mxu0 %v1029
    %1502 = vmatprep.subr.bf16.mxu0 %v1022
    %1503 = vmatpush1.bf16.msra.mxu0 %v1021
    %1504 = vmatprep.subr.bf16.mxu0 0
    %1505 = vmatpush2.bf16.msra.mxu0 0
    %1506 = vmatprep.subr.bf16.mxu0 0
    %1507 = vmatpush2.bf16.msra.mxu0 0
    %1508 = vmatprep.subr.bf16.mxu0 0
    %1509 = vmatpush2.bf16.msra.mxu0 0
    %1510 = vmatprep.subr.bf16.mxu0 0
    %1511 = vmatpush2.bf16.msra.mxu0 0
    %1512 = vmatprep.subr.bf16.mxu0 0
    %1513 = vmatpush2.bf16.msra.mxu0 0
    %1514 = vmatprep.subr.bf16.mxu0 0
    %1515 = vmatpush2.bf16.msra.mxu0 0
    %1516 = vmatprep.subr.bf16.mxu0 0
    %1517 = vmatpush2.bf16.msra.mxu0 0
    %1518 = vmatprep.subr.bf16.mxu0 0
    %1519 = vmatpush2.bf16.msra.mxu0 0
    %1520 = vmatprep.mubr.bf16.mxu0 0
    %1521 = vmatmul.mubr.bf16.gmra.mxu0 %v309
    %v1522 = vpop.f32.mrf.mxu0
    %v1523 = vadd.f32 %v1480, %v1522
    %v1524 = vpop.f32.mrf.mxu0
    %v1525 = vadd.f32 %v1482, %v1524
    %v1526 = vpop.f32.mrf.mxu0
    %v1527 = vadd.f32 %v1484, %v1526
    %v1528 = vpop.f32.mrf.mxu0
    %v1529 = vadd.f32 %v1486, %v1528
    %1530 = vdwg.mxu0
    %1531 = vmatprep.subr.bf16.mxu0 %v952
    %1532 = vmatpush1.bf16.msra.mxu0 %v951
    %1533 = vmatprep.subr.bf16.mxu0 %v944
    %1534 = vmatpush1.bf16.msra.mxu0 %v943
    %1535 = vmatprep.subr.bf16.mxu0 %v936
    %1536 = vmatpush1.bf16.msra.mxu0 %v935
    %1537 = vmatprep.subr.bf16.mxu0 %v928
    %1538 = vmatpush1.bf16.msra.mxu0 %v927
    %1539 = vmatprep.subr.bf16.mxu0 %v920
    %1540 = vmatpush1.bf16.msra.mxu0 %v919
    %1541 = vmatprep.subr.bf16.mxu0 %v912
    %1542 = vmatpush1.bf16.msra.mxu0 %v911
    %1543 = vmatprep.subr.bf16.mxu0 %v904
    %1544 = vmatpush1.bf16.msra.mxu0 %v903
    %1545 = vmatprep.subr.bf16.mxu0 %v896
    %1546 = vmatpush1.bf16.msra.mxu0 %v895
    %1547 = vmatprep.subr.bf16.mxu0 %v1016
    %1548 = vmatpush2.bf16.msra.mxu0 %v1015
    %1549 = vmatprep.subr.bf16.mxu0 %v1008
    %1550 = vmatpush2.bf16.msra.mxu0 %v1007
    %1551 = vmatprep.subr.bf16.mxu0 %v1000
    %1552 = vmatpush2.bf16.msra.mxu0 %v999
    %1553 = vmatprep.subr.bf16.mxu0 %v992
    %1554 = vmatpush2.bf16.msra.mxu0 %v991
    %1555 = vmatprep.subr.bf16.mxu0 %v984
    %1556 = vmatpush2.bf16.msra.mxu0 %v983
    %1557 = vmatprep.subr.bf16.mxu0 %v976
    %1558 = vmatpush2.bf16.msra.mxu0 %v975
    %1559 = vmatprep.subr.bf16.mxu0 %v968
    %1560 = vmatpush2.bf16.msra.mxu0 %v967
    %1561 = vmatprep.subr.bf16.mxu0 %v960
    %1562 = vmatpush2.bf16.msra.mxu0 %v959
    %1563 = vmatprep.mubr.bf16.mxu0 %v308
    %1564 = vmatmul.mubr.bf16.gmra.mxu0 %v307
    %v1565 = vpop.f32.mrf.mxu0
    %v1566 = vadd.f32 %v284, %v1565
    %v1567 = vpop.f32.mrf.mxu0
    %v1568 = vadd.f32 %v288, %v1567
    %v1569 = vpop.f32.mrf.mxu0
    %v1570 = vadd.f32 %v284, %v1569
    %v1571 = vpop.f32.mrf.mxu0
    %v1572 = vadd.f32 %v288, %v1571
    %1573 = vdwg.mxu0
    %1574 = vmatprep.subr.bf16.mxu0 %v1080
    %1575 = vmatpush1.bf16.msra.mxu0 %v1079
    %1576 = vmatprep.subr.bf16.mxu0 %v1072
    %1577 = vmatpush1.bf16.msra.mxu0 %v1071
    %1578 = vmatprep.subr.bf16.mxu0 %v1064
    %1579 = vmatpush1.bf16.msra.mxu0 %v1063
    %1580 = vmatprep.subr.bf16.mxu0 %v1056
    %1581 = vmatpush1.bf16.msra.mxu0 %v1055
    %1582 = vmatprep.subr.bf16.mxu0 %v1048
    %1583 = vmatpush1.bf16.msra.mxu0 %v1047
    %1584 = vmatprep.subr.bf16.mxu0 %v1040
    %1585 = vmatpush1.bf16.msra.mxu0 %v1039
    %1586 = vmatprep.subr.bf16.mxu0 %v1032
    %1587 = vmatpush1.bf16.msra.mxu0 %v1031
    %1588 = vmatprep.subr.bf16.mxu0 %v1024
    %1589 = vmatpush1.bf16.msra.mxu0 %v1023
    %1590 = vmatprep.subr.bf16.mxu0 0
    %1591 = vmatpush2.bf16.msra.mxu0 0
    %1592 = vmatprep.subr.bf16.mxu0 0
    %1593 = vmatpush2.bf16.msra.mxu0 0
    %1594 = vmatprep.subr.bf16.mxu0 0
    %1595 = vmatpush2.bf16.msra.mxu0 0
    %1596 = vmatprep.subr.bf16.mxu0 0
    %1597 = vmatpush2.bf16.msra.mxu0 0
    %1598 = vmatprep.subr.bf16.mxu0 0
    %1599 = vmatpush2.bf16.msra.mxu0 0
    %1600 = vmatprep.subr.bf16.mxu0 0
    %1601 = vmatpush2.bf16.msra.mxu0 0
    %1602 = vmatprep.subr.bf16.mxu0 0
    %1603 = vmatpush2.bf16.msra.mxu0 0
    %1604 = vmatprep.subr.bf16.mxu0 0
    %1605 = vmatpush2.bf16.msra.mxu0 0
    %1606 = vmatprep.mubr.bf16.mxu0 0
    %1607 = vmatmul.mubr.bf16.gmra.mxu0 %v309
    %v1608 = vpop.f32.mrf.mxu0
    %v1609 = vadd.f32 %v1566, %v1608
    %v1610 = vpop.f32.mrf.mxu0
    %v1611 = vadd.f32 %v1568, %v1610
    %v1612 = vpop.f32.mrf.mxu0
    %v1613 = vadd.f32 %v1570, %v1612
    %v1614 = vpop.f32.mrf.mxu0
    %v1615 = vadd.f32 %v1572, %v1614
    %1616 = vdwg.mxu0
    %v1617 = vld [vmem:[#allocation5] sm:$0xff]
    %v1618 = vld [vmem:[#allocation5 + $0x8] sm:$0xff]
    %v1619 = vld [vmem:[#allocation5 + $0x10] sm:$0xff]
    %v1620 = vld [vmem:[#allocation5 + $0x18] sm:$0xff]
    %v1621 = vld [vmem:[#allocation5 + $0x20] sm:$0xff]
    %v1622 = vld [vmem:[#allocation5 + $0x28] sm:$0xff]
    %v1623 = vld [vmem:[#allocation5 + $0x30] sm:$0xff]
    %v1624 = vld [vmem:[#allocation5 + $0x38] sm:$0xff]
    %v1625 = vld [vmem:[#allocation5 + $0x40] sm:$0xff]
    %v1626 = vld [vmem:[#allocation5 + $0x48] sm:$0xff]
    %v1627 = vld [vmem:[#allocation5 + $0x50] sm:$0xff]
    %v1628 = vld [vmem:[#allocation5 + $0x58] sm:$0xff]
    %v1629 = vld [vmem:[#allocation5 + $0x60] sm:$0xff]
    %v1630 = vld [vmem:[#allocation5 + $0x68] sm:$0xff]
    %v1631 = vld [vmem:[#allocation5 + $0x70] sm:$0xff]
    %v1632 = vld [vmem:[#allocation5 + $0x78] sm:$0xff]
    %v1633 = vld [vmem:[#allocation5 + $0x80] sm:$0xff]
    %v1634 = vld [vmem:[#allocation5 + $0x88] sm:$0xff]
    %v1635 = vld [vmem:[#allocation5 + $0x90] sm:$0xff]
    %v1636 = vld [vmem:[#allocation5 + $0x98] sm:$0xff]
    %v1637 = vld [vmem:[#allocation5 + $0xa0] sm:$0xff]
    %v1638 = vld [vmem:[#allocation5 + $0xa8] sm:$0xff]
    %v1639 = vld [vmem:[#allocation5 + $0xb0] sm:$0xff]
    %v1640 = vld [vmem:[#allocation5 + $0xb8] sm:$0xff]
    %v1641 = vld [vmem:[#allocation5 + $0xc0] sm:$0xff]
    %v1642 = vld [vmem:[#allocation5 + $0xc8] sm:$0xff]
    %v1643 = vld [vmem:[#allocation5 + $0xd0] sm:$0xff]
    %v1644 = vld [vmem:[#allocation5 + $0xd8] sm:$0xff]
    %v1645 = vld [vmem:[#allocation5 + $0xe0] sm:$0xff]
    %v1646 = vld [vmem:[#allocation5 + $0xe8] sm:$0xff]
    %v1647 = vld [vmem:[#allocation5 + $0xf0] sm:$0xff]
    %v1648 = vld [vmem:[#allocation5 + $0xf8] sm:$0xff]
    %v1649 = vld [vmem:[#allocation5 + $0x100] sm:$0xff]
    %v1650 = vld [vmem:[#allocation5 + $0x108] sm:$0xff]
    %v1651 = vld [vmem:[#allocation5 + $0x110] sm:$0xff]
    %v1652 = vld [vmem:[#allocation5 + $0x118] sm:$0xff]
    %v1653 = vld [vmem:[#allocation5 + $0x120] sm:$0xff]
    %v1654 = vld [vmem:[#allocation5 + $0x128] sm:$0xff]
    %v1655 = vld [vmem:[#allocation5 + $0x130] sm:$0xff]
    %v1656 = vld [vmem:[#allocation5 + $0x138] sm:$0xff]
    %v1657 = vld [vmem:[#allocation5 + $0x140] sm:$0xff]
    %v1658 = vld [vmem:[#allocation5 + $0x148] sm:$0xff]
    %v1659 = vld [vmem:[#allocation5 + $0x150] sm:$0xff]
    %v1660 = vld [vmem:[#allocation5 + $0x158] sm:$0xff]
    %v1661 = vld [vmem:[#allocation5 + $0x160] sm:$0xff]
    %v1662 = vld [vmem:[#allocation5 + $0x168] sm:$0xff]
    %v1663 = vld [vmem:[#allocation5 + $0x170] sm:$0xff]
    %v1664 = vld [vmem:[#allocation5 + $0x178] sm:$0xff]
    %v1665 = vld [vmem:[#allocation5 + $0x180] sm:$0xff]
    %v1666 = vld [vmem:[#allocation5 + $0x188] sm:$0xff]
    %v1667 = vld [vmem:[#allocation5 + $0x190] sm:$0xff]
    %v1668 = vld [vmem:[#allocation5 + $0x198] sm:$0xff]
    %v1669 = vld [vmem:[#allocation5 + $0x1a0] sm:$0xff]
    %v1670 = vld [vmem:[#allocation5 + $0x1a8] sm:$0xff]
    %v1671 = vld [vmem:[#allocation5 + $0x1b0] sm:$0xff]
    %v1672 = vld [vmem:[#allocation5 + $0x1b8] sm:$0xff]
    %v1673 = vld [vmem:[#allocation5 + $0x1c0] sm:$0xff]
    %v1674 = vld [vmem:[#allocation5 + $0x1c8] sm:$0xff]
    %v1675 = vld [vmem:[#allocation5 + $0x1d0] sm:$0xff]
    %v1676 = vld [vmem:[#allocation5 + $0x1d8] sm:$0xff]
    %v1677 = vld [vmem:[#allocation5 + $0x1e0] sm:$0xff]
    %v1678 = vld [vmem:[#allocation5 + $0x1e8] sm:$0xff]
    %v1679 = vld [vmem:[#allocation5 + $0x1f0] sm:$0xff]
    %v1680 = vld [vmem:[#allocation5 + $0x1f8] sm:$0xff]
    %v1681 = vld [vmem:[#allocation5 + $0x200] sm:$0xff]
    %v1682 = vld [vmem:[#allocation5 + $0x208] sm:$0xff]
    %v1683 = vld [vmem:[#allocation5 + $0x210] sm:$0xff]
    %v1684 = vld [vmem:[#allocation5 + $0x218] sm:$0xff]
    %v1685 = vld [vmem:[#allocation5 + $0x220] sm:$0xff]
    %v1686 = vld [vmem:[#allocation5 + $0x228] sm:$0xff]
    %v1687 = vld [vmem:[#allocation5 + $0x230] sm:$0xff]
    %v1688 = vld [vmem:[#allocation5 + $0x238] sm:$0xff]
    %v1689 = vld [vmem:[#allocation5 + $0x240] sm:$0xff]
    %v1690 = vld [vmem:[#allocation5 + $0x248] sm:$0xff]
    %v1691 = vld [vmem:[#allocation5 + $0x250] sm:$0xff]
    %v1692 = vld [vmem:[#allocation5 + $0x258] sm:$0xff]
    %v1693 = vld [vmem:[#allocation5 + $0x260] sm:$0xff]
    %v1694 = vld [vmem:[#allocation5 + $0x268] sm:$0xff]
    %v1695 = vld [vmem:[#allocation5 + $0x270] sm:$0xff]
    %v1696 = vld [vmem:[#allocation5 + $0x278] sm:$0xff]
    %v1697 = vld [vmem:[#allocation5 + $0x280] sm:$0xff]
    %v1698 = vld [vmem:[#allocation5 + $0x288] sm:$0xff]
    %v1699 = vld [vmem:[#allocation5 + $0x290] sm:$0xff]
    %v1700 = vld [vmem:[#allocation5 + $0x298] sm:$0xff]
    %v1701 = vld [vmem:[#allocation5 + $0x2a0] sm:$0xff]
    %v1702 = vld [vmem:[#allocation5 + $0x2a8] sm:$0xff]
    %v1703 = vld [vmem:[#allocation5 + $0x2b0] sm:$0xff]
    %v1704 = vld [vmem:[#allocation5 + $0x2b8] sm:$0xff]
    %v1705 = vld [vmem:[#allocation5 + $0x2c0] sm:$0xff]
    %v1706 = vld [vmem:[#allocation5 + $0x2c8] sm:$0xff]
    %v1707 = vld [vmem:[#allocation5 + $0x2d0] sm:$0xff]
    %v1708 = vld [vmem:[#allocation5 + $0x2d8] sm:$0xff]
    %v1709 = vld [vmem:[#allocation5 + $0x2e0] sm:$0xff]
    %v1710 = vld [vmem:[#allocation5 + $0x2e8] sm:$0xff]
    %v1711 = vld [vmem:[#allocation5 + $0x2f0] sm:$0xff]
    %v1712 = vld [vmem:[#allocation5 + $0x2f8] sm:$0xff]
    %v1713 = vld [vmem:[#allocation5 + $0x300] sm:$0xff]
    %v1714 = vld [vmem:[#allocation5 + $0x308] sm:$0xff]
    %v1715 = vld [vmem:[#allocation5 + $0x310] sm:$0xff]
    %v1716 = vld [vmem:[#allocation5 + $0x318] sm:$0xff]
    %v1717 = vld [vmem:[#allocation5 + $0x320] sm:$0xff]
    %v1718 = vld [vmem:[#allocation5 + $0x328] sm:$0xff]
    %v1719 = vld [vmem:[#allocation5 + $0x330] sm:$0xff]
    %v1720 = vld [vmem:[#allocation5 + $0x338] sm:$0xff]
    %v1721 = vld [vmem:[#allocation5 + $0x340] sm:$0xff]
    %v1722 = vld [vmem:[#allocation5 + $0x348] sm:$0xff]
    %v1723 = vld [vmem:[#allocation5 + $0x350] sm:$0xff]
    %v1724 = vld [vmem:[#allocation5 + $0x358] sm:$0xff]
    %v1725 = vld [vmem:[#allocation5 + $0x360] sm:$0xff]
    %v1726 = vld [vmem:[#allocation5 + $0x368] sm:$0xff]
    %v1727 = vld [vmem:[#allocation5 + $0x370] sm:$0xff]
    %v1728 = vld [vmem:[#allocation5 + $0x378] sm:$0xff]
    %v1729 = vld [vmem:[#allocation5 + $0x380] sm:$0xff]
    %v1730 = vld [vmem:[#allocation5 + $0x388] sm:$0xff]
    %v1731 = vld [vmem:[#allocation5 + $0x390] sm:$0xff]
    %v1732 = vld [vmem:[#allocation5 + $0x398] sm:$0xff]
    %v1733 = vld [vmem:[#allocation5 + $0x3a0] sm:$0xff]
    %v1734 = vld [vmem:[#allocation5 + $0x3a8] sm:$0xff]
    %v1735 = vld [vmem:[#allocation5 + $0x3b0] sm:$0xff]
    %v1736 = vld [vmem:[#allocation5 + $0x3b8] sm:$0xff]
    %v1737 = vld [vmem:[#allocation5 + $0x3c0] sm:$0xff]
    %v1738 = vld [vmem:[#allocation5 + $0x3c8] sm:$0xff]
    %v1739 = vld [vmem:[#allocation5 + $0x3d0] sm:$0xff]
    %v1740 = vld [vmem:[#allocation5 + $0x3d8] sm:$0xff]
    %v1741 = vld [vmem:[#allocation5 + $0x3e0] sm:$0xff]
    %v1742 = vld [vmem:[#allocation5 + $0x3e8] sm:$0xff]
    %v1743 = vld [vmem:[#allocation5 + $0x3f0] sm:$0xff]
    %v1744 = vld [vmem:[#allocation5 + $0x3f8] sm:$0xff]
    %v1745 = vpack.c.bf16 0.0, 0.0
    %v1874 = vunpack.c.l.b16 %v1617
    %v1875 = vunpack.c.h.b16 %v1617
    %v1876 = vunpack.c.l.b16 %v1618
    %v1877 = vunpack.c.h.b16 %v1618
    %v1878 = vunpack.c.l.b16 %v1619
    %v1879 = vunpack.c.h.b16 %v1619
    %v1880 = vunpack.c.l.b16 %v1620
    %v1881 = vunpack.c.h.b16 %v1620
    %v1882 = vunpack.c.l.b16 %v1621
    %v1883 = vunpack.c.h.b16 %v1621
    %v1884 = vunpack.c.l.b16 %v1622
    %v1885 = vunpack.c.h.b16 %v1622
    %v1886 = vunpack.c.l.b16 %v1623
    %v1887 = vunpack.c.h.b16 %v1623
    %v1888 = vunpack.c.l.b16 %v1624
    %v1889 = vunpack.c.h.b16 %v1624
    %v1890 = vunpack.c.l.b16 %v1625
    %v1891 = vunpack.c.h.b16 %v1625
    %v1892 = vunpack.c.l.b16 %v1626
    %v1893 = vunpack.c.h.b16 %v1626
    %v1894 = vunpack.c.l.b16 %v1627
    %v1895 = vunpack.c.h.b16 %v1627
    %v1896 = vunpack.c.l.b16 %v1628
    %v1897 = vunpack.c.h.b16 %v1628
    %v1898 = vunpack.c.l.b16 %v1629
    %v1899 = vunpack.c.h.b16 %v1629
    %v1900 = vunpack.c.l.b16 %v1630
    %v1901 = vunpack.c.h.b16 %v1630
    %v1902 = vunpack.c.l.b16 %v1631
    %v1903 = vunpack.c.h.b16 %v1631
    %v1904 = vunpack.c.l.b16 %v1632
    %v1905 = vunpack.c.h.b16 %v1632
    %v1906 = vunpack.c.l.b16 %v1633
    %v1907 = vunpack.c.h.b16 %v1633
    %v1908 = vunpack.c.l.b16 %v1634
    %v1909 = vunpack.c.h.b16 %v1634
    %v1910 = vunpack.c.l.b16 %v1635
    %v1911 = vunpack.c.h.b16 %v1635
    %v1912 = vunpack.c.l.b16 %v1636
    %v1913 = vunpack.c.h.b16 %v1636
    %v1914 = vunpack.c.l.b16 %v1637
    %v1915 = vunpack.c.h.b16 %v1637
    %v1916 = vunpack.c.l.b16 %v1638
    %v1917 = vunpack.c.h.b16 %v1638
    %v1918 = vunpack.c.l.b16 %v1639
    %v1919 = vunpack.c.h.b16 %v1639
    %v1920 = vunpack.c.l.b16 %v1640
    %v1921 = vunpack.c.h.b16 %v1640
    %v1922 = vunpack.c.l.b16 %v1641
    %v1923 = vunpack.c.h.b16 %v1641
    %v1924 = vunpack.c.l.b16 %v1642
    %v1925 = vunpack.c.h.b16 %v1642
    %v1926 = vunpack.c.l.b16 %v1643
    %v1927 = vunpack.c.h.b16 %v1643
    %v1928 = vunpack.c.l.b16 %v1644
    %v1929 = vunpack.c.h.b16 %v1644
    %v1930 = vunpack.c.l.b16 %v1645
    %v1931 = vunpack.c.h.b16 %v1645
    %v1932 = vunpack.c.l.b16 %v1646
    %v1933 = vunpack.c.h.b16 %v1646
    %v1934 = vunpack.c.l.b16 %v1647
    %v1935 = vunpack.c.h.b16 %v1647
    %v1936 = vunpack.c.l.b16 %v1648
    %v1937 = vunpack.c.h.b16 %v1648
    %v1938 = vunpack.c.l.b16 %v1649
    %v1939 = vunpack.c.h.b16 %v1649
    %v1940 = vunpack.c.l.b16 %v1650
    %v1941 = vunpack.c.h.b16 %v1650
    %v1942 = vunpack.c.l.b16 %v1651
    %v1943 = vunpack.c.h.b16 %v1651
    %v1944 = vunpack.c.l.b16 %v1652
    %v1945 = vunpack.c.h.b16 %v1652
    %v1946 = vunpack.c.l.b16 %v1653
    %v1947 = vunpack.c.h.b16 %v1653
    %v1948 = vunpack.c.l.b16 %v1654
    %v1949 = vunpack.c.h.b16 %v1654
    %v1950 = vunpack.c.l.b16 %v1655
    %v1951 = vunpack.c.h.b16 %v1655
    %v1952 = vunpack.c.l.b16 %v1656
    %v1953 = vunpack.c.h.b16 %v1656
    %v1954 = vunpack.c.l.b16 %v1657
    %v1955 = vunpack.c.h.b16 %v1657
    %v1956 = vunpack.c.l.b16 %v1658
    %v1957 = vunpack.c.h.b16 %v1658
    %v1958 = vunpack.c.l.b16 %v1659
    %v1959 = vunpack.c.h.b16 %v1659
    %v1960 = vunpack.c.l.b16 %v1660
    %v1961 = vunpack.c.h.b16 %v1660
    %v1962 = vunpack.c.l.b16 %v1661
    %v1963 = vunpack.c.h.b16 %v1661
    %v1964 = vunpack.c.l.b16 %v1662
    %v1965 = vunpack.c.h.b16 %v1662
    %v1966 = vunpack.c.l.b16 %v1663
    %v1967 = vunpack.c.h.b16 %v1663
    %v1968 = vunpack.c.l.b16 %v1664
    %v1969 = vunpack.c.h.b16 %v1664
    %v1970 = vunpack.c.l.b16 %v1665
    %v1971 = vunpack.c.h.b16 %v1665
    %v1972 = vunpack.c.l.b16 %v1666
    %v1973 = vunpack.c.h.b16 %v1666
    %v1974 = vunpack.c.l.b16 %v1667
    %v1975 = vunpack.c.h.b16 %v1667
    %v1976 = vunpack.c.l.b16 %v1668
    %v1977 = vunpack.c.h.b16 %v1668
    %v1978 = vunpack.c.l.b16 %v1669
    %v1979 = vunpack.c.h.b16 %v1669
    %v1980 = vunpack.c.l.b16 %v1670
    %v1981 = vunpack.c.h.b16 %v1670
    %v1982 = vunpack.c.l.b16 %v1671
    %v1983 = vunpack.c.h.b16 %v1671
    %v1984 = vunpack.c.l.b16 %v1672
    %v1985 = vunpack.c.h.b16 %v1672
    %v1986 = vunpack.c.l.b16 %v1673
    %v1987 = vunpack.c.h.b16 %v1673
    %v1988 = vunpack.c.l.b16 %v1674
    %v1989 = vunpack.c.h.b16 %v1674
    %v1990 = vunpack.c.l.b16 %v1675
    %v1991 = vunpack.c.h.b16 %v1675
    %v1992 = vunpack.c.l.b16 %v1676
    %v1993 = vunpack.c.h.b16 %v1676
    %v1994 = vunpack.c.l.b16 %v1677
    %v1995 = vunpack.c.h.b16 %v1677
    %v1996 = vunpack.c.l.b16 %v1678
    %v1997 = vunpack.c.h.b16 %v1678
    %v1998 = vunpack.c.l.b16 %v1679
    %v1999 = vunpack.c.h.b16 %v1679
    %v2000 = vunpack.c.l.b16 %v1680
    %v2001 = vunpack.c.h.b16 %v1680
    %v2002 = vunpack.c.l.b16 %v1681
    %v2003 = vunpack.c.h.b16 %v1681
    %v2004 = vunpack.c.l.b16 %v1682
    %v2005 = vunpack.c.h.b16 %v1682
    %v2006 = vunpack.c.l.b16 %v1683
    %v2007 = vunpack.c.h.b16 %v1683
    %v2008 = vunpack.c.l.b16 %v1684
    %v2009 = vunpack.c.h.b16 %v1684
    %v2010 = vunpack.c.l.b16 %v1685
    %v2011 = vunpack.c.h.b16 %v1685
    %v2012 = vunpack.c.l.b16 %v1686
    %v2013 = vunpack.c.h.b16 %v1686
    %v2014 = vunpack.c.l.b16 %v1687
    %v2015 = vunpack.c.h.b16 %v1687
    %v2016 = vunpack.c.l.b16 %v1688
    %v2017 = vunpack.c.h.b16 %v1688
    %v2018 = vunpack.c.l.b16 %v1689
    %v2019 = vunpack.c.h.b16 %v1689
    %v2020 = vunpack.c.l.b16 %v1690
    %v2021 = vunpack.c.h.b16 %v1690
    %v2022 = vunpack.c.l.b16 %v1691
    %v2023 = vunpack.c.h.b16 %v1691
    %v2024 = vunpack.c.l.b16 %v1692
    %v2025 = vunpack.c.h.b16 %v1692
    %v2026 = vunpack.c.l.b16 %v1693
    %v2027 = vunpack.c.h.b16 %v1693
    %v2028 = vunpack.c.l.b16 %v1694
    %v2029 = vunpack.c.h.b16 %v1694
    %v2030 = vunpack.c.l.b16 %v1695
    %v2031 = vunpack.c.h.b16 %v1695
    %v2032 = vunpack.c.l.b16 %v1696
    %v2033 = vunpack.c.h.b16 %v1696
    %v2034 = vunpack.c.l.b16 %v1697
    %v2035 = vunpack.c.h.b16 %v1697
    %v2036 = vunpack.c.l.b16 %v1698
    %v2037 = vunpack.c.h.b16 %v1698
    %v2038 = vunpack.c.l.b16 %v1699
    %v2039 = vunpack.c.h.b16 %v1699
    %v2040 = vunpack.c.l.b16 %v1700
    %v2041 = vunpack.c.h.b16 %v1700
    %v2042 = vunpack.c.l.b16 %v1701
    %v2043 = vunpack.c.h.b16 %v1701
    %v2044 = vunpack.c.l.b16 %v1702
    %v2045 = vunpack.c.h.b16 %v1702
    %v2046 = vunpack.c.l.b16 %v1703
    %v2047 = vunpack.c.h.b16 %v1703
    %v2048 = vunpack.c.l.b16 %v1704
    %v2049 = vunpack.c.h.b16 %v1704
    %v2050 = vunpack.c.l.b16 %v1705
    %v2051 = vunpack.c.h.b16 %v1705
    %v2052 = vunpack.c.l.b16 %v1706
    %v2053 = vunpack.c.h.b16 %v1706
    %v2054 = vunpack.c.l.b16 %v1707
    %v2055 = vunpack.c.h.b16 %v1707
    %v2056 = vunpack.c.l.b16 %v1708
    %v2057 = vunpack.c.h.b16 %v1708
    %v2058 = vunpack.c.l.b16 %v1709
    %v2059 = vunpack.c.h.b16 %v1709
    %v2060 = vunpack.c.l.b16 %v1710
    %v2061 = vunpack.c.h.b16 %v1710
    %v2062 = vunpack.c.l.b16 %v1711
    %v2063 = vunpack.c.h.b16 %v1711
    %v2064 = vunpack.c.l.b16 %v1712
    %v2065 = vunpack.c.h.b16 %v1712
    %v2066 = vunpack.c.l.b16 %v1713
    %v2067 = vunpack.c.h.b16 %v1713
    %v2068 = vunpack.c.l.b16 %v1714
    %v2069 = vunpack.c.h.b16 %v1714
    %v2070 = vunpack.c.l.b16 %v1715
    %v2071 = vunpack.c.h.b16 %v1715
    %v2072 = vunpack.c.l.b16 %v1716
    %v2073 = vunpack.c.h.b16 %v1716
    %v2074 = vunpack.c.l.b16 %v1717
    %v2075 = vunpack.c.h.b16 %v1717
    %v2076 = vunpack.c.l.b16 %v1718
    %v2077 = vunpack.c.h.b16 %v1718
    %v2078 = vunpack.c.l.b16 %v1719
    %v2079 = vunpack.c.h.b16 %v1719
    %v2080 = vunpack.c.l.b16 %v1720
    %v2081 = vunpack.c.h.b16 %v1720
    %v2082 = vunpack.c.l.b16 %v1721
    %v2083 = vunpack.c.h.b16 %v1721
    %v2084 = vunpack.c.l.b16 %v1722
    %v2085 = vunpack.c.h.b16 %v1722
    %v2086 = vunpack.c.l.b16 %v1723
    %v2087 = vunpack.c.h.b16 %v1723
    %v2088 = vunpack.c.l.b16 %v1724
    %v2089 = vunpack.c.h.b16 %v1724
    %v2090 = vunpack.c.l.b16 %v1725
    %v2091 = vunpack.c.h.b16 %v1725
    %v2092 = vunpack.c.l.b16 %v1726
    %v2093 = vunpack.c.h.b16 %v1726
    %v2094 = vunpack.c.l.b16 %v1727
    %v2095 = vunpack.c.h.b16 %v1727
    %v2096 = vunpack.c.l.b16 %v1728
    %v2097 = vunpack.c.h.b16 %v1728
    %v2098 = vunpack.c.l.b16 %v1729
    %v2099 = vunpack.c.h.b16 %v1729
    %v2100 = vunpack.c.l.b16 %v1730
    %v2101 = vunpack.c.h.b16 %v1730
    %v2102 = vunpack.c.l.b16 %v1731
    %v2103 = vunpack.c.h.b16 %v1731
    %v2104 = vunpack.c.l.b16 %v1732
    %v2105 = vunpack.c.h.b16 %v1732
    %v2106 = vunpack.c.l.b16 %v1733
    %v2107 = vunpack.c.h.b16 %v1733
    %v2108 = vunpack.c.l.b16 %v1734
    %v2109 = vunpack.c.h.b16 %v1734
    %v2110 = vunpack.c.l.b16 %v1735
    %v2111 = vunpack.c.h.b16 %v1735
    %v2112 = vunpack.c.l.b16 %v1736
    %v2113 = vunpack.c.h.b16 %v1736
    %v2114 = vunpack.c.l.b16 %v1737
    %v2115 = vunpack.c.h.b16 %v1737
    %v2116 = vunpack.c.l.b16 %v1738
    %v2117 = vunpack.c.h.b16 %v1738
    %v2118 = vunpack.c.l.b16 %v1739
    %v2119 = vunpack.c.h.b16 %v1739
    %v2120 = vunpack.c.l.b16 %v1740
    %v2121 = vunpack.c.h.b16 %v1740
    %v2122 = vunpack.c.l.b16 %v1741
    %v2123 = vunpack.c.h.b16 %v1741
    %v2124 = vunpack.c.l.b16 %v1742
    %v2125 = vunpack.c.h.b16 %v1742
    %v2126 = vunpack.c.l.b16 %v1743
    %v2127 = vunpack.c.h.b16 %v1743
    %v2128 = vunpack.c.l.b16 %v1744
    %v2129 = vunpack.c.h.b16 %v1744
    %v2130 = vpack.c.b16 %v1882, %v1874
    %v2131 = vpack.c.b16 %v1883, %v1875
    %v2132 = vpack.c.b16 %v1884, %v1876
    %v2133 = vpack.c.b16 %v1885, %v1877
    %v2134 = vpack.c.b16 %v1886, %v1878
    %v2135 = vpack.c.b16 %v1887, %v1879
    %v2136 = vpack.c.b16 %v1888, %v1880
    %v2137 = vpack.c.b16 %v1889, %v1881
    %v2138 = vpack.c.b16 %v1898, %v1890
    %v2139 = vpack.c.b16 %v1899, %v1891
    %v2140 = vpack.c.b16 %v1900, %v1892
    %v2141 = vpack.c.b16 %v1901, %v1893
    %v2142 = vpack.c.b16 %v1902, %v1894
    %v2143 = vpack.c.b16 %v1903, %v1895
    %v2144 = vpack.c.b16 %v1904, %v1896
    %v2145 = vpack.c.b16 %v1905, %v1897
    %v2146 = vpack.c.b16 %v1914, %v1906
    %v2147 = vpack.c.b16 %v1915, %v1907
    %v2148 = vpack.c.b16 %v1916, %v1908
    %v2149 = vpack.c.b16 %v1917, %v1909
    %v2150 = vpack.c.b16 %v1918, %v1910
    %v2151 = vpack.c.b16 %v1919, %v1911
    %v2152 = vpack.c.b16 %v1920, %v1912
    %v2153 = vpack.c.b16 %v1921, %v1913
    %v2154 = vpack.c.b16 %v1930, %v1922
    %v2155 = vpack.c.b16 %v1931, %v1923
    %v2156 = vpack.c.b16 %v1932, %v1924
    %v2157 = vpack.c.b16 %v1933, %v1925
    %v2158 = vpack.c.b16 %v1934, %v1926
    %v2159 = vpack.c.b16 %v1935, %v1927
    %v2160 = vpack.c.b16 %v1936, %v1928
    %v2161 = vpack.c.b16 %v1937, %v1929
    %v2162 = vpack.c.b16 %v1946, %v1938
    %v2163 = vpack.c.b16 %v1947, %v1939
    %v2164 = vpack.c.b16 %v1948, %v1940
    %v2165 = vpack.c.b16 %v1949, %v1941
    %v2166 = vpack.c.b16 %v1950, %v1942
    %v2167 = vpack.c.b16 %v1951, %v1943
    %v2168 = vpack.c.b16 %v1952, %v1944
    %v2169 = vpack.c.b16 %v1953, %v1945
    %v2170 = vpack.c.b16 %v1962, %v1954
    %v2171 = vpack.c.b16 %v1963, %v1955
    %v2172 = vpack.c.b16 %v1964, %v1956
    %v2173 = vpack.c.b16 %v1965, %v1957
    %v2174 = vpack.c.b16 %v1966, %v1958
    %v2175 = vpack.c.b16 %v1967, %v1959
    %v2176 = vpack.c.b16 %v1968, %v1960
    %v2177 = vpack.c.b16 %v1969, %v1961
    %v2178 = vpack.c.b16 %v1978, %v1970
    %v2179 = vpack.c.b16 %v1979, %v1971
    %v2180 = vpack.c.b16 %v1980, %v1972
    %v2181 = vpack.c.b16 %v1981, %v1973
    %v2182 = vpack.c.b16 %v1982, %v1974
    %v2183 = vpack.c.b16 %v1983, %v1975
    %v2184 = vpack.c.b16 %v1984, %v1976
    %v2185 = vpack.c.b16 %v1985, %v1977
    %v2186 = vpack.c.b16 %v1994, %v1986
    %v2187 = vpack.c.b16 %v1995, %v1987
    %v2188 = vpack.c.b16 %v1996, %v1988
    %v2189 = vpack.c.b16 %v1997, %v1989
    %v2190 = vpack.c.b16 %v1998, %v1990
    %v2191 = vpack.c.b16 %v1999, %v1991
    %v2192 = vpack.c.b16 %v2000, %v1992
    %v2193 = vpack.c.b16 %v2001, %v1993
    %v2194 = vpack.c.b16 %v2010, %v2002
    %v2195 = vpack.c.b16 %v2011, %v2003
    %v2196 = vpack.c.b16 %v2012, %v2004
    %v2197 = vpack.c.b16 %v2013, %v2005
    %v2198 = vpack.c.b16 %v2014, %v2006
    %v2199 = vpack.c.b16 %v2015, %v2007
    %v2200 = vpack.c.b16 %v2016, %v2008
    %v2201 = vpack.c.b16 %v2017, %v2009
    %v2202 = vpack.c.b16 %v2026, %v2018
    %v2203 = vpack.c.b16 %v2027, %v2019
    %v2204 = vpack.c.b16 %v2028, %v2020
    %v2205 = vpack.c.b16 %v2029, %v2021
    %v2206 = vpack.c.b16 %v2030, %v2022
    %v2207 = vpack.c.b16 %v2031, %v2023
    %v2208 = vpack.c.b16 %v2032, %v2024
    %v2209 = vpack.c.b16 %v2033, %v2025
    %v2210 = vpack.c.b16 %v2042, %v2034
    %v2211 = vpack.c.b16 %v2043, %v2035
    %v2212 = vpack.c.b16 %v2044, %v2036
    %v2213 = vpack.c.b16 %v2045, %v2037
    %v2214 = vpack.c.b16 %v2046, %v2038
    %v2215 = vpack.c.b16 %v2047, %v2039
    %v2216 = vpack.c.b16 %v2048, %v2040
    %v2217 = vpack.c.b16 %v2049, %v2041
    %v2218 = vpack.c.b16 %v2058, %v2050
    %v2219 = vpack.c.b16 %v2059, %v2051
    %v2220 = vpack.c.b16 %v2060, %v2052
    %v2221 = vpack.c.b16 %v2061, %v2053
    %v2222 = vpack.c.b16 %v2062, %v2054
    %v2223 = vpack.c.b16 %v2063, %v2055
    %v2224 = vpack.c.b16 %v2064, %v2056
    %v2225 = vpack.c.b16 %v2065, %v2057
    %v2226 = vpack.c.b16 %v2074, %v2066
    %v2227 = vpack.c.b16 %v2075, %v2067
    %v2228 = vpack.c.b16 %v2076, %v2068
    %v2229 = vpack.c.b16 %v2077, %v2069
    %v2230 = vpack.c.b16 %v2078, %v2070
    %v2231 = vpack.c.b16 %v2079, %v2071
    %v2232 = vpack.c.b16 %v2080, %v2072
    %v2233 = vpack.c.b16 %v2081, %v2073
    %v2234 = vpack.c.b16 %v2090, %v2082
    %v2235 = vpack.c.b16 %v2091, %v2083
    %v2236 = vpack.c.b16 %v2092, %v2084
    %v2237 = vpack.c.b16 %v2093, %v2085
    %v2238 = vpack.c.b16 %v2094, %v2086
    %v2239 = vpack.c.b16 %v2095, %v2087
    %v2240 = vpack.c.b16 %v2096, %v2088
    %v2241 = vpack.c.b16 %v2097, %v2089
    %v2242 = vpack.c.b16 %v2106, %v2098
    %v2243 = vpack.c.b16 %v2107, %v2099
    %v2244 = vpack.c.b16 %v2108, %v2100
    %v2245 = vpack.c.b16 %v2109, %v2101
    %v2246 = vpack.c.b16 %v2110, %v2102
    %v2247 = vpack.c.b16 %v2111, %v2103
    %v2248 = vpack.c.b16 %v2112, %v2104
    %v2249 = vpack.c.b16 %v2113, %v2105
    %v2250 = vpack.c.b16 %v2122, %v2114
    %v2251 = vpack.c.b16 %v2123, %v2115
    %v2252 = vpack.c.b16 %v2124, %v2116
    %v2253 = vpack.c.b16 %v2125, %v2117
    %v2254 = vpack.c.b16 %v2126, %v2118
    %v2255 = vpack.c.b16 %v2127, %v2119
    %v2256 = vpack.c.b16 %v2128, %v2120
    %v2257 = vpack.c.b16 %v2129, %v2121
    %2386 = vmatprep.subr.bf16.mxu0 %v2187
    %2387 = vmatpush1.bf16.msra.mxu0 %v2186
    %2388 = vmatprep.subr.bf16.mxu0 %v2179
    %2389 = vmatpush1.bf16.msra.mxu0 %v2178
    %2390 = vmatprep.subr.bf16.mxu0 %v2171
    %2391 = vmatpush1.bf16.msra.mxu0 %v2170
    %2392 = vmatprep.subr.bf16.mxu0 %v2163
    %2393 = vmatpush1.bf16.msra.mxu0 %v2162
    %2394 = vmatprep.subr.bf16.mxu0 %v2155
    %2395 = vmatpush1.bf16.msra.mxu0 %v2154
    %2396 = vmatprep.subr.bf16.mxu0 %v2147
    %2397 = vmatpush1.bf16.msra.mxu0 %v2146
    %2398 = vmatprep.subr.bf16.mxu0 %v2139
    %2399 = vmatpush1.bf16.msra.mxu0 %v2138
    %2400 = vmatprep.subr.bf16.mxu0 %v2131
    %2401 = vmatpush1.bf16.msra.mxu0 %v2130
    %2402 = vmatprep.subr.bf16.mxu0 %v2251
    %2403 = vmatpush2.bf16.msra.mxu0 %v2250
    %2404 = vmatprep.subr.bf16.mxu0 %v2243
    %2405 = vmatpush2.bf16.msra.mxu0 %v2242
    %2406 = vmatprep.subr.bf16.mxu0 %v2235
    %2407 = vmatpush2.bf16.msra.mxu0 %v2234
    %2408 = vmatprep.subr.bf16.mxu0 %v2227
    %2409 = vmatpush2.bf16.msra.mxu0 %v2226
    %2410 = vmatprep.subr.bf16.mxu0 %v2219
    %2411 = vmatpush2.bf16.msra.mxu0 %v2218
    %2412 = vmatprep.subr.bf16.mxu0 %v2211
    %2413 = vmatpush2.bf16.msra.mxu0 %v2210
    %2414 = vmatprep.subr.bf16.mxu0 %v2203
    %2415 = vmatpush2.bf16.msra.mxu0 %v2202
    %2416 = vmatprep.subr.bf16.mxu0 %v2195
    %2417 = vmatpush2.bf16.msra.mxu0 %v2194
    %2418 = vmatprep.mubr.bf16.mxu0 %v1745
    %2419 = vmatmul.mubr.bf16.gmra.mxu0 %v1745
    %v2420 = vpop.f32.mrf.mxu0
    %v2421 = vadd.f32 0.0, %v2420
    %v2422 = vpop.f32.mrf.mxu0
    %v2423 = vadd.f32 0.0, %v2422
    %v2424 = vpop.f32.mrf.mxu0
    %v2425 = vpop.f32.mrf.mxu0
    %2426 = vdwg.mxu0
    %2427 = vmatprep.subr.bf16.mxu0 %v2189
    %2428 = vmatpush1.bf16.msra.mxu0 %v2188
    %2429 = vmatprep.subr.bf16.mxu0 %v2181
    %2430 = vmatpush1.bf16.msra.mxu0 %v2180
    %2431 = vmatprep.subr.bf16.mxu0 %v2173
    %2432 = vmatpush1.bf16.msra.mxu0 %v2172
    %2433 = vmatprep.subr.bf16.mxu0 %v2165
    %2434 = vmatpush1.bf16.msra.mxu0 %v2164
    %2435 = vmatprep.subr.bf16.mxu0 %v2157
    %2436 = vmatpush1.bf16.msra.mxu0 %v2156
    %2437 = vmatprep.subr.bf16.mxu0 %v2149
    %2438 = vmatpush1.bf16.msra.mxu0 %v2148
    %2439 = vmatprep.subr.bf16.mxu0 %v2141
    %2440 = vmatpush1.bf16.msra.mxu0 %v2140
    %2441 = vmatprep.subr.bf16.mxu0 %v2133
    %2442 = vmatpush1.bf16.msra.mxu0 %v2132
    %2443 = vmatprep.subr.bf16.mxu0 %v2253
    %2444 = vmatpush2.bf16.msra.mxu0 %v2252
    %2445 = vmatprep.subr.bf16.mxu0 %v2245
    %2446 = vmatpush2.bf16.msra.mxu0 %v2244
    %2447 = vmatprep.subr.bf16.mxu0 %v2237
    %2448 = vmatpush2.bf16.msra.mxu0 %v2236
    %2449 = vmatprep.subr.bf16.mxu0 %v2229
    %2450 = vmatpush2.bf16.msra.mxu0 %v2228
    %2451 = vmatprep.subr.bf16.mxu0 %v2221
    %2452 = vmatpush2.bf16.msra.mxu0 %v2220
    %2453 = vmatprep.subr.bf16.mxu0 %v2213
    %2454 = vmatpush2.bf16.msra.mxu0 %v2212
    %2455 = vmatprep.subr.bf16.mxu0 %v2205
    %2456 = vmatpush2.bf16.msra.mxu0 %v2204
    %2457 = vmatprep.subr.bf16.mxu0 %v2197
    %2458 = vmatpush2.bf16.msra.mxu0 %v2196
    %2459 = vmatprep.mubr.bf16.mxu0 %v1745
    %2460 = vmatmul.mubr.bf16.gmra.mxu0 %v1745
    %v2461 = vpop.f32.mrf.mxu0
    %v2462 = vadd.f32 0.0, %v2461
    %v2463 = vpop.f32.mrf.mxu0
    %v2464 = vadd.f32 0.0, %v2463
    %v2465 = vpop.f32.mrf.mxu0
    %v2466 = vpop.f32.mrf.mxu0
    %2467 = vdwg.mxu0
    %2468 = vmatprep.subr.bf16.mxu0 %v2191
    %2469 = vmatpush1.bf16.msra.mxu0 %v2190
    %2470 = vmatprep.subr.bf16.mxu0 %v2183
    %2471 = vmatpush1.bf16.msra.mxu0 %v2182
    %2472 = vmatprep.subr.bf16.mxu0 %v2175
    %2473 = vmatpush1.bf16.msra.mxu0 %v2174
    %2474 = vmatprep.subr.bf16.mxu0 %v2167
    %2475 = vmatpush1.bf16.msra.mxu0 %v2166
    %2476 = vmatprep.subr.bf16.mxu0 %v2159
    %2477 = vmatpush1.bf16.msra.mxu0 %v2158
    %2478 = vmatprep.subr.bf16.mxu0 %v2151
    %2479 = vmatpush1.bf16.msra.mxu0 %v2150
    %2480 = vmatprep.subr.bf16.mxu0 %v2143
    %2481 = vmatpush1.bf16.msra.mxu0 %v2142
    %2482 = vmatprep.subr.bf16.mxu0 %v2135
    %2483 = vmatpush1.bf16.msra.mxu0 %v2134
    %2484 = vmatprep.subr.bf16.mxu0 %v2255
    %2485 = vmatpush2.bf16.msra.mxu0 %v2254
    %2486 = vmatprep.subr.bf16.mxu0 %v2247
    %2487 = vmatpush2.bf16.msra.mxu0 %v2246
    %2488 = vmatprep.subr.bf16.mxu0 %v2239
    %2489 = vmatpush2.bf16.msra.mxu0 %v2238
    %2490 = vmatprep.subr.bf16.mxu0 %v2231
    %2491 = vmatpush2.bf16.msra.mxu0 %v2230
    %2492 = vmatprep.subr.bf16.mxu0 %v2223
    %2493 = vmatpush2.bf16.msra.mxu0 %v2222
    %2494 = vmatprep.subr.bf16.mxu0 %v2215
    %2495 = vmatpush2.bf16.msra.mxu0 %v2214
    %2496 = vmatprep.subr.bf16.mxu0 %v2207
    %2497 = vmatpush2.bf16.msra.mxu0 %v2206
    %2498 = vmatprep.subr.bf16.mxu0 %v2199
    %2499 = vmatpush2.bf16.msra.mxu0 %v2198
    %2500 = vmatprep.mubr.bf16.mxu0 %v1745
    %2501 = vmatmul.mubr.bf16.gmra.mxu0 %v1745
    %v2502 = vpop.f32.mrf.mxu0
    %v2503 = vadd.f32 0.0, %v2502
    %v2504 = vpop.f32.mrf.mxu0
    %v2505 = vadd.f32 0.0, %v2504
    %v2506 = vpop.f32.mrf.mxu0
    %v2507 = vpop.f32.mrf.mxu0
    %2508 = vdwg.mxu0
    %2509 = vmatprep.subr.bf16.mxu0 %v2193
    %2510 = vmatpush1.bf16.msra.mxu0 %v2192
    %2511 = vmatprep.subr.bf16.mxu0 %v2185
    %2512 = vmatpush1.bf16.msra.mxu0 %v2184
    %2513 = vmatprep.subr.bf16.mxu0 %v2177
    %2514 = vmatpush1.bf16.msra.mxu0 %v2176
    %2515 = vmatprep.subr.bf16.mxu0 %v2169
    %2516 = vmatpush1.bf16.msra.mxu0 %v2168
    %2517 = vmatprep.subr.bf16.mxu0 %v2161
    %2518 = vmatpush1.bf16.msra.mxu0 %v2160
    %2519 = vmatprep.subr.bf16.mxu0 %v2153
    %2520 = vmatpush1.bf16.msra.mxu0 %v2152
    %2521 = vmatprep.subr.bf16.mxu0 %v2145
    %2522 = vmatpush1.bf16.msra.mxu0 %v2144
    %2523 = vmatprep.subr.bf16.mxu0 %v2137
    %2524 = vmatpush1.bf16.msra.mxu0 %v2136
    %2525 = vmatprep.subr.bf16.mxu0 %v2257
    %2526 = vmatpush2.bf16.msra.mxu0 %v2256
    %2527 = vmatprep.subr.bf16.mxu0 %v2249
    %2528 = vmatpush2.bf16.msra.mxu0 %v2248
    %2529 = vmatprep.subr.bf16.mxu0 %v2241
    %2530 = vmatpush2.bf16.msra.mxu0 %v2240
    %2531 = vmatprep.subr.bf16.mxu0 %v2233
    %2532 = vmatpush2.bf16.msra.mxu0 %v2232
    %2533 = vmatprep.subr.bf16.mxu0 %v2225
    %2534 = vmatpush2.bf16.msra.mxu0 %v2224
    %2535 = vmatprep.subr.bf16.mxu0 %v2217
    %2536 = vmatpush2.bf16.msra.mxu0 %v2216
    %2537 = vmatprep.subr.bf16.mxu0 %v2209
    %2538 = vmatpush2.bf16.msra.mxu0 %v2208
    %2539 = vmatprep.subr.bf16.mxu0 %v2201
    %2540 = vmatpush2.bf16.msra.mxu0 %v2200
    %2541 = vmatprep.mubr.bf16.mxu0 %v1745
    %2542 = vmatmul.mubr.bf16.gmra.mxu0 %v1745
    %v2543 = vpop.f32.mrf.mxu0
    %v2544 = vadd.f32 0.0, %v2543
    %v2545 = vpop.f32.mrf.mxu0
    %v2546 = vadd.f32 0.0, %v2545
    %v2547 = vpop.f32.mrf.mxu0
    %v2548 = vpop.f32.mrf.mxu0
    %2549 = vdwg.mxu0
    %v2550 = vadd.f32 %v2421, %v1351
    %v2551 = vadd.f32 %v2423, %v1353
    %v2552 = vadd.f32 %v2462, %v1437
    %v2553 = vadd.f32 %v2464, %v1439
    %v2558 = vrot.slane %v1527, 6
    %v2559 = vrot.slane %v1529, 6
    %v2560 = vrot.slane %v1613, 6
    %v2561 = vrot.slane %v1615, 6
    %v2566 = vadd.f32 %v2503, %v2558
    %v2567 = vadd.f32 %v2505, %v2559
    %v2568 = vadd.f32 %v2544, %v2560
    %v2569 = vadd.f32 %v2546, %v2561
    %v2570 = vxor.u32 %v2550, 2147483648
    %v2571 = vmul.f32 %v2570, 1.442695
    %v2572 = vpow.pop %v2571
    %v2573 = vadd.f32 %v2572, 1.0
    %v2574 = vrcp.pop %v2573
    %v2575 = vmul.f32 1.0, %v2574
    %v2576 = vxor.u32 %v2551, 2147483648
    %v2577 = vmul.f32 %v2576, 1.442695
    %v2578 = vpow.pop %v2577
    %v2579 = vadd.f32 %v2578, 1.0
    %v2580 = vrcp.pop %v2579
    %v2581 = vmul.f32 1.0, %v2580
    %v2582 = vtanh.pop %v2552
    %v2583 = vxor.u32 %v2553, 2147483648
    %v2584 = vmul.f32 %v2583, 1.442695
    %v2585 = vpow.pop %v2584
    %v2586 = vadd.f32 %v2585, 1.0
    %v2587 = vrcp.pop %v2586
    %v2588 = vmul.f32 1.0, %v2587
    %v2589 = vmul.f32 %v2581, 0.0
    %v2590 = vmul.f32 %v2575, %v2582
    %v2591 = vadd.f32 %v2589, %v2590
    %v2592 = vtanh.pop %v2591
    %v2593 = vmul.f32 %v2588, %v2592
    %v2594 = vxor.u32 %v2566, 2147483648
    %v2595 = vmul.f32 %v2594, 1.442695
    %v2596 = vpow.pop %v2595
    %v2597 = vadd.f32 %v2596, 1.0
    %v2598 = vrcp.pop %v2597
    %v2599 = vmul.f32 1.0, %v2598
    %v2600 = vxor.u32 %v2567, 2147483648
    %v2601 = vmul.f32 %v2600, 1.442695
    %v2602 = vpow.pop %v2601
    %v2603 = vadd.f32 %v2602, 1.0
    %v2604 = vrcp.pop %v2603
    %v2605 = vmul.f32 1.0, %v2604
    %v2606 = vtanh.pop %v2568
    %v2607 = vxor.u32 %v2569, 2147483648
    %v2608 = vmul.f32 %v2607, 1.442695
    %v2609 = vpow.pop %v2608
    %v2610 = vadd.f32 %v2609, 1.0
    %v2611 = vrcp.pop %v2610
    %v2612 = vmul.f32 1.0, %v2611
    %v2613 = vmul.f32 %v2605, 0.0
    %v2614 = vmul.f32 %v2599, %v2606
    %v2615 = vadd.f32 %v2613, %v2614
    %v2616 = vtanh.pop %v2615
    %v2617 = vmul.f32 %v2612, %v2616
    %v2618 = vpack.c.bf16 %v2593, %v2593
    %v2619 = vpack.c.bf16 %v2617, %v2617
    %2620 = vmatprep.subr.bf16.mxu0 %v2187
    %2621 = vmatpush1.bf16.msra.mxu0 %v2186
    %2622 = vmatprep.subr.bf16.mxu0 %v2179
    %2623 = vmatpush1.bf16.msra.mxu0 %v2178
    %2624 = vmatprep.subr.bf16.mxu0 %v2171
    %2625 = vmatpush1.bf16.msra.mxu0 %v2170
    %2626 = vmatprep.subr.bf16.mxu0 %v2163
    %2627 = vmatpush1.bf16.msra.mxu0 %v2162
    %2628 = vmatprep.subr.bf16.mxu0 %v2155
    %2629 = vmatpush1.bf16.msra.mxu0 %v2154
    %2630 = vmatprep.subr.bf16.mxu0 %v2147
    %2631 = vmatpush1.bf16.msra.mxu0 %v2146
    %2632 = vmatprep.subr.bf16.mxu0 %v2139
    %2633 = vmatpush1.bf16.msra.mxu0 %v2138
    %2634 = vmatprep.subr.bf16.mxu0 %v2131
    %2635 = vmatpush1.bf16.msra.mxu0 %v2130
    %2636 = vmatprep.subr.bf16.mxu0 %v2251
    %2637 = vmatpush2.bf16.msra.mxu0 %v2250
    %2638 = vmatprep.subr.bf16.mxu0 %v2243
    %2639 = vmatpush2.bf16.msra.mxu0 %v2242
    %2640 = vmatprep.subr.bf16.mxu0 %v2235
    %2641 = vmatpush2.bf16.msra.mxu0 %v2234
    %2642 = vmatprep.subr.bf16.mxu0 %v2227
    %2643 = vmatpush2.bf16.msra.mxu0 %v2226
    %2644 = vmatprep.subr.bf16.mxu0 %v2219
    %2645 = vmatpush2.bf16.msra.mxu0 %v2218
    %2646 = vmatprep.subr.bf16.mxu0 %v2211
    %2647 = vmatpush2.bf16.msra.mxu0 %v2210
    %2648 = vmatprep.subr.bf16.mxu0 %v2203
    %2649 = vmatpush2.bf16.msra.mxu0 %v2202
    %2650 = vmatprep.subr.bf16.mxu0 %v2195
    %2651 = vmatpush2.bf16.msra.mxu0 %v2194
    %2652 = vmatprep.mubr.bf16.mxu0 %v2619
    %2653 = vmatmul.mubr.bf16.gmra.mxu0 %v2618
    %v2654 = vpop.f32.mrf.mxu0
    %v2655 = vadd.f32 0.0, %v2654
    %v2656 = vpop.f32.mrf.mxu0
    %v2657 = vadd.f32 0.0, %v2656
    %v2658 = vpop.f32.mrf.mxu0
    %v2659 = vpop.f32.mrf.mxu0
    %2660 = vdwg.mxu0
    %2661 = vmatprep.subr.bf16.mxu0 %v2189
    %2662 = vmatpush1.bf16.msra.mxu0 %v2188
    %2663 = vmatprep.subr.bf16.mxu0 %v2181
    %2664 = vmatpush1.bf16.msra.mxu0 %v2180
    %2665 = vmatprep.subr.bf16.mxu0 %v2173
    %2666 = vmatpush1.bf16.msra.mxu0 %v2172
    %2667 = vmatprep.subr.bf16.mxu0 %v2165
    %2668 = vmatpush1.bf16.msra.mxu0 %v2164
    %2669 = vmatprep.subr.bf16.mxu0 %v2157
    %2670 = vmatpush1.bf16.msra.mxu0 %v2156
    %2671 = vmatprep.subr.bf16.mxu0 %v2149
    %2672 = vmatpush1.bf16.msra.mxu0 %v2148
    %2673 = vmatprep.subr.bf16.mxu0 %v2141
    %2674 = vmatpush1.bf16.msra.mxu0 %v2140
    %2675 = vmatprep.subr.bf16.mxu0 %v2133
    %2676 = vmatpush1.bf16.msra.mxu0 %v2132
    %2677 = vmatprep.subr.bf16.mxu0 %v2253
    %2678 = vmatpush2.bf16.msra.mxu0 %v2252
    %2679 = vmatprep.subr.bf16.mxu0 %v2245
    %2680 = vmatpush2.bf16.msra.mxu0 %v2244
    %2681 = vmatprep.subr.bf16.mxu0 %v2237
    %2682 = vmatpush2.bf16.msra.mxu0 %v2236
    %2683 = vmatprep.subr.bf16.mxu0 %v2229
    %2684 = vmatpush2.bf16.msra.mxu0 %v2228
    %2685 = vmatprep.subr.bf16.mxu0 %v2221
    %2686 = vmatpush2.bf16.msra.mxu0 %v2220
    %2687 = vmatprep.subr.bf16.mxu0 %v2213
    %2688 = vmatpush2.bf16.msra.mxu0 %v2212
    %2689 = vmatprep.subr.bf16.mxu0 %v2205
    %2690 = vmatpush2.bf16.msra.mxu0 %v2204
    %2691 = vmatprep.subr.bf16.mxu0 %v2197
    %2692 = vmatpush2.bf16.msra.mxu0 %v2196
    %2693 = vmatprep.mubr.bf16.mxu0 %v2619
    %2694 = vmatmul.mubr.bf16.gmra.mxu0 %v2618
    %v2695 = vpop.f32.mrf.mxu0
    %v2696 = vadd.f32 0.0, %v2695
    %v2697 = vpop.f32.mrf.mxu0
    %v2698 = vadd.f32 0.0, %v2697
    %v2699 = vpop.f32.mrf.mxu0
    %v2700 = vpop.f32.mrf.mxu0
    %2701 = vdwg.mxu0
    %2702 = vmatprep.subr.bf16.mxu0 %v2191
    %2703 = vmatpush1.bf16.msra.mxu0 %v2190
    %2704 = vmatprep.subr.bf16.mxu0 %v2183
    %2705 = vmatpush1.bf16.msra.mxu0 %v2182
    %2706 = vmatprep.subr.bf16.mxu0 %v2175
    %2707 = vmatpush1.bf16.msra.mxu0 %v2174
    %2708 = vmatprep.subr.bf16.mxu0 %v2167
    %2709 = vmatpush1.bf16.msra.mxu0 %v2166
    %2710 = vmatprep.subr.bf16.mxu0 %v2159
    %2711 = vmatpush1.bf16.msra.mxu0 %v2158
    %2712 = vmatprep.subr.bf16.mxu0 %v2151
    %2713 = vmatpush1.bf16.msra.mxu0 %v2150
    %2714 = vmatprep.subr.bf16.mxu0 %v2143
    %2715 = vmatpush1.bf16.msra.mxu0 %v2142
    %2716 = vmatprep.subr.bf16.mxu0 %v2135
    %2717 = vmatpush1.bf16.msra.mxu0 %v2134
    %2718 = vmatprep.subr.bf16.mxu0 %v2255
    %2719 = vmatpush2.bf16.msra.mxu0 %v2254
    %2720 = vmatprep.subr.bf16.mxu0 %v2247
    %2721 = vmatpush2.bf16.msra.mxu0 %v2246
    %2722 = vmatprep.subr.bf16.mxu0 %v2239
    %2723 = vmatpush2.bf16.msra.mxu0 %v2238
    %2724 = vmatprep.subr.bf16.mxu0 %v2231
    %2725 = vmatpush2.bf16.msra.mxu0 %v2230
    %2726 = vmatprep.subr.bf16.mxu0 %v2223
    %2727 = vmatpush2.bf16.msra.mxu0 %v2222
    %2728 = vmatprep.subr.bf16.mxu0 %v2215
    %2729 = vmatpush2.bf16.msra.mxu0 %v2214
    %2730 = vmatprep.subr.bf16.mxu0 %v2207
    %2731 = vmatpush2.bf16.msra.mxu0 %v2206
    %2732 = vmatprep.subr.bf16.mxu0 %v2199
    %2733 = vmatpush2.bf16.msra.mxu0 %v2198
    %2734 = vmatprep.mubr.bf16.mxu0 %v2619
    %2735 = vmatmul.mubr.bf16.gmra.mxu0 %v2618
    %v2736 = vpop.f32.mrf.mxu0
    %v2737 = vadd.f32 0.0, %v2736
    %v2738 = vpop.f32.mrf.mxu0
    %v2739 = vadd.f32 0.0, %v2738
    %v2740 = vpop.f32.mrf.mxu0
    %v2741 = vpop.f32.mrf.mxu0
    %2742 = vdwg.mxu0
    %2743 = vmatprep.subr.bf16.mxu0 %v2193
    %2744 = vmatpush1.bf16.msra.mxu0 %v2192
    %2745 = vmatprep.subr.bf16.mxu0 %v2185
    %2746 = vmatpush1.bf16.msra.mxu0 %v2184
    %2747 = vmatprep.subr.bf16.mxu0 %v2177
    %2748 = vmatpush1.bf16.msra.mxu0 %v2176
    %2749 = vmatprep.subr.bf16.mxu0 %v2169
    %2750 = vmatpush1.bf16.msra.mxu0 %v2168
    %2751 = vmatprep.subr.bf16.mxu0 %v2161
    %2752 = vmatpush1.bf16.msra.mxu0 %v2160
    %2753 = vmatprep.subr.bf16.mxu0 %v2153
    %2754 = vmatpush1.bf16.msra.mxu0 %v2152
    %2755 = vmatprep.subr.bf16.mxu0 %v2145
    %2756 = vmatpush1.bf16.msra.mxu0 %v2144
    %2757 = vmatprep.subr.bf16.mxu0 %v2137
    %2758 = vmatpush1.bf16.msra.mxu0 %v2136
    %2759 = vmatprep.subr.bf16.mxu0 %v2257
    %2760 = vmatpush2.bf16.msra.mxu0 %v2256
    %2761 = vmatprep.subr.bf16.mxu0 %v2249
    %2762 = vmatpush2.bf16.msra.mxu0 %v2248
    %2763 = vmatprep.subr.bf16.mxu0 %v2241
    %2764 = vmatpush2.bf16.msra.mxu0 %v2240
    %2765 = vmatprep.subr.bf16.mxu0 %v2233
    %2766 = vmatpush2.bf16.msra.mxu0 %v2232
    %2767 = vmatprep.subr.bf16.mxu0 %v2225
    %2768 = vmatpush2.bf16.msra.mxu0 %v2224
    %2769 = vmatprep.subr.bf16.mxu0 %v2217
    %2770 = vmatpush2.bf16.msra.mxu0 %v2216
    %2771 = vmatprep.subr.bf16.mxu0 %v2209
    %2772 = vmatpush2.bf16.msra.mxu0 %v2208
    %2773 = vmatprep.subr.bf16.mxu0 %v2201
    %2774 = vmatpush2.bf16.msra.mxu0 %v2200
    %2775 = vmatprep.mubr.bf16.mxu0 %v2619
    %2776 = vmatmul.mubr.bf16.gmra.mxu0 %v2618
    %v2777 = vpop.f32.mrf.mxu0
    %v2778 = vadd.f32 0.0, %v2777
    %v2779 = vpop.f32.mrf.mxu0
    %v2780 = vadd.f32 0.0, %v2779
    %v2781 = vpop.f32.mrf.mxu0
    %v2782 = vpop.f32.mrf.mxu0
    %2783 = vdwg.mxu0
    %v2788 = vrot.slane %v1351, 2
    %v2789 = vrot.slane %v1353, 2
    %v2790 = vrot.slane %v1437, 2
    %v2791 = vrot.slane %v1439, 2
    %v2796 = vadd.f32 %v2655, %v2788
    %v2797 = vadd.f32 %v2657, %v2789
    %v2798 = vadd.f32 %v2696, %v2790
    %v2799 = vadd.f32 %v2698, %v2791
    %v2800 = vrot.slane %v1527, 4
    %v2801 = vrot.slane %v1529, 4
    %v2802 = vrot.slane %v1613, 4
    %v2803 = vrot.slane %v1615, 4
    %v2808 = vadd.f32 %v2737, %v2800
    %v2809 = vadd.f32 %v2739, %v2801
    %v2810 = vadd.f32 %v2778, %v2802
    %v2811 = vadd.f32 %v2780, %v2803
    %v2812 = vxor.u32 %v2796, 2147483648
    %v2813 = vmul.f32 %v2812, 1.442695
    %v2814 = vpow.pop %v2813
    %v2815 = vadd.f32 %v2814, 1.0
    %v2816 = vrcp.pop %v2815
    %v2817 = vmul.f32 1.0, %v2816
    %v2818 = vxor.u32 %v2797, 2147483648
    %v2819 = vmul.f32 %v2818, 1.442695
    %v2820 = vpow.pop %v2819
    %v2821 = vadd.f32 %v2820, 1.0
    %v2822 = vrcp.pop %v2821
    %v2823 = vmul.f32 1.0, %v2822
    %v2824 = vtanh.pop %v2798
    %v2825 = vxor.u32 %v2799, 2147483648
    %v2826 = vmul.f32 %v2825, 1.442695
    %v2827 = vpow.pop %v2826
    %v2828 = vadd.f32 %v2827, 1.0
    %v2829 = vrcp.pop %v2828
    %v2830 = vmul.f32 1.0, %v2829
    %v2831 = vmul.f32 %v2823, %v2591
    %v2832 = vmul.f32 %v2817, %v2824
    %v2833 = vadd.f32 %v2831, %v2832
    %v2834 = vtanh.pop %v2833
    %v2835 = vmul.f32 %v2830, %v2834
    %v2836 = vxor.u32 %v2808, 2147483648
    %v2837 = vmul.f32 %v2836, 1.442695
    %v2838 = vpow.pop %v2837
    %v2839 = vadd.f32 %v2838, 1.0
    %v2840 = vrcp.pop %v2839
    %v2841 = vmul.f32 1.0, %v2840
    %v2842 = vxor.u32 %v2809, 2147483648
    %v2843 = vmul.f32 %v2842, 1.442695
    %v2844 = vpow.pop %v2843
    %v2845 = vadd.f32 %v2844, 1.0
    %v2846 = vrcp.pop %v2845
    %v2847 = vmul.f32 1.0, %v2846
    %v2848 = vtanh.pop %v2810
    %v2849 = vxor.u32 %v2811, 2147483648
    %v2850 = vmul.f32 %v2849, 1.442695
    %v2851 = vpow.pop %v2850
    %v2852 = vadd.f32 %v2851, 1.0
    %v2853 = vrcp.pop %v2852
    %v2854 = vmul.f32 1.0, %v2853
    %v2855 = vmul.f32 %v2847, %v2615
    %v2856 = vmul.f32 %v2841, %v2848
    %v2857 = vadd.f32 %v2855, %v2856
    %v2858 = vtanh.pop %v2857
    %v2859 = vmul.f32 %v2854, %v2858
    %v2860 = vpack.c.bf16 %v2835, %v2835
    %v2861 = vpack.c.bf16 %v2859, %v2859
    %2862 = vmatprep.subr.bf16.mxu0 %v2187
    %2863 = vmatpush1.bf16.msra.mxu0 %v2186
    %2864 = vmatprep.subr.bf16.mxu0 %v2179
    %2865 = vmatpush1.bf16.msra.mxu0 %v2178
    %2866 = vmatprep.subr.bf16.mxu0 %v2171
    %2867 = vmatpush1.bf16.msra.mxu0 %v2170
    %2868 = vmatprep.subr.bf16.mxu0 %v2163
    %2869 = vmatpush1.bf16.msra.mxu0 %v2162
    %2870 = vmatprep.subr.bf16.mxu0 %v2155
    %2871 = vmatpush1.bf16.msra.mxu0 %v2154
    %2872 = vmatprep.subr.bf16.mxu0 %v2147
    %2873 = vmatpush1.bf16.msra.mxu0 %v2146
    %2874 = vmatprep.subr.bf16.mxu0 %v2139
    %2875 = vmatpush1.bf16.msra.mxu0 %v2138
    %2876 = vmatprep.subr.bf16.mxu0 %v2131
    %2877 = vmatpush1.bf16.msra.mxu0 %v2130
    %2878 = vmatprep.subr.bf16.mxu0 %v2251
    %2879 = vmatpush2.bf16.msra.mxu0 %v2250
    %2880 = vmatprep.subr.bf16.mxu0 %v2243
    %2881 = vmatpush2.bf16.msra.mxu0 %v2242
    %2882 = vmatprep.subr.bf16.mxu0 %v2235
    %2883 = vmatpush2.bf16.msra.mxu0 %v2234
    %2884 = vmatprep.subr.bf16.mxu0 %v2227
    %2885 = vmatpush2.bf16.msra.mxu0 %v2226
    %2886 = vmatprep.subr.bf16.mxu0 %v2219
    %2887 = vmatpush2.bf16.msra.mxu0 %v2218
    %2888 = vmatprep.subr.bf16.mxu0 %v2211
    %2889 = vmatpush2.bf16.msra.mxu0 %v2210
    %2890 = vmatprep.subr.bf16.mxu0 %v2203
    %2891 = vmatpush2.bf16.msra.mxu0 %v2202
    %2892 = vmatprep.subr.bf16.mxu0 %v2195
    %2893 = vmatpush2.bf16.msra.mxu0 %v2194
    %2894 = vmatprep.mubr.bf16.mxu0 %v2861
    %2895 = vmatmul.mubr.bf16.gmra.mxu0 %v2860
    %v2896 = vpop.f32.mrf.mxu0
    %v2897 = vadd.f32 0.0, %v2896
    %v2898 = vpop.f32.mrf.mxu0
    %v2899 = vadd.f32 0.0, %v2898
    %v2900 = vpop.f32.mrf.mxu0
    %v2901 = vpop.f32.mrf.mxu0
    %2902 = vdwg.mxu0
    %2903 = vmatprep.subr.bf16.mxu0 %v2189
    %2904 = vmatpush1.bf16.msra.mxu0 %v2188
    %2905 = vmatprep.subr.bf16.mxu0 %v2181
    %2906 = vmatpush1.bf16.msra.mxu0 %v2180
    %2907 = vmatprep.subr.bf16.mxu0 %v2173
    %2908 = vmatpush1.bf16.msra.mxu0 %v2172
    %2909 = vmatprep.subr.bf16.mxu0 %v2165
    %2910 = vmatpush1.bf16.msra.mxu0 %v2164
    %2911 = vmatprep.subr.bf16.mxu0 %v2157
    %2912 = vmatpush1.bf16.msra.mxu0 %v2156
    %2913 = vmatprep.subr.bf16.mxu0 %v2149
    %2914 = vmatpush1.bf16.msra.mxu0 %v2148
    %2915 = vmatprep.subr.bf16.mxu0 %v2141
    %2916 = vmatpush1.bf16.msra.mxu0 %v2140
    %2917 = vmatprep.subr.bf16.mxu0 %v2133
    %2918 = vmatpush1.bf16.msra.mxu0 %v2132
    %2919 = vmatprep.subr.bf16.mxu0 %v2253
    %2920 = vmatpush2.bf16.msra.mxu0 %v2252
    %2921 = vmatprep.subr.bf16.mxu0 %v2245
    %2922 = vmatpush2.bf16.msra.mxu0 %v2244
    %2923 = vmatprep.subr.bf16.mxu0 %v2237
    %2924 = vmatpush2.bf16.msra.mxu0 %v2236
    %2925 = vmatprep.subr.bf16.mxu0 %v2229
    %2926 = vmatpush2.bf16.msra.mxu0 %v2228
    %2927 = vmatprep.subr.bf16.mxu0 %v2221
    %2928 = vmatpush2.bf16.msra.mxu0 %v2220
    %2929 = vmatprep.subr.bf16.mxu0 %v2213
    %2930 = vmatpush2.bf16.msra.mxu0 %v2212
    %2931 = vmatprep.subr.bf16.mxu0 %v2205
    %2932 = vmatpush2.bf16.msra.mxu0 %v2204
    %2933 = vmatprep.subr.bf16.mxu0 %v2197
    %2934 = vmatpush2.bf16.msra.mxu0 %v2196
    %2935 = vmatprep.mubr.bf16.mxu0 %v2861
    %2936 = vmatmul.mubr.bf16.gmra.mxu0 %v2860
    %v2937 = vpop.f32.mrf.mxu0
    %v2938 = vadd.f32 0.0, %v2937
    %v2939 = vpop.f32.mrf.mxu0
    %v2940 = vadd.f32 0.0, %v2939
    %v2941 = vpop.f32.mrf.mxu0
    %v2942 = vpop.f32.mrf.mxu0
    %2943 = vdwg.mxu0
    %2944 = vmatprep.subr.bf16.mxu0 %v2191
    %2945 = vmatpush1.bf16.msra.mxu0 %v2190
    %2946 = vmatprep.subr.bf16.mxu0 %v2183
    %2947 = vmatpush1.bf16.msra.mxu0 %v2182
    %2948 = vmatprep.subr.bf16.mxu0 %v2175
    %2949 = vmatpush1.bf16.msra.mxu0 %v2174
    %2950 = vmatprep.subr.bf16.mxu0 %v2167
    %2951 = vmatpush1.bf16.msra.mxu0 %v2166
    %2952 = vmatprep.subr.bf16.mxu0 %v2159
    %2953 = vmatpush1.bf16.msra.mxu0 %v2158
    %2954 = vmatprep.subr.bf16.mxu0 %v2151
    %2955 = vmatpush1.bf16.msra.mxu0 %v2150
    %2956 = vmatprep.subr.bf16.mxu0 %v2143
    %2957 = vmatpush1.bf16.msra.mxu0 %v2142
    %2958 = vmatprep.subr.bf16.mxu0 %v2135
    %2959 = vmatpush1.bf16.msra.mxu0 %v2134
    %2960 = vmatprep.subr.bf16.mxu0 %v2255
    %2961 = vmatpush2.bf16.msra.mxu0 %v2254
    %2962 = vmatprep.subr.bf16.mxu0 %v2247
    %2963 = vmatpush2.bf16.msra.mxu0 %v2246
    %2964 = vmatprep.subr.bf16.mxu0 %v2239
    %2965 = vmatpush2.bf16.msra.mxu0 %v2238
    %2966 = vmatprep.subr.bf16.mxu0 %v2231
    %2967 = vmatpush2.bf16.msra.mxu0 %v2230
    %2968 = vmatprep.subr.bf16.mxu0 %v2223
    %2969 = vmatpush2.bf16.msra.mxu0 %v2222
    %2970 = vmatprep.subr.bf16.mxu0 %v2215
    %2971 = vmatpush2.bf16.msra.mxu0 %v2214
    %2972 = vmatprep.subr.bf16.mxu0 %v2207
    %2973 = vmatpush2.bf16.msra.mxu0 %v2206
    %2974 = vmatprep.subr.bf16.mxu0 %v2199
    %2975 = vmatpush2.bf16.msra.mxu0 %v2198
    %2976 = vmatprep.mubr.bf16.mxu0 %v2861
    %2977 = vmatmul.mubr.bf16.gmra.mxu0 %v2860
    %v2978 = vpop.f32.mrf.mxu0
    %v2979 = vadd.f32 0.0, %v2978
    %v2980 = vpop.f32.mrf.mxu0
    %v2981 = vadd.f32 0.0, %v2980
    %v2982 = vpop.f32.mrf.mxu0
    %v2983 = vpop.f32.mrf.mxu0
    %2984 = vdwg.mxu0
    %2985 = vmatprep.subr.bf16.mxu0 %v2193
    %2986 = vmatpush1.bf16.msra.mxu0 %v2192
    %2987 = vmatprep.subr.bf16.mxu0 %v2185
    %2988 = vmatpush1.bf16.msra.mxu0 %v2184
    %2989 = vmatprep.subr.bf16.mxu0 %v2177
    %2990 = vmatpush1.bf16.msra.mxu0 %v2176
    %2991 = vmatprep.subr.bf16.mxu0 %v2169
    %2992 = vmatpush1.bf16.msra.mxu0 %v2168
    %2993 = vmatprep.subr.bf16.mxu0 %v2161
    %2994 = vmatpush1.bf16.msra.mxu0 %v2160
    %2995 = vmatprep.subr.bf16.mxu0 %v2153
    %2996 = vmatpush1.bf16.msra.mxu0 %v2152
    %2997 = vmatprep.subr.bf16.mxu0 %v2145
    %2998 = vmatpush1.bf16.msra.mxu0 %v2144
    %2999 = vmatprep.subr.bf16.mxu0 %v2137
    %3000 = vmatpush1.bf16.msra.mxu0 %v2136
    %3001 = vmatprep.subr.bf16.mxu0 %v2257
    %3002 = vmatpush2.bf16.msra.mxu0 %v2256
    %3003 = vmatprep.subr.bf16.mxu0 %v2249
    %3004 = vmatpush2.bf16.msra.mxu0 %v2248
    %3005 = vmatprep.subr.bf16.mxu0 %v2241
    %3006 = vmatpush2.bf16.msra.mxu0 %v2240
    %3007 = vmatprep.subr.bf16.mxu0 %v2233
    %3008 = vmatpush2.bf16.msra.mxu0 %v2232
    %3009 = vmatprep.subr.bf16.mxu0 %v2225
    %3010 = vmatpush2.bf16.msra.mxu0 %v2224
    %3011 = vmatprep.subr.bf16.mxu0 %v2217
    %3012 = vmatpush2.bf16.msra.mxu0 %v2216
    %3013 = vmatprep.subr.bf16.mxu0 %v2209
    %3014 = vmatpush2.bf16.msra.mxu0 %v2208
    %3015 = vmatprep.subr.bf16.mxu0 %v2201
    %3016 = vmatpush2.bf16.msra.mxu0 %v2200
    %3017 = vmatprep.mubr.bf16.mxu0 %v2861
    %3018 = vmatmul.mubr.bf16.gmra.mxu0 %v2860
    %v3019 = vpop.f32.mrf.mxu0
    %v3020 = vadd.f32 0.0, %v3019
    %v3021 = vpop.f32.mrf.mxu0
    %v3022 = vadd.f32 0.0, %v3021
    %v3023 = vpop.f32.mrf.mxu0
    %v3024 = vpop.f32.mrf.mxu0
    %3025 = vdwg.mxu0
    %v3026 = vrot.slane %v1351, 4
    %v3027 = vrot.slane %v1353, 4
    %v3028 = vrot.slane %v1437, 4
    %v3029 = vrot.slane %v1439, 4
    %v3034 = vadd.f32 %v2897, %v3026
    %v3035 = vadd.f32 %v2899, %v3027
    %v3036 = vadd.f32 %v2938, %v3028
    %v3037 = vadd.f32 %v2940, %v3029
    %v3038 = vrot.slane %v1527, 2
    %v3039 = vrot.slane %v1529, 2
    %v3040 = vrot.slane %v1613, 2
    %v3041 = vrot.slane %v1615, 2
    %v3046 = vadd.f32 %v2979, %v3038
    %v3047 = vadd.f32 %v2981, %v3039
    %v3048 = vadd.f32 %v3020, %v3040
    %v3049 = vadd.f32 %v3022, %v3041
    %v3050 = vxor.u32 %v3034, 2147483648
    %v3051 = vmul.f32 %v3050, 1.442695
    %v3052 = vpow.pop %v3051
    %v3053 = vadd.f32 %v3052, 1.0
    %v3054 = vrcp.pop %v3053
    %v3055 = vmul.f32 1.0, %v3054
    %v3056 = vxor.u32 %v3035, 2147483648
    %v3057 = vmul.f32 %v3056, 1.442695
    %v3058 = vpow.pop %v3057
    %v3059 = vadd.f32 %v3058, 1.0
    %v3060 = vrcp.pop %v3059
    %v3061 = vmul.f32 1.0, %v3060
    %v3062 = vtanh.pop %v3036
    %v3063 = vxor.u32 %v3037, 2147483648
    %v3064 = vmul.f32 %v3063, 1.442695
    %v3065 = vpow.pop %v3064
    %v3066 = vadd.f32 %v3065, 1.0
    %v3067 = vrcp.pop %v3066
    %v3068 = vmul.f32 1.0, %v3067
    %v3069 = vmul.f32 %v3061, %v2833
    %v3070 = vmul.f32 %v3055, %v3062
    %v3071 = vadd.f32 %v3069, %v3070
    %v3072 = vtanh.pop %v3071
    %v3073 = vmul.f32 %v3068, %v3072
    %v3074 = vxor.u32 %v3046, 2147483648
    %v3075 = vmul.f32 %v3074, 1.442695
    %v3076 = vpow.pop %v3075
    %v3077 = vadd.f32 %v3076, 1.0
    %v3078 = vrcp.pop %v3077
    %v3079 = vmul.f32 1.0, %v3078
    %v3080 = vxor.u32 %v3047, 2147483648
    %v3081 = vmul.f32 %v3080, 1.442695
    %v3082 = vpow.pop %v3081
    %v3083 = vadd.f32 %v3082, 1.0
    %v3084 = vrcp.pop %v3083
    %v3085 = vmul.f32 1.0, %v3084
    %v3086 = vtanh.pop %v3048
    %v3087 = vxor.u32 %v3049, 2147483648
    %v3088 = vmul.f32 %v3087, 1.442695
    %v3089 = vpow.pop %v3088
    %v3090 = vadd.f32 %v3089, 1.0
    %v3091 = vrcp.pop %v3090
    %v3092 = vmul.f32 1.0, %v3091
    %v3093 = vmul.f32 %v3085, %v2857
    %v3094 = vmul.f32 %v3079, %v3086
    %v3095 = vadd.f32 %v3093, %v3094
    %v3096 = vtanh.pop %v3095
    %v3097 = vmul.f32 %v3092, %v3096
    %v3098 = vpack.c.bf16 %v3073, %v3073
    %v3099 = vpack.c.bf16 %v3097, %v3097
    %3100 = vmatprep.subr.bf16.mxu0 %v2187
    %3101 = vmatpush1.bf16.msra.mxu0 %v2186
    %3102 = vmatprep.subr.bf16.mxu0 %v2179
    %3103 = vmatpush1.bf16.msra.mxu0 %v2178
    %3104 = vmatprep.subr.bf16.mxu0 %v2171
    %3105 = vmatpush1.bf16.msra.mxu0 %v2170
    %3106 = vmatprep.subr.bf16.mxu0 %v2163
    %3107 = vmatpush1.bf16.msra.mxu0 %v2162
    %3108 = vmatprep.subr.bf16.mxu0 %v2155
    %3109 = vmatpush1.bf16.msra.mxu0 %v2154
    %3110 = vmatprep.subr.bf16.mxu0 %v2147
    %3111 = vmatpush1.bf16.msra.mxu0 %v2146
    %3112 = vmatprep.subr.bf16.mxu0 %v2139
    %3113 = vmatpush1.bf16.msra.mxu0 %v2138
    %3114 = vmatprep.subr.bf16.mxu0 %v2131
    %3115 = vmatpush1.bf16.msra.mxu0 %v2130
    %3116 = vmatprep.subr.bf16.mxu0 %v2251
    %3117 = vmatpush2.bf16.msra.mxu0 %v2250
    %3118 = vmatprep.subr.bf16.mxu0 %v2243
    %3119 = vmatpush2.bf16.msra.mxu0 %v2242
    %3120 = vmatprep.subr.bf16.mxu0 %v2235
    %3121 = vmatpush2.bf16.msra.mxu0 %v2234
    %3122 = vmatprep.subr.bf16.mxu0 %v2227
    %3123 = vmatpush2.bf16.msra.mxu0 %v2226
    %3124 = vmatprep.subr.bf16.mxu0 %v2219
    %3125 = vmatpush2.bf16.msra.mxu0 %v2218
    %3126 = vmatprep.subr.bf16.mxu0 %v2211
    %3127 = vmatpush2.bf16.msra.mxu0 %v2210
    %3128 = vmatprep.subr.bf16.mxu0 %v2203
    %3129 = vmatpush2.bf16.msra.mxu0 %v2202
    %3130 = vmatprep.subr.bf16.mxu0 %v2195
    %3131 = vmatpush2.bf16.msra.mxu0 %v2194
    %3132 = vmatprep.mubr.bf16.mxu0 %v3099
    %3133 = vmatmul.mubr.bf16.gmra.mxu0 %v3098
    %v3134 = vpop.f32.mrf.mxu0
    %v3135 = vadd.f32 0.0, %v3134
    %v3136 = vpop.f32.mrf.mxu0
    %v3137 = vadd.f32 0.0, %v3136
    %v3138 = vpop.f32.mrf.mxu0
    %v3139 = vpop.f32.mrf.mxu0
    %3140 = vdwg.mxu0
    %3141 = vmatprep.subr.bf16.mxu0 %v2189
    %3142 = vmatpush1.bf16.msra.mxu0 %v2188
    %3143 = vmatprep.subr.bf16.mxu0 %v2181
    %3144 = vmatpush1.bf16.msra.mxu0 %v2180
    %3145 = vmatprep.subr.bf16.mxu0 %v2173
    %3146 = vmatpush1.bf16.msra.mxu0 %v2172
    %3147 = vmatprep.subr.bf16.mxu0 %v2165
    %3148 = vmatpush1.bf16.msra.mxu0 %v2164
    %3149 = vmatprep.subr.bf16.mxu0 %v2157
    %3150 = vmatpush1.bf16.msra.mxu0 %v2156
    %3151 = vmatprep.subr.bf16.mxu0 %v2149
    %3152 = vmatpush1.bf16.msra.mxu0 %v2148
    %3153 = vmatprep.subr.bf16.mxu0 %v2141
    %3154 = vmatpush1.bf16.msra.mxu0 %v2140
    %3155 = vmatprep.subr.bf16.mxu0 %v2133
    %3156 = vmatpush1.bf16.msra.mxu0 %v2132
    %3157 = vmatprep.subr.bf16.mxu0 %v2253
    %3158 = vmatpush2.bf16.msra.mxu0 %v2252
    %3159 = vmatprep.subr.bf16.mxu0 %v2245
    %3160 = vmatpush2.bf16.msra.mxu0 %v2244
    %3161 = vmatprep.subr.bf16.mxu0 %v2237
    %3162 = vmatpush2.bf16.msra.mxu0 %v2236
    %3163 = vmatprep.subr.bf16.mxu0 %v2229
    %3164 = vmatpush2.bf16.msra.mxu0 %v2228
    %3165 = vmatprep.subr.bf16.mxu0 %v2221
    %3166 = vmatpush2.bf16.msra.mxu0 %v2220
    %3167 = vmatprep.subr.bf16.mxu0 %v2213
    %3168 = vmatpush2.bf16.msra.mxu0 %v2212
    %3169 = vmatprep.subr.bf16.mxu0 %v2205
    %3170 = vmatpush2.bf16.msra.mxu0 %v2204
    %3171 = vmatprep.subr.bf16.mxu0 %v2197
    %3172 = vmatpush2.bf16.msra.mxu0 %v2196
    %3173 = vmatprep.mubr.bf16.mxu0 %v3099
    %3174 = vmatmul.mubr.bf16.gmra.mxu0 %v3098
    %v3175 = vpop.f32.mrf.mxu0
    %v3176 = vadd.f32 0.0, %v3175
    %v3177 = vpop.f32.mrf.mxu0
    %v3178 = vadd.f32 0.0, %v3177
    %v3179 = vpop.f32.mrf.mxu0
    %v3180 = vpop.f32.mrf.mxu0
    %3181 = vdwg.mxu0
    %3182 = vmatprep.subr.bf16.mxu0 %v2191
    %3183 = vmatpush1.bf16.msra.mxu0 %v2190
    %3184 = vmatprep.subr.bf16.mxu0 %v2183
    %3185 = vmatpush1.bf16.msra.mxu0 %v2182
    %3186 = vmatprep.subr.bf16.mxu0 %v2175
    %3187 = vmatpush1.bf16.msra.mxu0 %v2174
    %3188 = vmatprep.subr.bf16.mxu0 %v2167
    %3189 = vmatpush1.bf16.msra.mxu0 %v2166
    %3190 = vmatprep.subr.bf16.mxu0 %v2159
    %3191 = vmatpush1.bf16.msra.mxu0 %v2158
    %3192 = vmatprep.subr.bf16.mxu0 %v2151
    %3193 = vmatpush1.bf16.msra.mxu0 %v2150
    %3194 = vmatprep.subr.bf16.mxu0 %v2143
    %3195 = vmatpush1.bf16.msra.mxu0 %v2142
    %3196 = vmatprep.subr.bf16.mxu0 %v2135
    %3197 = vmatpush1.bf16.msra.mxu0 %v2134
    %3198 = vmatprep.subr.bf16.mxu0 %v2255
    %3199 = vmatpush2.bf16.msra.mxu0 %v2254
    %3200 = vmatprep.subr.bf16.mxu0 %v2247
    %3201 = vmatpush2.bf16.msra.mxu0 %v2246
    %3202 = vmatprep.subr.bf16.mxu0 %v2239
    %3203 = vmatpush2.bf16.msra.mxu0 %v2238
    %3204 = vmatprep.subr.bf16.mxu0 %v2231
    %3205 = vmatpush2.bf16.msra.mxu0 %v2230
    %3206 = vmatprep.subr.bf16.mxu0 %v2223
    %3207 = vmatpush2.bf16.msra.mxu0 %v2222
    %3208 = vmatprep.subr.bf16.mxu0 %v2215
    %3209 = vmatpush2.bf16.msra.mxu0 %v2214
    %3210 = vmatprep.subr.bf16.mxu0 %v2207
    %3211 = vmatpush2.bf16.msra.mxu0 %v2206
    %3212 = vmatprep.subr.bf16.mxu0 %v2199
    %3213 = vmatpush2.bf16.msra.mxu0 %v2198
    %3214 = vmatprep.mubr.bf16.mxu0 %v3099
    %3215 = vmatmul.mubr.bf16.gmra.mxu0 %v3098
    %v3216 = vpop.f32.mrf.mxu0
    %v3217 = vadd.f32 0.0, %v3216
    %v3218 = vpop.f32.mrf.mxu0
    %v3219 = vadd.f32 0.0, %v3218
    %v3220 = vpop.f32.mrf.mxu0
    %v3221 = vpop.f32.mrf.mxu0
    %3222 = vdwg.mxu0
    %3223 = vmatprep.subr.bf16.mxu0 %v2193
    %3224 = vmatpush1.bf16.msra.mxu0 %v2192
    %3225 = vmatprep.subr.bf16.mxu0 %v2185
    %3226 = vmatpush1.bf16.msra.mxu0 %v2184
    %3227 = vmatprep.subr.bf16.mxu0 %v2177
    %3228 = vmatpush1.bf16.msra.mxu0 %v2176
    %3229 = vmatprep.subr.bf16.mxu0 %v2169
    %3230 = vmatpush1.bf16.msra.mxu0 %v2168
    %3231 = vmatprep.subr.bf16.mxu0 %v2161
    %3232 = vmatpush1.bf16.msra.mxu0 %v2160
    %3233 = vmatprep.subr.bf16.mxu0 %v2153
    %3234 = vmatpush1.bf16.msra.mxu0 %v2152
    %3235 = vmatprep.subr.bf16.mxu0 %v2145
    %3236 = vmatpush1.bf16.msra.mxu0 %v2144
    %3237 = vmatprep.subr.bf16.mxu0 %v2137
    %3238 = vmatpush1.bf16.msra.mxu0 %v2136
    %3239 = vmatprep.subr.bf16.mxu0 %v2257
    %3240 = vmatpush2.bf16.msra.mxu0 %v2256
    %3241 = vmatprep.subr.bf16.mxu0 %v2249
    %3242 = vmatpush2.bf16.msra.mxu0 %v2248
    %3243 = vmatprep.subr.bf16.mxu0 %v2241
    %3244 = vmatpush2.bf16.msra.mxu0 %v2240
    %3245 = vmatprep.subr.bf16.mxu0 %v2233
    %3246 = vmatpush2.bf16.msra.mxu0 %v2232
    %3247 = vmatprep.subr.bf16.mxu0 %v2225
    %3248 = vmatpush2.bf16.msra.mxu0 %v2224
    %3249 = vmatprep.subr.bf16.mxu0 %v2217
    %3250 = vmatpush2.bf16.msra.mxu0 %v2216
    %3251 = vmatprep.subr.bf16.mxu0 %v2209
    %3252 = vmatpush2.bf16.msra.mxu0 %v2208
    %3253 = vmatprep.subr.bf16.mxu0 %v2201
    %3254 = vmatpush2.bf16.msra.mxu0 %v2200
    %3255 = vmatprep.mubr.bf16.mxu0 %v3099
    %3256 = vmatmul.mubr.bf16.gmra.mxu0 %v3098
    %v3257 = vpop.f32.mrf.mxu0
    %v3258 = vadd.f32 0.0, %v3257
    %v3259 = vpop.f32.mrf.mxu0
    %v3260 = vadd.f32 0.0, %v3259
    %v3261 = vpop.f32.mrf.mxu0
    %v3262 = vpop.f32.mrf.mxu0
    %3263 = vdwg.mxu0
    %v3264 = vrot.slane %v1351, 6
    %v3265 = vrot.slane %v1353, 6
    %v3266 = vrot.slane %v1437, 6
    %v3267 = vrot.slane %v1439, 6
    %v3272 = vadd.f32 %v3135, %v3264
    %v3273 = vadd.f32 %v3137, %v3265
    %v3274 = vadd.f32 %v3176, %v3266
    %v3275 = vadd.f32 %v3178, %v3267
    %v3276 = vadd.f32 %v3217, %v1527
    %v3277 = vadd.f32 %v3219, %v1529
    %v3278 = vadd.f32 %v3258, %v1613
    %v3279 = vadd.f32 %v3260, %v1615
    %v3280 = vxor.u32 %v3272, 2147483648
    %v3281 = vmul.f32 %v3280, 1.442695
    %v3282 = vpow.pop %v3281
    %v3283 = vadd.f32 %v3282, 1.0
    %v3284 = vrcp.pop %v3283
    %v3285 = vmul.f32 1.0, %v3284
    %v3286 = vxor.u32 %v3273, 2147483648
    %v3287 = vmul.f32 %v3286, 1.442695
    %v3288 = vpow.pop %v3287
    %v3289 = vadd.f32 %v3288, 1.0
    %v3290 = vrcp.pop %v3289
    %v3291 = vmul.f32 1.0, %v3290
    %v3292 = vtanh.pop %v3274
    %v3293 = vxor.u32 %v3275, 2147483648
    %v3294 = vmul.f32 %v3293, 1.442695
    %v3295 = vpow.pop %v3294
    %v3296 = vadd.f32 %v3295, 1.0
    %v3297 = vrcp.pop %v3296
    %v3298 = vmul.f32 1.0, %v3297
    %v3299 = vmul.f32 %v3291, %v3071
    %v3300 = vmul.f32 %v3285, %v3292
    %v3301 = vadd.f32 %v3299, %v3300
    %v3302 = vtanh.pop %v3301
    %v3303 = vmul.f32 %v3298, %v3302
    %v3304 = vxor.u32 %v3276, 2147483648
    %v3305 = vmul.f32 %v3304, 1.442695
    %v3306 = vpow.pop %v3305
    %v3307 = vadd.f32 %v3306, 1.0
    %v3308 = vrcp.pop %v3307
    %v3309 = vmul.f32 1.0, %v3308
    %v3310 = vxor.u32 %v3277, 2147483648
    %v3311 = vmul.f32 %v3310, 1.442695
    %v3312 = vpow.pop %v3311
    %v3313 = vadd.f32 %v3312, 1.0
    %v3314 = vrcp.pop %v3313
    %v3315 = vmul.f32 1.0, %v3314
    %v3316 = vtanh.pop %v3278
    %v3317 = vxor.u32 %v3279, 2147483648
    %v3318 = vmul.f32 %v3317, 1.442695
    %v3319 = vpow.pop %v3318
    %v3320 = vadd.f32 %v3319, 1.0
    %v3321 = vrcp.pop %v3320
    %v3322 = vmul.f32 1.0, %v3321
    %v3323 = vmul.f32 %v3315, %v3095
    %v3324 = vmul.f32 %v3309, %v3316
    %v3325 = vadd.f32 %v3323, %v3324
    %v3326 = vtanh.pop %v3325
    %v3327 = vmul.f32 %v3322, %v3326
    %v3328 = vpack.c.bf16 %v3303, %v3303
    %v3329 = vpack.c.bf16 %v3327, %v3327
    %3330 = vmatprep.subr.bf16.mxu0 %v2187
    %3331 = vmatpush1.bf16.msra.mxu0 %v2186
    %3332 = vmatprep.subr.bf16.mxu0 %v2179
    %3333 = vmatpush1.bf16.msra.mxu0 %v2178
    %3334 = vmatprep.subr.bf16.mxu0 %v2171
    %3335 = vmatpush1.bf16.msra.mxu0 %v2170
    %3336 = vmatprep.subr.bf16.mxu0 %v2163
    %3337 = vmatpush1.bf16.msra.mxu0 %v2162
    %3338 = vmatprep.subr.bf16.mxu0 %v2155
    %3339 = vmatpush1.bf16.msra.mxu0 %v2154
    %3340 = vmatprep.subr.bf16.mxu0 %v2147
    %3341 = vmatpush1.bf16.msra.mxu0 %v2146
    %3342 = vmatprep.subr.bf16.mxu0 %v2139
    %3343 = vmatpush1.bf16.msra.mxu0 %v2138
    %3344 = vmatprep.subr.bf16.mxu0 %v2131
    %3345 = vmatpush1.bf16.msra.mxu0 %v2130
    %3346 = vmatprep.subr.bf16.mxu0 %v2251
    %3347 = vmatpush2.bf16.msra.mxu0 %v2250
    %3348 = vmatprep.subr.bf16.mxu0 %v2243
    %3349 = vmatpush2.bf16.msra.mxu0 %v2242
    %3350 = vmatprep.subr.bf16.mxu0 %v2235
    %3351 = vmatpush2.bf16.msra.mxu0 %v2234
    %3352 = vmatprep.subr.bf16.mxu0 %v2227
    %3353 = vmatpush2.bf16.msra.mxu0 %v2226
    %3354 = vmatprep.subr.bf16.mxu0 %v2219
    %3355 = vmatpush2.bf16.msra.mxu0 %v2218
    %3356 = vmatprep.subr.bf16.mxu0 %v2211
    %3357 = vmatpush2.bf16.msra.mxu0 %v2210
    %3358 = vmatprep.subr.bf16.mxu0 %v2203
    %3359 = vmatpush2.bf16.msra.mxu0 %v2202
    %3360 = vmatprep.subr.bf16.mxu0 %v2195
    %3361 = vmatpush2.bf16.msra.mxu0 %v2194
    %3362 = vmatprep.mubr.bf16.mxu0 %v3329
    %3363 = vmatmul.mubr.bf16.gmra.mxu0 %v3328
    %v3364 = vpop.f32.mrf.mxu0
    %v3365 = vadd.f32 0.0, %v3364
    %v3366 = vpop.f32.mrf.mxu0
    %v3367 = vadd.f32 0.0, %v3366
    %v3368 = vpop.f32.mrf.mxu0
    %v3369 = vpop.f32.mrf.mxu0
    %3370 = vdwg.mxu0
    %3371 = vmatprep.subr.bf16.mxu0 %v2189
    %3372 = vmatpush1.bf16.msra.mxu0 %v2188
    %3373 = vmatprep.subr.bf16.mxu0 %v2181
    %3374 = vmatpush1.bf16.msra.mxu0 %v2180
    %3375 = vmatprep.subr.bf16.mxu0 %v2173
    %3376 = vmatpush1.bf16.msra.mxu0 %v2172
    %3377 = vmatprep.subr.bf16.mxu0 %v2165
    %3378 = vmatpush1.bf16.msra.mxu0 %v2164
    %3379 = vmatprep.subr.bf16.mxu0 %v2157
    %3380 = vmatpush1.bf16.msra.mxu0 %v2156
    %3381 = vmatprep.subr.bf16.mxu0 %v2149
    %3382 = vmatpush1.bf16.msra.mxu0 %v2148
    %3383 = vmatprep.subr.bf16.mxu0 %v2141
    %3384 = vmatpush1.bf16.msra.mxu0 %v2140
    %3385 = vmatprep.subr.bf16.mxu0 %v2133
    %3386 = vmatpush1.bf16.msra.mxu0 %v2132
    %3387 = vmatprep.subr.bf16.mxu0 %v2253
    %3388 = vmatpush2.bf16.msra.mxu0 %v2252
    %3389 = vmatprep.subr.bf16.mxu0 %v2245
    %3390 = vmatpush2.bf16.msra.mxu0 %v2244
    %3391 = vmatprep.subr.bf16.mxu0 %v2237
    %3392 = vmatpush2.bf16.msra.mxu0 %v2236
    %3393 = vmatprep.subr.bf16.mxu0 %v2229
    %3394 = vmatpush2.bf16.msra.mxu0 %v2228
    %3395 = vmatprep.subr.bf16.mxu0 %v2221
    %3396 = vmatpush2.bf16.msra.mxu0 %v2220
    %3397 = vmatprep.subr.bf16.mxu0 %v2213
    %3398 = vmatpush2.bf16.msra.mxu0 %v2212
    %3399 = vmatprep.subr.bf16.mxu0 %v2205
    %3400 = vmatpush2.bf16.msra.mxu0 %v2204
    %3401 = vmatprep.subr.bf16.mxu0 %v2197
    %3402 = vmatpush2.bf16.msra.mxu0 %v2196
    %3403 = vmatprep.mubr.bf16.mxu0 %v3329
    %3404 = vmatmul.mubr.bf16.gmra.mxu0 %v3328
    %v3405 = vpop.f32.mrf.mxu0
    %v3406 = vadd.f32 0.0, %v3405
    %v3407 = vpop.f32.mrf.mxu0
    %v3408 = vadd.f32 0.0, %v3407
    %v3409 = vpop.f32.mrf.mxu0
    %v3410 = vpop.f32.mrf.mxu0
    %3411 = vdwg.mxu0
    %3412 = vmatprep.subr.bf16.mxu0 %v2191
    %3413 = vmatpush1.bf16.msra.mxu0 %v2190
    %3414 = vmatprep.subr.bf16.mxu0 %v2183
    %3415 = vmatpush1.bf16.msra.mxu0 %v2182
    %3416 = vmatprep.subr.bf16.mxu0 %v2175
    %3417 = vmatpush1.bf16.msra.mxu0 %v2174
    %3418 = vmatprep.subr.bf16.mxu0 %v2167
    %3419 = vmatpush1.bf16.msra.mxu0 %v2166
    %3420 = vmatprep.subr.bf16.mxu0 %v2159
    %3421 = vmatpush1.bf16.msra.mxu0 %v2158
    %3422 = vmatprep.subr.bf16.mxu0 %v2151
    %3423 = vmatpush1.bf16.msra.mxu0 %v2150
    %3424 = vmatprep.subr.bf16.mxu0 %v2143
    %3425 = vmatpush1.bf16.msra.mxu0 %v2142
    %3426 = vmatprep.subr.bf16.mxu0 %v2135
    %3427 = vmatpush1.bf16.msra.mxu0 %v2134
    %3428 = vmatprep.subr.bf16.mxu0 %v2255
    %3429 = vmatpush2.bf16.msra.mxu0 %v2254
    %3430 = vmatprep.subr.bf16.mxu0 %v2247
    %3431 = vmatpush2.bf16.msra.mxu0 %v2246
    %3432 = vmatprep.subr.bf16.mxu0 %v2239
    %3433 = vmatpush2.bf16.msra.mxu0 %v2238
    %3434 = vmatprep.subr.bf16.mxu0 %v2231
    %3435 = vmatpush2.bf16.msra.mxu0 %v2230
    %3436 = vmatprep.subr.bf16.mxu0 %v2223
    %3437 = vmatpush2.bf16.msra.mxu0 %v2222
    %3438 = vmatprep.subr.bf16.mxu0 %v2215
    %3439 = vmatpush2.bf16.msra.mxu0 %v2214
    %3440 = vmatprep.subr.bf16.mxu0 %v2207
    %3441 = vmatpush2.bf16.msra.mxu0 %v2206
    %3442 = vmatprep.subr.bf16.mxu0 %v2199
    %3443 = vmatpush2.bf16.msra.mxu0 %v2198
    %3444 = vmatprep.mubr.bf16.mxu0 %v3329
    %3445 = vmatmul.mubr.bf16.gmra.mxu0 %v3328
    %v3446 = vpop.f32.mrf.mxu0
    %v3447 = vadd.f32 0.0, %v3446
    %v3448 = vpop.f32.mrf.mxu0
    %v3449 = vadd.f32 0.0, %v3448
    %v3450 = vpop.f32.mrf.mxu0
    %v3451 = vpop.f32.mrf.mxu0
    %3452 = vdwg.mxu0
    %3453 = vmatprep.subr.bf16.mxu0 %v2193
    %3454 = vmatpush1.bf16.msra.mxu0 %v2192
    %3455 = vmatprep.subr.bf16.mxu0 %v2185
    %3456 = vmatpush1.bf16.msra.mxu0 %v2184
    %3457 = vmatprep.subr.bf16.mxu0 %v2177
    %3458 = vmatpush1.bf16.msra.mxu0 %v2176
    %3459 = vmatprep.subr.bf16.mxu0 %v2169
    %3460 = vmatpush1.bf16.msra.mxu0 %v2168
    %3461 = vmatprep.subr.bf16.mxu0 %v2161
    %3462 = vmatpush1.bf16.msra.mxu0 %v2160
    %3463 = vmatprep.subr.bf16.mxu0 %v2153
    %3464 = vmatpush1.bf16.msra.mxu0 %v2152
    %3465 = vmatprep.subr.bf16.mxu0 %v2145
    %3466 = vmatpush1.bf16.msra.mxu0 %v2144
    %3467 = vmatprep.subr.bf16.mxu0 %v2137
    %3468 = vmatpush1.bf16.msra.mxu0 %v2136
    %3469 = vmatprep.subr.bf16.mxu0 %v2257
    %3470 = vmatpush2.bf16.msra.mxu0 %v2256
    %3471 = vmatprep.subr.bf16.mxu0 %v2249
    %3472 = vmatpush2.bf16.msra.mxu0 %v2248
    %3473 = vmatprep.subr.bf16.mxu0 %v2241
    %3474 = vmatpush2.bf16.msra.mxu0 %v2240
    %3475 = vmatprep.subr.bf16.mxu0 %v2233
    %3476 = vmatpush2.bf16.msra.mxu0 %v2232
    %3477 = vmatprep.subr.bf16.mxu0 %v2225
    %3478 = vmatpush2.bf16.msra.mxu0 %v2224
    %3479 = vmatprep.subr.bf16.mxu0 %v2217
    %3480 = vmatpush2.bf16.msra.mxu0 %v2216
    %3481 = vmatprep.subr.bf16.mxu0 %v2209
    %3482 = vmatpush2.bf16.msra.mxu0 %v2208
    %3483 = vmatprep.subr.bf16.mxu0 %v2201
    %3484 = vmatpush2.bf16.msra.mxu0 %v2200
    %3485 = vmatprep.mubr.bf16.mxu0 %v3329
    %3486 = vmatmul.mubr.bf16.gmra.mxu0 %v3328
    %v3487 = vpop.f32.mrf.mxu0
    %v3488 = vadd.f32 0.0, %v3487
    %v3489 = vpop.f32.mrf.mxu0
    %v3490 = vadd.f32 0.0, %v3489
    %v3491 = vpop.f32.mrf.mxu0
    %v3492 = vpop.f32.mrf.mxu0
    %3493 = vdwg.mxu0
    %v3494 = vadd.f32 %v3365, %v1355
    %v3495 = vadd.f32 %v3367, %v1357
    %v3496 = vadd.f32 %v3406, %v1441
    %v3497 = vadd.f32 %v3408, %v1443
    %v3502 = vrot.slane %v1523, 6
    %v3503 = vrot.slane %v1525, 6
    %v3504 = vrot.slane %v1609, 6
    %v3505 = vrot.slane %v1611, 6
    %v3510 = vadd.f32 %v3447, %v3502
    %v3511 = vadd.f32 %v3449, %v3503
    %v3512 = vadd.f32 %v3488, %v3504
    %v3513 = vadd.f32 %v3490, %v3505
    %v3514 = vxor.u32 %v3494, 2147483648
    %v3515 = vmul.f32 %v3514, 1.442695
    %v3516 = vpow.pop %v3515
    %v3517 = vadd.f32 %v3516, 1.0
    %v3518 = vrcp.pop %v3517
    %v3519 = vmul.f32 1.0, %v3518
    %v3520 = vxor.u32 %v3495, 2147483648
    %v3521 = vmul.f32 %v3520, 1.442695
    %v3522 = vpow.pop %v3521
    %v3523 = vadd.f32 %v3522, 1.0
    %v3524 = vrcp.pop %v3523
    %v3525 = vmul.f32 1.0, %v3524
    %v3526 = vtanh.pop %v3496
    %v3527 = vxor.u32 %v3497, 2147483648
    %v3528 = vmul.f32 %v3527, 1.442695
    %v3529 = vpow.pop %v3528
    %v3530 = vadd.f32 %v3529, 1.0
    %v3531 = vrcp.pop %v3530
    %v3532 = vmul.f32 1.0, %v3531
    %v3533 = vmul.f32 %v3525, %v3301
    %v3534 = vmul.f32 %v3519, %v3526
    %v3535 = vadd.f32 %v3533, %v3534
    %v3536 = vtanh.pop %v3535
    %v3537 = vmul.f32 %v3532, %v3536
    %v3538 = vxor.u32 %v3510, 2147483648
    %v3539 = vmul.f32 %v3538, 1.442695
    %v3540 = vpow.pop %v3539
    %v3541 = vadd.f32 %v3540, 1.0
    %v3542 = vrcp.pop %v3541
    %v3543 = vmul.f32 1.0, %v3542
    %v3544 = vxor.u32 %v3511, 2147483648
    %v3545 = vmul.f32 %v3544, 1.442695
    %v3546 = vpow.pop %v3545
    %v3547 = vadd.f32 %v3546, 1.0
    %v3548 = vrcp.pop %v3547
    %v3549 = vmul.f32 1.0, %v3548
    %v3550 = vtanh.pop %v3512
    %v3551 = vxor.u32 %v3513, 2147483648
    %v3552 = vmul.f32 %v3551, 1.442695
    %v3553 = vpow.pop %v3552
    %v3554 = vadd.f32 %v3553, 1.0
    %v3555 = vrcp.pop %v3554
    %v3556 = vmul.f32 1.0, %v3555
    %v3557 = vmul.f32 %v3549, %v3325
    %v3558 = vmul.f32 %v3543, %v3550
    %v3559 = vadd.f32 %v3557, %v3558
    %v3560 = vtanh.pop %v3559
    %v3561 = vmul.f32 %v3556, %v3560
    %v3562 = vpack.c.bf16 %v3537, %v3537
    %v3563 = vpack.c.bf16 %v3561, %v3561
    %3564 = vmatprep.subr.bf16.mxu0 %v2187
    %3565 = vmatpush1.bf16.msra.mxu0 %v2186
    %3566 = vmatprep.subr.bf16.mxu0 %v2179
    %3567 = vmatpush1.bf16.msra.mxu0 %v2178
    %3568 = vmatprep.subr.bf16.mxu0 %v2171
    %3569 = vmatpush1.bf16.msra.mxu0 %v2170
    %3570 = vmatprep.subr.bf16.mxu0 %v2163
    %3571 = vmatpush1.bf16.msra.mxu0 %v2162
    %3572 = vmatprep.subr.bf16.mxu0 %v2155
    %3573 = vmatpush1.bf16.msra.mxu0 %v2154
    %3574 = vmatprep.subr.bf16.mxu0 %v2147
    %3575 = vmatpush1.bf16.msra.mxu0 %v2146
    %3576 = vmatprep.subr.bf16.mxu0 %v2139
    %3577 = vmatpush1.bf16.msra.mxu0 %v2138
    %3578 = vmatprep.subr.bf16.mxu0 %v2131
    %3579 = vmatpush1.bf16.msra.mxu0 %v2130
    %3580 = vmatprep.subr.bf16.mxu0 %v2251
    %3581 = vmatpush2.bf16.msra.mxu0 %v2250
    %3582 = vmatprep.subr.bf16.mxu0 %v2243
    %3583 = vmatpush2.bf16.msra.mxu0 %v2242
    %3584 = vmatprep.subr.bf16.mxu0 %v2235
    %3585 = vmatpush2.bf16.msra.mxu0 %v2234
    %3586 = vmatprep.subr.bf16.mxu0 %v2227
    %3587 = vmatpush2.bf16.msra.mxu0 %v2226
    %3588 = vmatprep.subr.bf16.mxu0 %v2219
    %3589 = vmatpush2.bf16.msra.mxu0 %v2218
    %3590 = vmatprep.subr.bf16.mxu0 %v2211
    %3591 = vmatpush2.bf16.msra.mxu0 %v2210
    %3592 = vmatprep.subr.bf16.mxu0 %v2203
    %3593 = vmatpush2.bf16.msra.mxu0 %v2202
    %3594 = vmatprep.subr.bf16.mxu0 %v2195
    %3595 = vmatpush2.bf16.msra.mxu0 %v2194
    %3596 = vmatprep.mubr.bf16.mxu0 %v3563
    %3597 = vmatmul.mubr.bf16.gmra.mxu0 %v3562
    %v3598 = vpop.f32.mrf.mxu0
    %v3599 = vadd.f32 0.0, %v3598
    %v3600 = vpop.f32.mrf.mxu0
    %v3601 = vadd.f32 0.0, %v3600
    %v3602 = vpop.f32.mrf.mxu0
    %v3603 = vpop.f32.mrf.mxu0
    %3604 = vdwg.mxu0
    %3605 = vmatprep.subr.bf16.mxu0 %v2189
    %3606 = vmatpush1.bf16.msra.mxu0 %v2188
    %3607 = vmatprep.subr.bf16.mxu0 %v2181
    %3608 = vmatpush1.bf16.msra.mxu0 %v2180
    %3609 = vmatprep.subr.bf16.mxu0 %v2173
    %3610 = vmatpush1.bf16.msra.mxu0 %v2172
    %3611 = vmatprep.subr.bf16.mxu0 %v2165
    %3612 = vmatpush1.bf16.msra.mxu0 %v2164
    %3613 = vmatprep.subr.bf16.mxu0 %v2157
    %3614 = vmatpush1.bf16.msra.mxu0 %v2156
    %3615 = vmatprep.subr.bf16.mxu0 %v2149
    %3616 = vmatpush1.bf16.msra.mxu0 %v2148
    %3617 = vmatprep.subr.bf16.mxu0 %v2141
    %3618 = vmatpush1.bf16.msra.mxu0 %v2140
    %3619 = vmatprep.subr.bf16.mxu0 %v2133
    %3620 = vmatpush1.bf16.msra.mxu0 %v2132
    %3621 = vmatprep.subr.bf16.mxu0 %v2253
    %3622 = vmatpush2.bf16.msra.mxu0 %v2252
    %3623 = vmatprep.subr.bf16.mxu0 %v2245
    %3624 = vmatpush2.bf16.msra.mxu0 %v2244
    %3625 = vmatprep.subr.bf16.mxu0 %v2237
    %3626 = vmatpush2.bf16.msra.mxu0 %v2236
    %3627 = vmatprep.subr.bf16.mxu0 %v2229
    %3628 = vmatpush2.bf16.msra.mxu0 %v2228
    %3629 = vmatprep.subr.bf16.mxu0 %v2221
    %3630 = vmatpush2.bf16.msra.mxu0 %v2220
    %3631 = vmatprep.subr.bf16.mxu0 %v2213
    %3632 = vmatpush2.bf16.msra.mxu0 %v2212
    %3633 = vmatprep.subr.bf16.mxu0 %v2205
    %3634 = vmatpush2.bf16.msra.mxu0 %v2204
    %3635 = vmatprep.subr.bf16.mxu0 %v2197
    %3636 = vmatpush2.bf16.msra.mxu0 %v2196
    %3637 = vmatprep.mubr.bf16.mxu0 %v3563
    %3638 = vmatmul.mubr.bf16.gmra.mxu0 %v3562
    %v3639 = vpop.f32.mrf.mxu0
    %v3640 = vadd.f32 0.0, %v3639
    %v3641 = vpop.f32.mrf.mxu0
    %v3642 = vadd.f32 0.0, %v3641
    %v3643 = vpop.f32.mrf.mxu0
    %v3644 = vpop.f32.mrf.mxu0
    %3645 = vdwg.mxu0
    %3646 = vmatprep.subr.bf16.mxu0 %v2191
    %3647 = vmatpush1.bf16.msra.mxu0 %v2190
    %3648 = vmatprep.subr.bf16.mxu0 %v2183
    %3649 = vmatpush1.bf16.msra.mxu0 %v2182
    %3650 = vmatprep.subr.bf16.mxu0 %v2175
    %3651 = vmatpush1.bf16.msra.mxu0 %v2174
    %3652 = vmatprep.subr.bf16.mxu0 %v2167
    %3653 = vmatpush1.bf16.msra.mxu0 %v2166
    %3654 = vmatprep.subr.bf16.mxu0 %v2159
    %3655 = vmatpush1.bf16.msra.mxu0 %v2158
    %3656 = vmatprep.subr.bf16.mxu0 %v2151
    %3657 = vmatpush1.bf16.msra.mxu0 %v2150
    %3658 = vmatprep.subr.bf16.mxu0 %v2143
    %3659 = vmatpush1.bf16.msra.mxu0 %v2142
    %3660 = vmatprep.subr.bf16.mxu0 %v2135
    %3661 = vmatpush1.bf16.msra.mxu0 %v2134
    %3662 = vmatprep.subr.bf16.mxu0 %v2255
    %3663 = vmatpush2.bf16.msra.mxu0 %v2254
    %3664 = vmatprep.subr.bf16.mxu0 %v2247
    %3665 = vmatpush2.bf16.msra.mxu0 %v2246
    %3666 = vmatprep.subr.bf16.mxu0 %v2239
    %3667 = vmatpush2.bf16.msra.mxu0 %v2238
    %3668 = vmatprep.subr.bf16.mxu0 %v2231
    %3669 = vmatpush2.bf16.msra.mxu0 %v2230
    %3670 = vmatprep.subr.bf16.mxu0 %v2223
    %3671 = vmatpush2.bf16.msra.mxu0 %v2222
    %3672 = vmatprep.subr.bf16.mxu0 %v2215
    %3673 = vmatpush2.bf16.msra.mxu0 %v2214
    %3674 = vmatprep.subr.bf16.mxu0 %v2207
    %3675 = vmatpush2.bf16.msra.mxu0 %v2206
    %3676 = vmatprep.subr.bf16.mxu0 %v2199
    %3677 = vmatpush2.bf16.msra.mxu0 %v2198
    %3678 = vmatprep.mubr.bf16.mxu0 %v3563
    %3679 = vmatmul.mubr.bf16.gmra.mxu0 %v3562
    %v3680 = vpop.f32.mrf.mxu0
    %v3681 = vadd.f32 0.0, %v3680
    %v3682 = vpop.f32.mrf.mxu0
    %v3683 = vadd.f32 0.0, %v3682
    %v3684 = vpop.f32.mrf.mxu0
    %v3685 = vpop.f32.mrf.mxu0
    %3686 = vdwg.mxu0
    %3687 = vmatprep.subr.bf16.mxu0 %v2193
    %3688 = vmatpush1.bf16.msra.mxu0 %v2192
    %3689 = vmatprep.subr.bf16.mxu0 %v2185
    %3690 = vmatpush1.bf16.msra.mxu0 %v2184
    %3691 = vmatprep.subr.bf16.mxu0 %v2177
    %3692 = vmatpush1.bf16.msra.mxu0 %v2176
    %3693 = vmatprep.subr.bf16.mxu0 %v2169
    %3694 = vmatpush1.bf16.msra.mxu0 %v2168
    %3695 = vmatprep.subr.bf16.mxu0 %v2161
    %3696 = vmatpush1.bf16.msra.mxu0 %v2160
    %3697 = vmatprep.subr.bf16.mxu0 %v2153
    %3698 = vmatpush1.bf16.msra.mxu0 %v2152
    %3699 = vmatprep.subr.bf16.mxu0 %v2145
    %3700 = vmatpush1.bf16.msra.mxu0 %v2144
    %3701 = vmatprep.subr.bf16.mxu0 %v2137
    %3702 = vmatpush1.bf16.msra.mxu0 %v2136
    %3703 = vmatprep.subr.bf16.mxu0 %v2257
    %3704 = vmatpush2.bf16.msra.mxu0 %v2256
    %3705 = vmatprep.subr.bf16.mxu0 %v2249
    %3706 = vmatpush2.bf16.msra.mxu0 %v2248
    %3707 = vmatprep.subr.bf16.mxu0 %v2241
    %3708 = vmatpush2.bf16.msra.mxu0 %v2240
    %3709 = vmatprep.subr.bf16.mxu0 %v2233
    %3710 = vmatpush2.bf16.msra.mxu0 %v2232
    %3711 = vmatprep.subr.bf16.mxu0 %v2225
    %3712 = vmatpush2.bf16.msra.mxu0 %v2224
    %3713 = vmatprep.subr.bf16.mxu0 %v2217
    %3714 = vmatpush2.bf16.msra.mxu0 %v2216
    %3715 = vmatprep.subr.bf16.mxu0 %v2209
    %3716 = vmatpush2.bf16.msra.mxu0 %v2208
    %3717 = vmatprep.subr.bf16.mxu0 %v2201
    %3718 = vmatpush2.bf16.msra.mxu0 %v2200
    %3719 = vmatprep.mubr.bf16.mxu0 %v3563
    %3720 = vmatmul.mubr.bf16.gmra.mxu0 %v3562
    %v3721 = vpop.f32.mrf.mxu0
    %v3722 = vadd.f32 0.0, %v3721
    %v3723 = vpop.f32.mrf.mxu0
    %v3724 = vadd.f32 0.0, %v3723
    %v3725 = vpop.f32.mrf.mxu0
    %v3726 = vpop.f32.mrf.mxu0
    %3727 = vdwg.mxu0
    %v3732 = vrot.slane %v1355, 2
    %v3733 = vrot.slane %v1357, 2
    %v3734 = vrot.slane %v1441, 2
    %v3735 = vrot.slane %v1443, 2
    %v3740 = vadd.f32 %v3599, %v3732
    %v3741 = vadd.f32 %v3601, %v3733
    %v3742 = vadd.f32 %v3640, %v3734
    %v3743 = vadd.f32 %v3642, %v3735
    %v3744 = vrot.slane %v1523, 4
    %v3745 = vrot.slane %v1525, 4
    %v3746 = vrot.slane %v1609, 4
    %v3747 = vrot.slane %v1611, 4
    %v3752 = vadd.f32 %v3681, %v3744
    %v3753 = vadd.f32 %v3683, %v3745
    %v3754 = vadd.f32 %v3722, %v3746
    %v3755 = vadd.f32 %v3724, %v3747
    %v3756 = vxor.u32 %v3740, 2147483648
    %v3757 = vmul.f32 %v3756, 1.442695
    %v3758 = vpow.pop %v3757
    %v3759 = vadd.f32 %v3758, 1.0
    %v3760 = vrcp.pop %v3759
    %v3761 = vmul.f32 1.0, %v3760
    %v3762 = vxor.u32 %v3741, 2147483648
    %v3763 = vmul.f32 %v3762, 1.442695
    %v3764 = vpow.pop %v3763
    %v3765 = vadd.f32 %v3764, 1.0
    %v3766 = vrcp.pop %v3765
    %v3767 = vmul.f32 1.0, %v3766
    %v3768 = vtanh.pop %v3742
    %v3769 = vxor.u32 %v3743, 2147483648
    %v3770 = vmul.f32 %v3769, 1.442695
    %v3771 = vpow.pop %v3770
    %v3772 = vadd.f32 %v3771, 1.0
    %v3773 = vrcp.pop %v3772
    %v3774 = vmul.f32 1.0, %v3773
    %v3775 = vmul.f32 %v3767, %v3535
    %v3776 = vmul.f32 %v3761, %v3768
    %v3777 = vadd.f32 %v3775, %v3776
    %v3778 = vtanh.pop %v3777
    %v3779 = vmul.f32 %v3774, %v3778
    %v3780 = vxor.u32 %v3752, 2147483648
    %v3781 = vmul.f32 %v3780, 1.442695
    %v3782 = vpow.pop %v3781
    %v3783 = vadd.f32 %v3782, 1.0
    %v3784 = vrcp.pop %v3783
    %v3785 = vmul.f32 1.0, %v3784
    %v3786 = vxor.u32 %v3753, 2147483648
    %v3787 = vmul.f32 %v3786, 1.442695
    %v3788 = vpow.pop %v3787
    %v3789 = vadd.f32 %v3788, 1.0
    %v3790 = vrcp.pop %v3789
    %v3791 = vmul.f32 1.0, %v3790
    %v3792 = vtanh.pop %v3754
    %v3793 = vxor.u32 %v3755, 2147483648
    %v3794 = vmul.f32 %v3793, 1.442695
    %v3795 = vpow.pop %v3794
    %v3796 = vadd.f32 %v3795, 1.0
    %v3797 = vrcp.pop %v3796
    %v3798 = vmul.f32 1.0, %v3797
    %v3799 = vmul.f32 %v3791, %v3559
    %v3800 = vmul.f32 %v3785, %v3792
    %v3801 = vadd.f32 %v3799, %v3800
    %v3802 = vtanh.pop %v3801
    %v3803 = vmul.f32 %v3798, %v3802
    %v3804 = vpack.c.bf16 %v3779, %v3779
    %v3805 = vpack.c.bf16 %v3803, %v3803
    %3806 = vmatprep.subr.bf16.mxu0 %v2187
    %3807 = vmatpush1.bf16.msra.mxu0 %v2186
    %3808 = vmatprep.subr.bf16.mxu0 %v2179
    %3809 = vmatpush1.bf16.msra.mxu0 %v2178
    %3810 = vmatprep.subr.bf16.mxu0 %v2171
    %3811 = vmatpush1.bf16.msra.mxu0 %v2170
    %3812 = vmatprep.subr.bf16.mxu0 %v2163
    %3813 = vmatpush1.bf16.msra.mxu0 %v2162
    %3814 = vmatprep.subr.bf16.mxu0 %v2155
    %3815 = vmatpush1.bf16.msra.mxu0 %v2154
    %3816 = vmatprep.subr.bf16.mxu0 %v2147
    %3817 = vmatpush1.bf16.msra.mxu0 %v2146
    %3818 = vmatprep.subr.bf16.mxu0 %v2139
    %3819 = vmatpush1.bf16.msra.mxu0 %v2138
    %3820 = vmatprep.subr.bf16.mxu0 %v2131
    %3821 = vmatpush1.bf16.msra.mxu0 %v2130
    %3822 = vmatprep.subr.bf16.mxu0 %v2251
    %3823 = vmatpush2.bf16.msra.mxu0 %v2250
    %3824 = vmatprep.subr.bf16.mxu0 %v2243
    %3825 = vmatpush2.bf16.msra.mxu0 %v2242
    %3826 = vmatprep.subr.bf16.mxu0 %v2235
    %3827 = vmatpush2.bf16.msra.mxu0 %v2234
    %3828 = vmatprep.subr.bf16.mxu0 %v2227
    %3829 = vmatpush2.bf16.msra.mxu0 %v2226
    %3830 = vmatprep.subr.bf16.mxu0 %v2219
    %3831 = vmatpush2.bf16.msra.mxu0 %v2218
    %3832 = vmatprep.subr.bf16.mxu0 %v2211
    %3833 = vmatpush2.bf16.msra.mxu0 %v2210
    %3834 = vmatprep.subr.bf16.mxu0 %v2203
    %3835 = vmatpush2.bf16.msra.mxu0 %v2202
    %3836 = vmatprep.subr.bf16.mxu0 %v2195
    %3837 = vmatpush2.bf16.msra.mxu0 %v2194
    %3838 = vmatprep.mubr.bf16.mxu0 %v3805
    %3839 = vmatmul.mubr.bf16.gmra.mxu0 %v3804
    %v3840 = vpop.f32.mrf.mxu0
    %v3841 = vadd.f32 0.0, %v3840
    %v3842 = vpop.f32.mrf.mxu0
    %v3843 = vadd.f32 0.0, %v3842
    %v3844 = vpop.f32.mrf.mxu0
    %v3845 = vpop.f32.mrf.mxu0
    %3846 = vdwg.mxu0
    %3847 = vmatprep.subr.bf16.mxu0 %v2189
    %3848 = vmatpush1.bf16.msra.mxu0 %v2188
    %3849 = vmatprep.subr.bf16.mxu0 %v2181
    %3850 = vmatpush1.bf16.msra.mxu0 %v2180
    %3851 = vmatprep.subr.bf16.mxu0 %v2173
    %3852 = vmatpush1.bf16.msra.mxu0 %v2172
    %3853 = vmatprep.subr.bf16.mxu0 %v2165
    %3854 = vmatpush1.bf16.msra.mxu0 %v2164
    %3855 = vmatprep.subr.bf16.mxu0 %v2157
    %3856 = vmatpush1.bf16.msra.mxu0 %v2156
    %3857 = vmatprep.subr.bf16.mxu0 %v2149
    %3858 = vmatpush1.bf16.msra.mxu0 %v2148
    %3859 = vmatprep.subr.bf16.mxu0 %v2141
    %3860 = vmatpush1.bf16.msra.mxu0 %v2140
    %3861 = vmatprep.subr.bf16.mxu0 %v2133
    %3862 = vmatpush1.bf16.msra.mxu0 %v2132
    %3863 = vmatprep.subr.bf16.mxu0 %v2253
    %3864 = vmatpush2.bf16.msra.mxu0 %v2252
    %3865 = vmatprep.subr.bf16.mxu0 %v2245
    %3866 = vmatpush2.bf16.msra.mxu0 %v2244
    %3867 = vmatprep.subr.bf16.mxu0 %v2237
    %3868 = vmatpush2.bf16.msra.mxu0 %v2236
    %3869 = vmatprep.subr.bf16.mxu0 %v2229
    %3870 = vmatpush2.bf16.msra.mxu0 %v2228
    %3871 = vmatprep.subr.bf16.mxu0 %v2221
    %3872 = vmatpush2.bf16.msra.mxu0 %v2220
    %3873 = vmatprep.subr.bf16.mxu0 %v2213
    %3874 = vmatpush2.bf16.msra.mxu0 %v2212
    %3875 = vmatprep.subr.bf16.mxu0 %v2205
    %3876 = vmatpush2.bf16.msra.mxu0 %v2204
    %3877 = vmatprep.subr.bf16.mxu0 %v2197
    %3878 = vmatpush2.bf16.msra.mxu0 %v2196
    %3879 = vmatprep.mubr.bf16.mxu0 %v3805
    %3880 = vmatmul.mubr.bf16.gmra.mxu0 %v3804
    %v3881 = vpop.f32.mrf.mxu0
    %v3882 = vadd.f32 0.0, %v3881
    %v3883 = vpop.f32.mrf.mxu0
    %v3884 = vadd.f32 0.0, %v3883
    %v3885 = vpop.f32.mrf.mxu0
    %v3886 = vpop.f32.mrf.mxu0
    %3887 = vdwg.mxu0
    %3888 = vmatprep.subr.bf16.mxu0 %v2191
    %3889 = vmatpush1.bf16.msra.mxu0 %v2190
    %3890 = vmatprep.subr.bf16.mxu0 %v2183
    %3891 = vmatpush1.bf16.msra.mxu0 %v2182
    %3892 = vmatprep.subr.bf16.mxu0 %v2175
    %3893 = vmatpush1.bf16.msra.mxu0 %v2174
    %3894 = vmatprep.subr.bf16.mxu0 %v2167
    %3895 = vmatpush1.bf16.msra.mxu0 %v2166
    %3896 = vmatprep.subr.bf16.mxu0 %v2159
    %3897 = vmatpush1.bf16.msra.mxu0 %v2158
    %3898 = vmatprep.subr.bf16.mxu0 %v2151
    %3899 = vmatpush1.bf16.msra.mxu0 %v2150
    %3900 = vmatprep.subr.bf16.mxu0 %v2143
    %3901 = vmatpush1.bf16.msra.mxu0 %v2142
    %3902 = vmatprep.subr.bf16.mxu0 %v2135
    %3903 = vmatpush1.bf16.msra.mxu0 %v2134
    %3904 = vmatprep.subr.bf16.mxu0 %v2255
    %3905 = vmatpush2.bf16.msra.mxu0 %v2254
    %3906 = vmatprep.subr.bf16.mxu0 %v2247
    %3907 = vmatpush2.bf16.msra.mxu0 %v2246
    %3908 = vmatprep.subr.bf16.mxu0 %v2239
    %3909 = vmatpush2.bf16.msra.mxu0 %v2238
    %3910 = vmatprep.subr.bf16.mxu0 %v2231
    %3911 = vmatpush2.bf16.msra.mxu0 %v2230
    %3912 = vmatprep.subr.bf16.mxu0 %v2223
    %3913 = vmatpush2.bf16.msra.mxu0 %v2222
    %3914 = vmatprep.subr.bf16.mxu0 %v2215
    %3915 = vmatpush2.bf16.msra.mxu0 %v2214
    %3916 = vmatprep.subr.bf16.mxu0 %v2207
    %3917 = vmatpush2.bf16.msra.mxu0 %v2206
    %3918 = vmatprep.subr.bf16.mxu0 %v2199
    %3919 = vmatpush2.bf16.msra.mxu0 %v2198
    %3920 = vmatprep.mubr.bf16.mxu0 %v3805
    %3921 = vmatmul.mubr.bf16.gmra.mxu0 %v3804
    %v3922 = vpop.f32.mrf.mxu0
    %v3923 = vadd.f32 0.0, %v3922
    %v3924 = vpop.f32.mrf.mxu0
    %v3925 = vadd.f32 0.0, %v3924
    %v3926 = vpop.f32.mrf.mxu0
    %v3927 = vpop.f32.mrf.mxu0
    %3928 = vdwg.mxu0
    %3929 = vmatprep.subr.bf16.mxu0 %v2193
    %3930 = vmatpush1.bf16.msra.mxu0 %v2192
    %3931 = vmatprep.subr.bf16.mxu0 %v2185
    %3932 = vmatpush1.bf16.msra.mxu0 %v2184
    %3933 = vmatprep.subr.bf16.mxu0 %v2177
    %3934 = vmatpush1.bf16.msra.mxu0 %v2176
    %3935 = vmatprep.subr.bf16.mxu0 %v2169
    %3936 = vmatpush1.bf16.msra.mxu0 %v2168
    %3937 = vmatprep.subr.bf16.mxu0 %v2161
    %3938 = vmatpush1.bf16.msra.mxu0 %v2160
    %3939 = vmatprep.subr.bf16.mxu0 %v2153
    %3940 = vmatpush1.bf16.msra.mxu0 %v2152
    %3941 = vmatprep.subr.bf16.mxu0 %v2145
    %3942 = vmatpush1.bf16.msra.mxu0 %v2144
    %3943 = vmatprep.subr.bf16.mxu0 %v2137
    %3944 = vmatpush1.bf16.msra.mxu0 %v2136
    %3945 = vmatprep.subr.bf16.mxu0 %v2257
    %3946 = vmatpush2.bf16.msra.mxu0 %v2256
    %3947 = vmatprep.subr.bf16.mxu0 %v2249
    %3948 = vmatpush2.bf16.msra.mxu0 %v2248
    %3949 = vmatprep.subr.bf16.mxu0 %v2241
    %3950 = vmatpush2.bf16.msra.mxu0 %v2240
    %3951 = vmatprep.subr.bf16.mxu0 %v2233
    %3952 = vmatpush2.bf16.msra.mxu0 %v2232
    %3953 = vmatprep.subr.bf16.mxu0 %v2225
    %3954 = vmatpush2.bf16.msra.mxu0 %v2224
    %3955 = vmatprep.subr.bf16.mxu0 %v2217
    %3956 = vmatpush2.bf16.msra.mxu0 %v2216
    %3957 = vmatprep.subr.bf16.mxu0 %v2209
    %3958 = vmatpush2.bf16.msra.mxu0 %v2208
    %3959 = vmatprep.subr.bf16.mxu0 %v2201
    %3960 = vmatpush2.bf16.msra.mxu0 %v2200
    %3961 = vmatprep.mubr.bf16.mxu0 %v3805
    %3962 = vmatmul.mubr.bf16.gmra.mxu0 %v3804
    %v3963 = vpop.f32.mrf.mxu0
    %v3964 = vadd.f32 0.0, %v3963
    %v3965 = vpop.f32.mrf.mxu0
    %v3966 = vadd.f32 0.0, %v3965
    %v3967 = vpop.f32.mrf.mxu0
    %v3968 = vpop.f32.mrf.mxu0
    %3969 = vdwg.mxu0
    %v3970 = vrot.slane %v1355, 4
    %v3971 = vrot.slane %v1357, 4
    %v3972 = vrot.slane %v1441, 4
    %v3973 = vrot.slane %v1443, 4
    %v3978 = vadd.f32 %v3841, %v3970
    %v3979 = vadd.f32 %v3843, %v3971
    %v3980 = vadd.f32 %v3882, %v3972
    %v3981 = vadd.f32 %v3884, %v3973
    %v3982 = vrot.slane %v1523, 2
    %v3983 = vrot.slane %v1525, 2
    %v3984 = vrot.slane %v1609, 2
    %v3985 = vrot.slane %v1611, 2
    %v3990 = vadd.f32 %v3923, %v3982
    %v3991 = vadd.f32 %v3925, %v3983
    %v3992 = vadd.f32 %v3964, %v3984
    %v3993 = vadd.f32 %v3966, %v3985
    %v3994 = vxor.u32 %v3978, 2147483648
    %v3995 = vmul.f32 %v3994, 1.442695
    %v3996 = vpow.pop %v3995
    %v3997 = vadd.f32 %v3996, 1.0
    %v3998 = vrcp.pop %v3997
    %v3999 = vmul.f32 1.0, %v3998
    %v4000 = vxor.u32 %v3979, 2147483648
    %v4001 = vmul.f32 %v4000, 1.442695
    %v4002 = vpow.pop %v4001
    %v4003 = vadd.f32 %v4002, 1.0
    %v4004 = vrcp.pop %v4003
    %v4005 = vmul.f32 1.0, %v4004
    %v4006 = vtanh.pop %v3980
    %v4007 = vxor.u32 %v3981, 2147483648
    %v4008 = vmul.f32 %v4007, 1.442695
    %v4009 = vpow.pop %v4008
    %v4010 = vadd.f32 %v4009, 1.0
    %v4011 = vrcp.pop %v4010
    %v4012 = vmul.f32 1.0, %v4011
    %v4013 = vmul.f32 %v4005, %v3777
    %v4014 = vmul.f32 %v3999, %v4006
    %v4015 = vadd.f32 %v4013, %v4014
    %v4016 = vtanh.pop %v4015
    %v4017 = vmul.f32 %v4012, %v4016
    %v4018 = vxor.u32 %v3990, 2147483648
    %v4019 = vmul.f32 %v4018, 1.442695
    %v4020 = vpow.pop %v4019
    %v4021 = vadd.f32 %v4020, 1.0
    %v4022 = vrcp.pop %v4021
    %v4023 = vmul.f32 1.0, %v4022
    %v4024 = vxor.u32 %v3991, 2147483648
    %v4025 = vmul.f32 %v4024, 1.442695
    %v4026 = vpow.pop %v4025
    %v4027 = vadd.f32 %v4026, 1.0
    %v4028 = vrcp.pop %v4027
    %v4029 = vmul.f32 1.0, %v4028
    %v4030 = vtanh.pop %v3992
    %v4031 = vxor.u32 %v3993, 2147483648
    %v4032 = vmul.f32 %v4031, 1.442695
    %v4033 = vpow.pop %v4032
    %v4034 = vadd.f32 %v4033, 1.0
    %v4035 = vrcp.pop %v4034
    %v4036 = vmul.f32 1.0, %v4035
    %v4037 = vmul.f32 %v4029, %v3801
    %v4038 = vmul.f32 %v4023, %v4030
    %v4039 = vadd.f32 %v4037, %v4038
    %v4040 = vtanh.pop %v4039
    %v4041 = vmul.f32 %v4036, %v4040
    %v4042 = vpack.c.bf16 %v4017, %v4017
    %v4043 = vpack.c.bf16 %v4041, %v4041
    %4044 = vmatprep.subr.bf16.mxu0 %v2187
    %4045 = vmatpush1.bf16.msra.mxu0 %v2186
    %4046 = vmatprep.subr.bf16.mxu0 %v2179
    %4047 = vmatpush1.bf16.msra.mxu0 %v2178
    %4048 = vmatprep.subr.bf16.mxu0 %v2171
    %4049 = vmatpush1.bf16.msra.mxu0 %v2170
    %4050 = vmatprep.subr.bf16.mxu0 %v2163
    %4051 = vmatpush1.bf16.msra.mxu0 %v2162
    %4052 = vmatprep.subr.bf16.mxu0 %v2155
    %4053 = vmatpush1.bf16.msra.mxu0 %v2154
    %4054 = vmatprep.subr.bf16.mxu0 %v2147
    %4055 = vmatpush1.bf16.msra.mxu0 %v2146
    %4056 = vmatprep.subr.bf16.mxu0 %v2139
    %4057 = vmatpush1.bf16.msra.mxu0 %v2138
    %4058 = vmatprep.subr.bf16.mxu0 %v2131
    %4059 = vmatpush1.bf16.msra.mxu0 %v2130
    %4060 = vmatprep.subr.bf16.mxu0 %v2251
    %4061 = vmatpush2.bf16.msra.mxu0 %v2250
    %4062 = vmatprep.subr.bf16.mxu0 %v2243
    %4063 = vmatpush2.bf16.msra.mxu0 %v2242
    %4064 = vmatprep.subr.bf16.mxu0 %v2235
    %4065 = vmatpush2.bf16.msra.mxu0 %v2234
    %4066 = vmatprep.subr.bf16.mxu0 %v2227
    %4067 = vmatpush2.bf16.msra.mxu0 %v2226
    %4068 = vmatprep.subr.bf16.mxu0 %v2219
    %4069 = vmatpush2.bf16.msra.mxu0 %v2218
    %4070 = vmatprep.subr.bf16.mxu0 %v2211
    %4071 = vmatpush2.bf16.msra.mxu0 %v2210
    %4072 = vmatprep.subr.bf16.mxu0 %v2203
    %4073 = vmatpush2.bf16.msra.mxu0 %v2202
    %4074 = vmatprep.subr.bf16.mxu0 %v2195
    %4075 = vmatpush2.bf16.msra.mxu0 %v2194
    %4076 = vmatprep.mubr.bf16.mxu0 %v4043
    %4077 = vmatmul.mubr.bf16.gmra.mxu0 %v4042
    %v4078 = vpop.f32.mrf.mxu0
    %v4079 = vadd.f32 0.0, %v4078
    %v4080 = vpop.f32.mrf.mxu0
    %v4081 = vadd.f32 0.0, %v4080
    %v4082 = vpop.f32.mrf.mxu0
    %v4083 = vpop.f32.mrf.mxu0
    %4084 = vdwg.mxu0
    %4085 = vmatprep.subr.bf16.mxu0 %v2189
    %4086 = vmatpush1.bf16.msra.mxu0 %v2188
    %4087 = vmatprep.subr.bf16.mxu0 %v2181
    %4088 = vmatpush1.bf16.msra.mxu0 %v2180
    %4089 = vmatprep.subr.bf16.mxu0 %v2173
    %4090 = vmatpush1.bf16.msra.mxu0 %v2172
    %4091 = vmatprep.subr.bf16.mxu0 %v2165
    %4092 = vmatpush1.bf16.msra.mxu0 %v2164
    %4093 = vmatprep.subr.bf16.mxu0 %v2157
    %4094 = vmatpush1.bf16.msra.mxu0 %v2156
    %4095 = vmatprep.subr.bf16.mxu0 %v2149
    %4096 = vmatpush1.bf16.msra.mxu0 %v2148
    %4097 = vmatprep.subr.bf16.mxu0 %v2141
    %4098 = vmatpush1.bf16.msra.mxu0 %v2140
    %4099 = vmatprep.subr.bf16.mxu0 %v2133
    %4100 = vmatpush1.bf16.msra.mxu0 %v2132
    %4101 = vmatprep.subr.bf16.mxu0 %v2253
    %4102 = vmatpush2.bf16.msra.mxu0 %v2252
    %4103 = vmatprep.subr.bf16.mxu0 %v2245
    %4104 = vmatpush2.bf16.msra.mxu0 %v2244
    %4105 = vmatprep.subr.bf16.mxu0 %v2237
    %4106 = vmatpush2.bf16.msra.mxu0 %v2236
    %4107 = vmatprep.subr.bf16.mxu0 %v2229
    %4108 = vmatpush2.bf16.msra.mxu0 %v2228
    %4109 = vmatprep.subr.bf16.mxu0 %v2221
    %4110 = vmatpush2.bf16.msra.mxu0 %v2220
    %4111 = vmatprep.subr.bf16.mxu0 %v2213
    %4112 = vmatpush2.bf16.msra.mxu0 %v2212
    %4113 = vmatprep.subr.bf16.mxu0 %v2205
    %4114 = vmatpush2.bf16.msra.mxu0 %v2204
    %4115 = vmatprep.subr.bf16.mxu0 %v2197
    %4116 = vmatpush2.bf16.msra.mxu0 %v2196
    %4117 = vmatprep.mubr.bf16.mxu0 %v4043
    %4118 = vmatmul.mubr.bf16.gmra.mxu0 %v4042
    %v4119 = vpop.f32.mrf.mxu0
    %v4120 = vadd.f32 0.0, %v4119
    %v4121 = vpop.f32.mrf.mxu0
    %v4122 = vadd.f32 0.0, %v4121
    %v4123 = vpop.f32.mrf.mxu0
    %v4124 = vpop.f32.mrf.mxu0
    %4125 = vdwg.mxu0
    %4126 = vmatprep.subr.bf16.mxu0 %v2191
    %4127 = vmatpush1.bf16.msra.mxu0 %v2190
    %4128 = vmatprep.subr.bf16.mxu0 %v2183
    %4129 = vmatpush1.bf16.msra.mxu0 %v2182
    %4130 = vmatprep.subr.bf16.mxu0 %v2175
    %4131 = vmatpush1.bf16.msra.mxu0 %v2174
    %4132 = vmatprep.subr.bf16.mxu0 %v2167
    %4133 = vmatpush1.bf16.msra.mxu0 %v2166
    %4134 = vmatprep.subr.bf16.mxu0 %v2159
    %4135 = vmatpush1.bf16.msra.mxu0 %v2158
    %4136 = vmatprep.subr.bf16.mxu0 %v2151
    %4137 = vmatpush1.bf16.msra.mxu0 %v2150
    %4138 = vmatprep.subr.bf16.mxu0 %v2143
    %4139 = vmatpush1.bf16.msra.mxu0 %v2142
    %4140 = vmatprep.subr.bf16.mxu0 %v2135
    %4141 = vmatpush1.bf16.msra.mxu0 %v2134
    %4142 = vmatprep.subr.bf16.mxu0 %v2255
    %4143 = vmatpush2.bf16.msra.mxu0 %v2254
    %4144 = vmatprep.subr.bf16.mxu0 %v2247
    %4145 = vmatpush2.bf16.msra.mxu0 %v2246
    %4146 = vmatprep.subr.bf16.mxu0 %v2239
    %4147 = vmatpush2.bf16.msra.mxu0 %v2238
    %4148 = vmatprep.subr.bf16.mxu0 %v2231
    %4149 = vmatpush2.bf16.msra.mxu0 %v2230
    %4150 = vmatprep.subr.bf16.mxu0 %v2223
    %4151 = vmatpush2.bf16.msra.mxu0 %v2222
    %4152 = vmatprep.subr.bf16.mxu0 %v2215
    %4153 = vmatpush2.bf16.msra.mxu0 %v2214
    %4154 = vmatprep.subr.bf16.mxu0 %v2207
    %4155 = vmatpush2.bf16.msra.mxu0 %v2206
    %4156 = vmatprep.subr.bf16.mxu0 %v2199
    %4157 = vmatpush2.bf16.msra.mxu0 %v2198
    %4158 = vmatprep.mubr.bf16.mxu0 %v4043
    %4159 = vmatmul.mubr.bf16.gmra.mxu0 %v4042
    %v4160 = vpop.f32.mrf.mxu0
    %v4161 = vadd.f32 0.0, %v4160
    %v4162 = vpop.f32.mrf.mxu0
    %v4163 = vadd.f32 0.0, %v4162
    %v4164 = vpop.f32.mrf.mxu0
    %v4165 = vpop.f32.mrf.mxu0
    %4166 = vdwg.mxu0
    %4167 = vmatprep.subr.bf16.mxu0 %v2193
    %4168 = vmatpush1.bf16.msra.mxu0 %v2192
    %4169 = vmatprep.subr.bf16.mxu0 %v2185
    %4170 = vmatpush1.bf16.msra.mxu0 %v2184
    %4171 = vmatprep.subr.bf16.mxu0 %v2177
    %4172 = vmatpush1.bf16.msra.mxu0 %v2176
    %4173 = vmatprep.subr.bf16.mxu0 %v2169
    %4174 = vmatpush1.bf16.msra.mxu0 %v2168
    %4175 = vmatprep.subr.bf16.mxu0 %v2161
    %4176 = vmatpush1.bf16.msra.mxu0 %v2160
    %4177 = vmatprep.subr.bf16.mxu0 %v2153
    %4178 = vmatpush1.bf16.msra.mxu0 %v2152
    %4179 = vmatprep.subr.bf16.mxu0 %v2145
    %4180 = vmatpush1.bf16.msra.mxu0 %v2144
    %4181 = vmatprep.subr.bf16.mxu0 %v2137
    %4182 = vmatpush1.bf16.msra.mxu0 %v2136
    %4183 = vmatprep.subr.bf16.mxu0 %v2257
    %4184 = vmatpush2.bf16.msra.mxu0 %v2256
    %4185 = vmatprep.subr.bf16.mxu0 %v2249
    %4186 = vmatpush2.bf16.msra.mxu0 %v2248
    %4187 = vmatprep.subr.bf16.mxu0 %v2241
    %4188 = vmatpush2.bf16.msra.mxu0 %v2240
    %4189 = vmatprep.subr.bf16.mxu0 %v2233
    %4190 = vmatpush2.bf16.msra.mxu0 %v2232
    %4191 = vmatprep.subr.bf16.mxu0 %v2225
    %4192 = vmatpush2.bf16.msra.mxu0 %v2224
    %4193 = vmatprep.subr.bf16.mxu0 %v2217
    %4194 = vmatpush2.bf16.msra.mxu0 %v2216
    %4195 = vmatprep.subr.bf16.mxu0 %v2209
    %4196 = vmatpush2.bf16.msra.mxu0 %v2208
    %4197 = vmatprep.subr.bf16.mxu0 %v2201
    %4198 = vmatpush2.bf16.msra.mxu0 %v2200
    %4199 = vmatprep.mubr.bf16.mxu0 %v4043
    %4200 = vmatmul.mubr.bf16.gmra.mxu0 %v4042
    %v4201 = vpop.f32.mrf.mxu0
    %v4202 = vadd.f32 0.0, %v4201
    %v4203 = vpop.f32.mrf.mxu0
    %v4204 = vadd.f32 0.0, %v4203
    %v4205 = vpop.f32.mrf.mxu0
    %v4206 = vpop.f32.mrf.mxu0
    %4207 = vdwg.mxu0
    %v4208 = vrot.slane %v1355, 6
    %v4209 = vrot.slane %v1357, 6
    %v4210 = vrot.slane %v1441, 6
    %v4211 = vrot.slane %v1443, 6
    %v4216 = vadd.f32 %v4079, %v4208
    %v4217 = vadd.f32 %v4081, %v4209
    %v4218 = vadd.f32 %v4120, %v4210
    %v4219 = vadd.f32 %v4122, %v4211
    %v4220 = vadd.f32 %v4161, %v1523
    %v4221 = vadd.f32 %v4163, %v1525
    %v4222 = vadd.f32 %v4202, %v1609
    %v4223 = vadd.f32 %v4204, %v1611
    %v4224 = vxor.u32 %v4216, 2147483648
    %v4225 = vmul.f32 %v4224, 1.442695
    %v4226 = vpow.pop %v4225
    %v4227 = vadd.f32 %v4226, 1.0
    %v4228 = vrcp.pop %v4227
    %v4229 = vmul.f32 1.0, %v4228
    %v4230 = vxor.u32 %v4217, 2147483648
    %v4231 = vmul.f32 %v4230, 1.442695
    %v4232 = vpow.pop %v4231
    %v4233 = vadd.f32 %v4232, 1.0
    %v4234 = vrcp.pop %v4233
    %v4235 = vmul.f32 1.0, %v4234
    %v4236 = vtanh.pop %v4218
    %v4237 = vxor.u32 %v4219, 2147483648
    %v4238 = vmul.f32 %v4237, 1.442695
    %v4239 = vpow.pop %v4238
    %v4240 = vadd.f32 %v4239, 1.0
    %v4241 = vrcp.pop %v4240
    %v4242 = vmul.f32 1.0, %v4241
    %v4243 = vmul.f32 %v4235, %v4015
    %v4244 = vmul.f32 %v4229, %v4236
    %v4245 = vadd.f32 %v4243, %v4244
    %v4246 = vtanh.pop %v4245
    %v4247 = vmul.f32 %v4242, %v4246
    %v4248 = vxor.u32 %v4220, 2147483648
    %v4249 = vmul.f32 %v4248, 1.442695
    %v4250 = vpow.pop %v4249
    %v4251 = vadd.f32 %v4250, 1.0
    %v4252 = vrcp.pop %v4251
    %v4253 = vmul.f32 1.0, %v4252
    %v4254 = vxor.u32 %v4221, 2147483648
    %v4255 = vmul.f32 %v4254, 1.442695
    %v4256 = vpow.pop %v4255
    %v4257 = vadd.f32 %v4256, 1.0
    %v4258 = vrcp.pop %v4257
    %v4259 = vmul.f32 1.0, %v4258
    %v4260 = vtanh.pop %v4222
    %v4261 = vxor.u32 %v4223, 2147483648
    %v4262 = vmul.f32 %v4261, 1.442695
    %v4263 = vpow.pop %v4262
    %v4264 = vadd.f32 %v4263, 1.0
    %v4265 = vrcp.pop %v4264
    %v4266 = vmul.f32 1.0, %v4265
    %v4267 = vmul.f32 %v4259, %v4039
    %v4268 = vmul.f32 %v4253, %v4260
    %v4269 = vadd.f32 %v4267, %v4268
    %v4270 = vtanh.pop %v4269
    %v4271 = vmul.f32 %v4266, %v4270
    %4273 = vrot.lane.b32.xlu0 %v4271, 64
    %v4274 = vpop.permute.xlu0 %4273
    %vm4276 = vcmask 523264
    %v4277 = vsel %vm4276, %v4247, %v4274
    %v4278 = vld [vmem:[%s4] sm:$0xff]
    %v4279 = vld [vmem:[%s4 + $0x8] sm:$0xff]
    %v4280 = vld [vmem:[%s4 + $0x10] sm:$0xff]
    %v4281 = vld [vmem:[%s4 + $0x18] sm:$0xff]
    %v4282 = vld [vmem:[%s4 + $0x20] sm:$0xff]
    %v4283 = vld [vmem:[%s4 + $0x28] sm:$0xff]
    %v4284 = vld [vmem:[%s4 + $0x30] sm:$0xff]
    %v4285 = vld [vmem:[%s4 + $0x38] sm:$0xff]
    %v4286 = vld [vmem:[%s4 + $0x40] sm:$0xff]
    %v4287 = vld [vmem:[%s4 + $0x48] sm:$0xff]
    %v4288 = vld [vmem:[%s4 + $0x50] sm:$0xff]
    %v4289 = vld [vmem:[%s4 + $0x58] sm:$0xff]
    %v4290 = vld [vmem:[%s4 + $0x60] sm:$0xff]
    %v4291 = vld [vmem:[%s4 + $0x68] sm:$0xff]
    %v4292 = vld [vmem:[%s4 + $0x70] sm:$0xff]
    %v4293 = vld [vmem:[%s4 + $0x78] sm:$0xff]
    %v4294 = vld [vmem:[%s5] sm:$0x1]
    %v4296 = vlaneseq
    %v4297 = vshrl.u32 %v4296, 7
    %v4298 = vsub.s32 0, %v4297
    %v4299 = vrot.slane %v4294, %v4298
    %4301 = vmatprep.subr.mxu0 0.0
    %4302 = vmatpush1.msra.mxu0 %v4293
    %4303 = vmatprep.subr.mxu0 0.0
    %4304 = vmatpush1.msra.mxu0 %v4292
    %4305 = vmatprep.subr.mxu0 0.0
    %4306 = vmatpush1.msra.mxu0 %v4291
    %4307 = vmatprep.subr.mxu0 0.0
    %4308 = vmatpush1.msra.mxu0 %v4290
    %4309 = vmatprep.subr.mxu0 0.0
    %4310 = vmatpush1.msra.mxu0 %v4289
    %4311 = vmatprep.subr.mxu0 0.0
    %4312 = vmatpush1.msra.mxu0 %v4288
    %4313 = vmatprep.subr.mxu0 0.0
    %4314 = vmatpush1.msra.mxu0 %v4287
    %4315 = vmatprep.subr.mxu0 0.0
    %4316 = vmatpush1.msra.mxu0 %v4286
    %4317 = vmatprep.subr.mxu0 0.0
    %4318 = vmatpush1.msra.mxu0 %v4285
    %4319 = vmatprep.subr.mxu0 0.0
    %4320 = vmatpush1.msra.mxu0 %v4284
    %4321 = vmatprep.subr.mxu0 0.0
    %4322 = vmatpush1.msra.mxu0 %v4283
    %4323 = vmatprep.subr.mxu0 0.0
    %4324 = vmatpush1.msra.mxu0 %v4282
    %4325 = vmatprep.subr.mxu0 0.0
    %4326 = vmatpush1.msra.mxu0 %v4281
    %4327 = vmatprep.subr.mxu0 0.0
    %4328 = vmatpush1.msra.mxu0 %v4280
    %4329 = vmatprep.subr.mxu0 0.0
    %4330 = vmatpush1.msra.mxu0 %v4279
    %4331 = vmatprep.subr.mxu0 0.0
    %4332 = vmatpush1.msra.mxu0 %v4278
    %4333 = vmatprep.subr.mxu0 0.0
    %4334 = vmatpush2.msra.mxu0 0.0
    %4335 = vmatprep.subr.mxu0 0.0
    %4336 = vmatpush2.msra.mxu0 0.0
    %4337 = vmatprep.subr.mxu0 0.0
    %4338 = vmatpush2.msra.mxu0 0.0
    %4339 = vmatprep.subr.mxu0 0.0
    %4340 = vmatpush2.msra.mxu0 0.0
    %4341 = vmatprep.subr.mxu0 0.0
    %4342 = vmatpush2.msra.mxu0 0.0
    %4343 = vmatprep.subr.mxu0 0.0
    %4344 = vmatpush2.msra.mxu0 0.0
    %4345 = vmatprep.subr.mxu0 0.0
    %4346 = vmatpush2.msra.mxu0 0.0
    %4347 = vmatprep.subr.mxu0 0.0
    %4348 = vmatpush2.msra.mxu0 0.0
    %4349 = vmatprep.subr.mxu0 0.0
    %4350 = vmatpush2.msra.mxu0 0.0
    %4351 = vmatprep.subr.mxu0 0.0
    %4352 = vmatpush2.msra.mxu0 0.0
    %4353 = vmatprep.subr.mxu0 0.0
    %4354 = vmatpush2.msra.mxu0 0.0
    %4355 = vmatprep.subr.mxu0 0.0
    %4356 = vmatpush2.msra.mxu0 0.0
    %4357 = vmatprep.subr.mxu0 0.0
    %4358 = vmatpush2.msra.mxu0 0.0
    %4359 = vmatprep.subr.mxu0 0.0
    %4360 = vmatpush2.msra.mxu0 0.0
    %4361 = vmatprep.subr.mxu0 0.0
    %4362 = vmatpush2.msra.mxu0 0.0
    %4363 = vmatprep.subr.mxu0 0.0
    %4364 = vmatpush2.msra.mxu0 0.0
    %4365 = vmatprep.mubr.f32.mxu0 0.0
    %4366 = vmatmul.mubr.f32.gmra.mxu0 %v4277
    %v4367 = vpop.f32.mrf.mxu0
    %v4368 = vadd.f32 %v4299, %v4367
    %v4369 = vpop.f32.mrf.mxu0
    %4370 = vdwg.mxu0
    %v4371 = vld [vmem:[%s6] sm:$0xff]
    %v4372 = vld [vmem:[%s6 + $0x8] sm:$0xff]
    %v4373 = vld [vmem:[%s6 + $0x10] sm:$0xff]
    %v4374 = vld [vmem:[%s6 + $0x18] sm:$0xff]
    %v4375 = vld [vmem:[%s6 + $0x20] sm:$0xff]
    %v4376 = vld [vmem:[%s6 + $0x28] sm:$0xff]
    %v4377 = vld [vmem:[%s6 + $0x30] sm:$0xff]
    %v4378 = vld [vmem:[%s6 + $0x38] sm:$0xff]
    %v4379 = vld [vmem:[%s7] sm:$0x1]
    %v4381 = vlaneseq
    %v4382 = vshrl.u32 %v4381, 7
    %v4383 = vsub.s32 0, %v4382
    %v4384 = vrot.slane %v4379, %v4383
    %v4387 = vsel %vm4276, %v4368, 0
    %4389 = vmatprep.subr.mxu0 0.0
    %4390 = vmatpush1.msra.mxu0 0.0
    %4391 = vmatprep.subr.mxu0 0.0
    %4392 = vmatpush1.msra.mxu0 0.0
    %4393 = vmatprep.subr.mxu0 0.0
    %4394 = vmatpush1.msra.mxu0 0.0
    %4395 = vmatprep.subr.mxu0 0.0
    %4396 = vmatpush1.msra.mxu0 0.0
    %4397 = vmatprep.subr.mxu0 0.0
    %4398 = vmatpush1.msra.mxu0 0.0
    %4399 = vmatprep.subr.mxu0 0.0
    %4400 = vmatpush1.msra.mxu0 0.0
    %4401 = vmatprep.subr.mxu0 0.0
    %4402 = vmatpush1.msra.mxu0 0.0
    %4403 = vmatprep.subr.mxu0 0.0
    %4404 = vmatpush1.msra.mxu0 0.0
    %4405 = vmatprep.subr.mxu0 0.0
    %4406 = vmatpush1.msra.mxu0 %v4378
    %4407 = vmatprep.subr.mxu0 0.0
    %4408 = vmatpush1.msra.mxu0 %v4377
    %4409 = vmatprep.subr.mxu0 0.0
    %4410 = vmatpush1.msra.mxu0 %v4376
    %4411 = vmatprep.subr.mxu0 0.0
    %4412 = vmatpush1.msra.mxu0 %v4375
    %4413 = vmatprep.subr.mxu0 0.0
    %4414 = vmatpush1.msra.mxu0 %v4374
    %4415 = vmatprep.subr.mxu0 0.0
    %4416 = vmatpush1.msra.mxu0 %v4373
    %4417 = vmatprep.subr.mxu0 0.0
    %4418 = vmatpush1.msra.mxu0 %v4372
    %4419 = vmatprep.subr.mxu0 0.0
    %4420 = vmatpush1.msra.mxu0 %v4371
    %4421 = vmatprep.subr.mxu0 0.0
    %4422 = vmatpush2.msra.mxu0 0.0
    %4423 = vmatprep.subr.mxu0 0.0
    %4424 = vmatpush2.msra.mxu0 0.0
    %4425 = vmatprep.subr.mxu0 0.0
    %4426 = vmatpush2.msra.mxu0 0.0
    %4427 = vmatprep.subr.mxu0 0.0
    %4428 = vmatpush2.msra.mxu0 0.0
    %4429 = vmatprep.subr.mxu0 0.0
    %4430 = vmatpush2.msra.mxu0 0.0
    %4431 = vmatprep.subr.mxu0 0.0
    %4432 = vmatpush2.msra.mxu0 0.0
    %4433 = vmatprep.subr.mxu0 0.0
    %4434 = vmatpush2.msra.mxu0 0.0
    %4435 = vmatprep.subr.mxu0 0.0
    %4436 = vmatpush2.msra.mxu0 0.0
    %4437 = vmatprep.subr.mxu0 0.0
    %4438 = vmatpush2.msra.mxu0 0.0
    %4439 = vmatprep.subr.mxu0 0.0
    %4440 = vmatpush2.msra.mxu0 0.0
    %4441 = vmatprep.subr.mxu0 0.0
    %4442 = vmatpush2.msra.mxu0 0.0
    %4443 = vmatprep.subr.mxu0 0.0
    %4444 = vmatpush2.msra.mxu0 0.0
    %4445 = vmatprep.subr.mxu0 0.0
    %4446 = vmatpush2.msra.mxu0 0.0
    %4447 = vmatprep.subr.mxu0 0.0
    %4448 = vmatpush2.msra.mxu0 0.0
    %4449 = vmatprep.subr.mxu0 0.0
    %4450 = vmatpush2.msra.mxu0 0.0
    %4451 = vmatprep.subr.mxu0 0.0
    %4452 = vmatpush2.msra.mxu0 0.0
    %4453 = vmatprep.mubr.f32.mxu0 0.0
    %4454 = vmatmul.mubr.f32.gmra.mxu0 %v4387
    %v4455 = vpop.f32.mrf.mxu0
    %v4456 = vadd.f32 %v4384, %v4455
    %v4457 = vpop.f32.mrf.mxu0
    %4458 = vdwg.mxu0
    %4460 = vrot.lane.b32.xlu0 %v4456, 64
    %v4461 = vpop.permute.xlu0 %4460
    %v4463 = vsel %vm4276, %v4368, %v4461
    %vm4464 = vcmask 539648
    %v4465 = vsel %vm4464, %v4463, 0.0
    %4466 = vst [vmem:[#allocation7] sm:$0x3] %v4465
    // Predicated region
    $region42: #{tpu_custom_call.1} parent=1 // pred_check
      _
    $region43: #{tpu_custom_call.1} parent=1 // pred_check_branch
      %4468 = sbr.rel (0) target = $region45
    $region44: #{tpu_custom_call.1} parent=1 // pred_region
      %s4470 = ssub.s32 32, 32
      %4471 = vsyncadd [#allocation4], %s4470
      %s4473 = sshll.u32 [#allocation7], 4
      %s4474 = int_to_ptr.vmem [resolvable:$true] %s4473
      %4476 = dma.vmem_to_hbm [thread:$0]  %s4474, 32, %s8, [#allocation4]
    $region45: #{tpu_custom_call.1} parent=1 // pred_fallthru
      _
    // Predicated region
    $region46: #{tpu_custom_call.1} parent=1 // pred_check
      _
    $region47: #{tpu_custom_call.1} parent=1 // pred_check_branch
      %4478 = sbr.rel (0) target = $region49
    $region48: #{tpu_custom_call.1} parent=1 // pred_region
      %4479 = dma.done [#allocation4], 32
    $region49: #{tpu_custom_call.1} parent=1 // pred_fallthru
      _
    %4480 = vsyncpa [#allocation3], 1
    %4481 = vsyncpa [#allocation6], 1
    %4482 = vsyncpa [#allocation4], 1

</llo_original>
